<compile_context>
chip_gen: v7x
topology: tpu7x:2x2x1
jax: 0.10.0
libtpu: 0.0.40
codegen_flags: <defaults>
</compile_context>

<pallas_src>
import jax
import jax.numpy as jnp
from jax.experimental import pallas as pl
from jax.experimental.pallas import tpu as pltpu


# ----------------------------------------------------------------------------
# Pallas kernel: TB windows per grid step, fused projections, per-head attn.
# ----------------------------------------------------------------------------
def window_attention_kernel(x_ref, wqkv_ref, bqkv_ref, bias_ref, wp_ref,
                            bp_ref, o_ref, ctx_ref):
    TB, N, C = x_ref.shape
    H = bias_ref.shape[0]
    hd = C // H
    M = TB * N
    cdt = x_ref.dtype                       # matmul input dtype (f32 or bf16)

    # (TB, N, C) -> (M, C): layout-free because N is padded to a multiple of 8.
    x2 = x_ref[...].reshape(M, C)

    # Fused full-width QKV projection (one big MXU matmul, full column
    # utilization). The 1/sqrt(hd) scale is folded into the Q weight/bias.
    qkv = (jnp.dot(x2, wqkv_ref[...], preferred_element_type=jnp.float32)
           + bqkv_ref[...]).astype(cdt)                          # (M, 3C)

    # Per-head attention. Static unroll (H is small for window attention);
    # each head's operands are one-time lane slices of the qkv slab.
    for h in range(H):
        q = qkv[:, 0 * C + h * hd: 0 * C + (h + 1) * hd].reshape(TB, N, hd)
        k = qkv[:, 1 * C + h * hd: 1 * C + (h + 1) * hd].reshape(TB, N, hd)
        v = qkv[:, 2 * C + h * hd: 2 * C + (h + 1) * hd].reshape(TB, N, hd)

        # window-batched QK^T: (TB, N, N), f32 accumulation
        s = jnp.einsum('bnd,bmd->bnm', q, k,
                       preferred_element_type=jnp.float32)
        s = s + bias_ref[h][None, :, :]     # rel-pos bias (+ -1e9 key mask)

        # f32 softmax; approx reciprocal on the EUP + one Newton refinement
        # step -> near-exact normalization at negligible VPU cost.
        s = s - jnp.max(s, axis=-1, keepdims=True)
        p = jnp.exp(s)
        d = jnp.sum(p, axis=-1, keepdims=True)
        r = pl.reciprocal(d, approx=True)
        r = r * (2.0 - d * r)
        p = p * r
        # attn_drop is identity (p = 0.0)

        # window-batched attn @ V: (TB, N, hd)
        o_h = jnp.einsum('bnm,bmd->bnd', p.astype(cdt), v,
                         preferred_element_type=jnp.float32)

        # Scatter head h into its lane range of the (M, C) context scratch so
        # the output projection below contracts over the full C dimension.
        ctx_ref[:, h * hd:(h + 1) * hd] = o_h.reshape(M, hd).astype(cdt)

    # Single full-width output projection: (M, C) @ (C, C), f32 accumulation.
    y = (jnp.dot(ctx_ref[...], wp_ref[...],
                 preferred_element_type=jnp.float32) + bp_ref[...])
    # proj_drop is identity
    o_ref[...] = y.reshape(TB, N, C).astype(o_ref.dtype)


# ----------------------------------------------------------------------------
# VMEM working-set model (per grid step) used to size the window-batch tile.
# ----------------------------------------------------------------------------
def _vmem_model(N_pad, C, H, cdt, odt):
    isz_c = jnp.dtype(cdt).itemsize
    isz_o = jnp.dtype(odt).itemsize
    # invariant operands (double-buffered by the default pipeline)
    fixed = 2 * ((3 * C * C + C * C) * isz_c            # Wqkv, Wp
                 + (3 * C + C) * 4                      # bqkv, bp (f32)
                 + H * N_pad * N_pad * 4)               # rel-pos bias (f32)
    # per-window footprint (streamed tiles + live in-kernel temporaries)
    per_b = (2 * N_pad * C * isz_c                      # x tile (dbl-buffered)
             + 2 * N_pad * C * isz_o                    # out tile (dbl-buff.)
             + N_pad * C * isz_c                        # ctx scratch
             + 3 * N_pad * C * (4 + isz_c)              # qkv slab f32 + cast
             + 3 * N_pad * N_pad * 4                    # scores/probs temps
             + 2 * N_pad * C * 4)                       # per-head out + misc
    return fixed, per_b


# ----------------------------------------------------------------------------
# Wrapper around pallas_call.
# ----------------------------------------------------------------------------
def window_attention(x, qkv_w, qkv_b, rel_bias, proj_w, proj_b, num_heads,
                     *, block_b=None, compute_dtype=None, out_dtype=None):
    """x: (B_, N, C); qkv_w: (C, 3C) (torch W^T); qkv_b: (3C,);
    rel_bias: (H, N, N); proj_w: (C, C) (torch W^T); proj_b: (C,).
    compute_dtype=jnp.bfloat16 is recommended on v5e/v6e/v7x (accumulation is
    always f32); set out_dtype=jnp.bfloat16 when the surrounding model uses
    bf16 activations to halve output VMEM/HBM traffic."""
    B_, N, C = x.shape
    H = num_heads
    hd = C // H
    scale = hd ** (-0.5)
    cdt = jnp.dtype(compute_dtype) if compute_dtype is not None else x.dtype
    odt = jnp.dtype(out_dtype) if out_dtype is not None else x.dtype

    # Pad the token axis to a multiple of 8 so in-kernel reshapes are
    # layout-free; padded key columns are masked via the bias, padded query
    # rows are sliced off the output.
    N_pad = ((N + 7) // 8) * 8

    x_c = x.astype(cdt)
    if N_pad != N:
        x_c = jnp.pad(x_c, ((0, 0), (0, N_pad - N), (0, 0)))

    bias = jnp.zeros((H, N_pad, N_pad), jnp.float32)
    if N_pad != N:
        bias = bias.at[:, :, N:].set(jnp.float32(-1e9))   # mask padded keys
    bias = bias.at[:, :N, :N].set(rel_bias.astype(jnp.float32))

    # Fuse QKV weights (fold the 1/sqrt(hd) scale into the Q part); heads are
    # carved by lane slicing inside the kernel, so the natural torch column
    # order (h*hd + d) is kept as-is.
    wqkv = jnp.concatenate([qkv_w[:, :C] * scale, qkv_w[:, C:]],
                           axis=1).astype(cdt)                    # (C, 3C)
    bqkv = jnp.concatenate([qkv_b[:C] * scale, qkv_b[C:]], axis=0)
    bqkv = bqkv.reshape(1, 3 * C).astype(jnp.float32)
    wp = proj_w.astype(cdt)                                       # (C, C)
    bp = proj_b.reshape(1, C).astype(jnp.float32)

    # Generation-aware tile sizing: query VMEM capacity and size tb so the
    # double-buffered tiles + resident weights + temporaries fit comfortably.
    try:
        vmem_cap = int(pltpu.get_tpu_info().vmem_capacity_bytes)
    except Exception:
        vmem_cap = 64 * 1024 * 1024        # conservative (v7x per-core VMEM)
    fixed, per_b = _vmem_model(N_pad, C, H, cdt, odt)
    budget = int(0.6 * vmem_cap)
    tb_budget = max(1, (budget - fixed) // per_b)
    if block_b is not None:
        tb = block_b
    else:
        # cap at 64 (per-step overhead already amortized) and keep >= ~4 grid
        # steps when possible so both v7x TensorCores get pipelined work.
        tb = min(tb_budget, 64, max(1, pl.cdiv(B_, 4)))
    tb = max(1, min(tb, B_))

    B_pad = pl.cdiv(B_, tb) * tb
    if B_pad != B_:
        x_c = jnp.pad(x_c, ((0, B_pad - B_), (0, 0), (0, 0)))
    grid = (B_pad // tb,)

    est_bytes = fixed + tb * per_b
    vmem_limit = int(min(0.9 * vmem_cap,
                         max(4 * est_bytes, 64 * 1024 * 1024)))

    # Advisory cost estimate so XLA schedules the surrounding glue sensibly.
    item_c = jnp.dtype(cdt).itemsize
    flops = B_pad * (2 * N_pad * C * 3 * C + 4 * H * N_pad * N_pad * hd
                     + 2 * N_pad * C * C)
    transcendentals = B_pad * H * N_pad * (N_pad + 1)
    bytes_accessed = (B_pad * N_pad * C * (item_c + jnp.dtype(odt).itemsize)
                      + 4 * C * C * item_c + H * N_pad * N_pad * 4
                      + 4 * C * 4)

    out = pl.pallas_call(
        window_attention_kernel,
        out_shape=jax.ShapeDtypeStruct((B_pad, N_pad, C), odt),
        grid=grid,
        in_specs=[
            pl.BlockSpec((tb, N_pad, C), lambda b: (b, 0, 0)),     # x (streamed)
            # constant index maps -> kept VMEM-resident across grid steps
            pl.BlockSpec((C, 3 * C), lambda b: (0, 0)),            # Wqkv
            pl.BlockSpec((1, 3 * C), lambda b: (0, 0)),            # bqkv
            pl.BlockSpec((H, N_pad, N_pad), lambda b: (0, 0, 0)),  # rel-pos bias
            pl.BlockSpec((C, C), lambda b: (0, 0)),                # Wp
            pl.BlockSpec((1, C), lambda b: (0, 0)),                # bp
        ],
        out_specs=pl.BlockSpec((tb, N_pad, C), lambda b: (b, 0, 0)),
        scratch_shapes=[pltpu.VMEM((tb * N_pad, C), cdt)],         # head ctx
        compiler_params=pltpu.CompilerParams(
            dimension_semantics=("parallel",),       # shard windows over TCs
            vmem_limit_bytes=vmem_limit),
        cost_estimate=pl.CostEstimate(flops=flops,
                                      transcendentals=transcendentals,
                                      bytes_accessed=bytes_accessed),
    )(x_c, wqkv, bqkv, bias, wp, bp)

    return out[:B_, :N, :]


# ----------------------------------------------------------------------------
# Glue: relative position index + bias table gather + zero padding (matches
# the PyTorch forward, which pads 2 zero rows/cols for the cls/dist tokens).
# ----------------------------------------------------------------------------
def build_relative_position_bias(table, window_size, num_heads):
    Wh, Ww = window_size
    Nw = Wh * Ww
    coords_h = jnp.arange(Wh)
    coords_w = jnp.arange(Ww)
    coords = jnp.stack(jnp.meshgrid(coords_h, coords_w, indexing='ij'))
    coords_flat = coords.reshape(2, -1)                              # (2, Nw)
    rel = coords_flat[:, :, None] - coords_flat[:, None, :]          # (2,Nw,Nw)
    rel = rel.transpose(1, 2, 0)
    r0 = rel[..., 0] + (Wh - 1)
    r1 = rel[..., 1] + (Ww - 1)
    rel_index = r0 * (2 * Ww - 1) + r1                               # (Nw,Nw)

    bias = table[rel_index.reshape(-1)].reshape(Nw, Nw, num_heads)
    bias = bias.transpose(2, 0, 1)                                   # (H,Nw,Nw)
    bias = jnp.concatenate(
        [jnp.zeros((num_heads, 2, Nw), bias.dtype), bias], axis=1)
    bias = jnp.concatenate(
        [jnp.zeros((num_heads, Nw + 2, 2), bias.dtype), bias], axis=2)
    return bias                                                      # (H,N,N)


# ----------------------------------------------------------------------------
# Pure-JAX reference (mirrors the PyTorch forward) for correctness check.
# ----------------------------------------------------------------------------
def reference_forward(x, qkv_w, qkv_b, rel_bias, proj_w, proj_b, num_heads):
    B_, N, C = x.shape
    hd = C // num_heads
    scale = hd ** (-0.5)
    qkv = x @ qkv_w + qkv_b                                  # (B_, N, 3C)
    qkv = qkv.reshape(B_, N, 3, num_heads, hd).transpose(2, 0, 3, 1, 4)
    q, k, v = qkv[0], qkv[1], qkv[2]                         # (B_, H, N, hd)
    q = q * scale
    attn = jnp.einsum('bhnd,bhmd->bhnm', q, k) + rel_bias[None]
    attn = jax.nn.softmax(attn, axis=-1)
    out = jnp.einsum('bhnm,bhmd->bhnd', attn, v)
    out = out.transpose(0, 2, 1, 3).reshape(B_, N, C)
    return out @ proj_w + proj_b


# ----------------------------------------------------------------------------
if __name__ == "__main__":
    window_size = (4, 4)     # Wh, Ww
    dim = 32                 # C
    num_heads = 4
    B_ = 16                  # num_windows * batch
    N = window_size[0] * window_size[1] + 2   # 18 (2 extra cls/dist tokens)

    key = jax.random.PRNGKey(0)
    k_x, k_tab, k_qw, k_qb, k_pw, k_pb = jax.random.split(key, 6)

    table_size = (2 * window_size[0] - 1) * (2 * window_size[1] - 1)
    rel_table = 0.02 * jax.random.normal(k_tab, (table_size, num_heads),
                                         dtype=jnp.float32)
    # nn.Linear weights stored transposed so both paths compute x @ W^T + b.
    qkv_w = 0.05 * jax.random.normal(k_qw, (dim, 3 * dim), jnp.float32)
    qkv_b = 0.05 * jax.random.normal(k_qb, (3 * dim,), jnp.float32)
    proj_w = 0.05 * jax.random.normal(k_pw, (dim, dim), jnp.float32)
    proj_b = 0.05 * jax.random.normal(k_pb, (dim,), jnp.float32)
    x = jax.random.normal(k_x, (B_, N, dim), dtype=jnp.float32)

    rel_bias = build_relative_position_bias(rel_table, window_size, num_heads)

    ref = reference_forward(x, qkv_w, qkv_b, rel_bias, proj_w, proj_b,
                            num_heads)
    ref = jax.block_until_ready(ref)

    # f32 path; automatic tile sizing (tb=4 -> grid of 4 -> both v7x TCs fed).
    out_f32 = window_attention(x, qkv_w, qkv_b, rel_bias, proj_w, proj_b,
                               num_heads)
    out_f32 = jax.block_until_ready(out_f32)
    assert out_f32.shape == (B_, N, dim)
    err = float(jnp.max(jnp.abs(out_f32 - ref)))
    assert err < 5e-3, f"f32 mismatch vs reference: max abs err {err}"

    # bf16 matmul-input path (recommended configuration on all generations).
    out_bf16 = window_attention(x, qkv_w, qkv_b, rel_bias, proj_w, proj_b,
                                num_heads, compute_dtype=jnp.bfloat16)
    out_bf16 = jax.block_until_ready(out_bf16)
    assert out_bf16.shape == (B_, N, dim)
    err_bf = float(jnp.max(jnp.abs(out_bf16 - ref)))
    assert err_bf < 5e-2, f"bf16 mismatch vs reference: max abs err {err_bf}"

    print("KERNEL_OK")
</pallas_src>

<mosaic_0001>
module attributes {stable_mosaic.version = 11 : i64} {
  func.func @window_attention_kernel(%arg0: i32, %arg1: memref<4x24x32xf32, #tpu.memory_space<vmem>>, %arg2: memref<32x96xf32, #tpu.memory_space<vmem>>, %arg3: memref<1x96xf32, #tpu.memory_space<vmem>>, %arg4: memref<4x24x24xf32, #tpu.memory_space<vmem>>, %arg5: memref<32x32xf32, #tpu.memory_space<vmem>>, %arg6: memref<1x32xf32, #tpu.memory_space<vmem>>, %arg7: memref<4x24x32xf32, #tpu.memory_space<vmem>>, %arg8: memref<96x32xf32, #tpu.memory_space<vmem>>) attributes {dimension_semantics = [#tpu.dimension_semantics<parallel>], iteration_bounds = array<i64: 4>, scalar_prefetch = 0 : i64, scratch_operands = 1 : i64, tpu.core_type = #tpu.core_type<tc>, window_params = [{transform_indices = @transform_0, window_bounds = array<i64: 4, 24, 32>}, {pipeline_mode = #tpu.pipeline_mode<synchronous>, transform_indices = @transform_1, window_bounds = array<i64: 32, 96>}, {pipeline_mode = #tpu.pipeline_mode<synchronous>, transform_indices = @transform_2, window_bounds = array<i64: 1, 96>}, {pipeline_mode = #tpu.pipeline_mode<synchronous>, transform_indices = @transform_3, window_bounds = array<i64: 4, 24, 24>}, {pipeline_mode = #tpu.pipeline_mode<synchronous>, transform_indices = @transform_4, window_bounds = array<i64: 32, 32>}, {pipeline_mode = #tpu.pipeline_mode<synchronous>, transform_indices = @transform_5, window_bounds = array<i64: 1, 32>}, {transform_indices = @transform_6, window_bounds = array<i64: 4, 24, 32>}]} {
    %c0 = arith.constant 0 : index
    %c0_0 = arith.constant 0 : index
    %c0_1 = arith.constant 0 : index
    %0 = vector.load %arg1[%c0, %c0_0, %c0_1] : memref<4x24x32xf32, #tpu.memory_space<vmem>>, vector<4x24x32xf32>
    %1 = vector.shape_cast %0 : vector<4x24x32xf32> to vector<96x32xf32>
    %c0_2 = arith.constant 0 : index
    %c0_3 = arith.constant 0 : index
    %2 = vector.load %arg2[%c0_2, %c0_3] : memref<32x96xf32, #tpu.memory_space<vmem>>, vector<32x96xf32>
    %cst = arith.constant dense<0.000000e+00> : vector<96x96xf32>
    %3 = tpu.matmul %1, %2, %cst {dimension_numbers = #tpu.dot_dimension_numbers<[1], [0], [0], [1], [0, 0, 1, 1], [], []>} : vector<96x32xf32>, vector<32x96xf32>, vector<96x96xf32> -> vector<96x96xf32>
    %c0_4 = arith.constant 0 : index
    %c0_5 = arith.constant 0 : index
    %4 = vector.load %arg3[%c0_4, %c0_5] : memref<1x96xf32, #tpu.memory_space<vmem>>, vector<1x96xf32>
    %5 = vector.broadcast %4 : vector<1x96xf32> to vector<96x96xf32>
    %6 = arith.addf %3, %5 : vector<96x96xf32>
    %7 = vector.extract_strided_slice %6 {offsets = [0, 0], sizes = [96, 8], strides = [1, 1]} : vector<96x96xf32> to vector<96x8xf32>
    %8 = vector.shape_cast %7 : vector<96x8xf32> to vector<4x24x8xf32>
    %9 = vector.extract_strided_slice %6 {offsets = [0, 32], sizes = [96, 8], strides = [1, 1]} : vector<96x96xf32> to vector<96x8xf32>
    %10 = vector.shape_cast %9 : vector<96x8xf32> to vector<4x24x8xf32>
    %11 = vector.extract_strided_slice %6 {offsets = [0, 64], sizes = [96, 8], strides = [1, 1]} : vector<96x96xf32> to vector<96x8xf32>
    %12 = vector.shape_cast %11 : vector<96x8xf32> to vector<4x24x8xf32>
    "tpu.trace_start"() <{level = 10 : i32, message = "bnd,bmd->bnm"}> : () -> ()
    %cst_6 = arith.constant dense<0.000000e+00> : vector<4x24x24xf32>
    %13 = tpu.matmul %8, %10, %cst_6 {dimension_numbers = #tpu.dot_dimension_numbers<[2], [2], [1], [1], [0, 0, 0, 1, 1, 1], [0], [0]>} : vector<4x24x8xf32>, vector<4x24x8xf32>, vector<4x24x24xf32> -> vector<4x24x24xf32>
    "tpu.trace_stop"() : () -> ()
    %c0_7 = arith.constant 0 : index
    %c0_8 = arith.constant 0 : index
    %c0_9 = arith.constant 0 : index
    %14 = vector.load %arg4[%c0_7, %c0_8, %c0_9] : memref<4x24x24xf32, #tpu.memory_space<vmem>>, vector<1x24x24xf32>
    %15 = vector.shape_cast %14 : vector<1x24x24xf32> to vector<24x24xf32>
    %16 = vector.shape_cast %15 : vector<24x24xf32> to vector<1x24x24xf32>
    %17 = vector.broadcast %16 : vector<1x24x24xf32> to vector<4x24x24xf32>
    %18 = arith.addf %13, %17 : vector<4x24x24xf32>
    %cst_10 = arith.constant dense<0xFF800000> : vector<4x24xf32>
    %19 = vector.multi_reduction <maximumf>, %18, %cst_10 [2] : vector<4x24x24xf32> to vector<4x24xf32>
    %20 = vector.shape_cast %19 : vector<4x24xf32> to vector<4x24x1xf32>
    %21 = vector.broadcast %20 : vector<4x24x1xf32> to vector<4x24x24xf32>
    %22 = arith.subf %18, %21 : vector<4x24x24xf32>
    %23 = math.exp %22 : vector<4x24x24xf32>
    %cst_11 = arith.constant dense<0.000000e+00> : vector<4x24xf32>
    %24 = vector.multi_reduction <add>, %23, %cst_11 [2] : vector<4x24x24xf32> to vector<4x24xf32>
    %25 = vector.shape_cast %24 : vector<4x24xf32> to vector<4x24x1xf32>
    %26 = tpu.reciprocal %25 {approx = true} : vector<4x24x1xf32> -> vector<4x24x1xf32>
    %27 = arith.mulf %25, %26 : vector<4x24x1xf32>
    %cst_12 = arith.constant 2.000000e+00 : f32
    %28 = vector.broadcast %cst_12 : f32 to vector<4x24x1xf32>
    %29 = arith.subf %28, %27 : vector<4x24x1xf32>
    %30 = arith.mulf %26, %29 : vector<4x24x1xf32>
    %31 = vector.broadcast %30 : vector<4x24x1xf32> to vector<4x24x24xf32>
    %32 = arith.mulf %23, %31 : vector<4x24x24xf32>
    "tpu.trace_start"() <{level = 10 : i32, message = "bnm,bmd->bnd"}> : () -> ()
    %cst_13 = arith.constant dense<0.000000e+00> : vector<4x24x8xf32>
    %33 = tpu.matmul %32, %12, %cst_13 {dimension_numbers = #tpu.dot_dimension_numbers<[2], [1], [1], [2], [0, 0, 0, 1, 1, 2], [0], [0]>} : vector<4x24x24xf32>, vector<4x24x8xf32>, vector<4x24x8xf32> -> vector<4x24x8xf32>
    "tpu.trace_stop"() : () -> ()
    %34 = vector.shape_cast %33 : vector<4x24x8xf32> to vector<96x8xf32>
    %c0_14 = arith.constant 0 : index
    %c0_15 = arith.constant 0 : index
    %35 = vector.load %arg8[%c0_14, %c0_15] : memref<96x32xf32, #tpu.memory_space<vmem>>, vector<96x8xf32>
    tpu.vector_store %arg8[%c0_14, %c0_15], %34 {strides = array<i32>} : memref<96x32xf32, #tpu.memory_space<vmem>>, vector<96x8xf32>,
    %36 = vector.extract_strided_slice %6 {offsets = [0, 8], sizes = [96, 8], strides = [1, 1]} : vector<96x96xf32> to vector<96x8xf32>
    %37 = vector.shape_cast %36 : vector<96x8xf32> to vector<4x24x8xf32>
    %38 = vector.extract_strided_slice %6 {offsets = [0, 40], sizes = [96, 8], strides = [1, 1]} : vector<96x96xf32> to vector<96x8xf32>
    %39 = vector.shape_cast %38 : vector<96x8xf32> to vector<4x24x8xf32>
    %40 = vector.extract_strided_slice %6 {offsets = [0, 72], sizes = [96, 8], strides = [1, 1]} : vector<96x96xf32> to vector<96x8xf32>
    %41 = vector.shape_cast %40 : vector<96x8xf32> to vector<4x24x8xf32>
    "tpu.trace_start"() <{level = 10 : i32, message = "bnd,bmd->bnm"}> : () -> ()
    %cst_16 = arith.constant dense<0.000000e+00> : vector<4x24x24xf32>
    %42 = tpu.matmul %37, %39, %cst_16 {dimension_numbers = #tpu.dot_dimension_numbers<[2], [2], [1], [1], [0, 0, 0, 1, 1, 1], [0], [0]>} : vector<4x24x8xf32>, vector<4x24x8xf32>, vector<4x24x24xf32> -> vector<4x24x24xf32>
    "tpu.trace_stop"() : () -> ()
    %c1 = arith.constant 1 : index
    %c0_17 = arith.constant 0 : index
    %c0_18 = arith.constant 0 : index
    %43 = vector.load %arg4[%c1, %c0_17, %c0_18] : memref<4x24x24xf32, #tpu.memory_space<vmem>>, vector<1x24x24xf32>
    %44 = vector.shape_cast %43 : vector<1x24x24xf32> to vector<24x24xf32>
    %45 = vector.shape_cast %44 : vector<24x24xf32> to vector<1x24x24xf32>
    %46 = vector.broadcast %45 : vector<1x24x24xf32> to vector<4x24x24xf32>
    %47 = arith.addf %42, %46 : vector<4x24x24xf32>
    %cst_19 = arith.constant dense<0xFF800000> : vector<4x24xf32>
    %48 = vector.multi_reduction <maximumf>, %47, %cst_19 [2] : vector<4x24x24xf32> to vector<4x24xf32>
    %49 = vector.shape_cast %48 : vector<4x24xf32> to vector<4x24x1xf32>
    %50 = vector.broadcast %49 : vector<4x24x1xf32> to vector<4x24x24xf32>
    %51 = arith.subf %47, %50 : vector<4x24x24xf32>
    %52 = math.exp %51 : vector<4x24x24xf32>
    %cst_20 = arith.constant dense<0.000000e+00> : vector<4x24xf32>
    %53 = vector.multi_reduction <add>, %52, %cst_20 [2] : vector<4x24x24xf32> to vector<4x24xf32>
    %54 = vector.shape_cast %53 : vector<4x24xf32> to vector<4x24x1xf32>
    %55 = tpu.reciprocal %54 {approx = true} : vector<4x24x1xf32> -> vector<4x24x1xf32>
    %56 = arith.mulf %54, %55 : vector<4x24x1xf32>
    %cst_21 = arith.constant 2.000000e+00 : f32
    %57 = vector.broadcast %cst_21 : f32 to vector<4x24x1xf32>
    %58 = arith.subf %57, %56 : vector<4x24x1xf32>
    %59 = arith.mulf %55, %58 : vector<4x24x1xf32>
    %60 = vector.broadcast %59 : vector<4x24x1xf32> to vector<4x24x24xf32>
    %61 = arith.mulf %52, %60 : vector<4x24x24xf32>
    "tpu.trace_start"() <{level = 10 : i32, message = "bnm,bmd->bnd"}> : () -> ()
    %cst_22 = arith.constant dense<0.000000e+00> : vector<4x24x8xf32>
    %62 = tpu.matmul %61, %41, %cst_22 {dimension_numbers = #tpu.dot_dimension_numbers<[2], [1], [1], [2], [0, 0, 0, 1, 1, 2], [0], [0]>} : vector<4x24x24xf32>, vector<4x24x8xf32>, vector<4x24x8xf32> -> vector<4x24x8xf32>
    "tpu.trace_stop"() : () -> ()
    %63 = vector.shape_cast %62 : vector<4x24x8xf32> to vector<96x8xf32>
    %c0_23 = arith.constant 0 : index
    %c8 = arith.constant 8 : index
    %64 = vector.load %arg8[%c0_23, %c8] : memref<96x32xf32, #tpu.memory_space<vmem>>, vector<96x8xf32>
    tpu.vector_store %arg8[%c0_23, %c8], %63 {strides = array<i32>} : memref<96x32xf32, #tpu.memory_space<vmem>>, vector<96x8xf32>,
    %65 = vector.extract_strided_slice %6 {offsets = [0, 16], sizes = [96, 8], strides = [1, 1]} : vector<96x96xf32> to vector<96x8xf32>
    %66 = vector.shape_cast %65 : vector<96x8xf32> to vector<4x24x8xf32>
    %67 = vector.extract_strided_slice %6 {offsets = [0, 48], sizes = [96, 8], strides = [1, 1]} : vector<96x96xf32> to vector<96x8xf32>
    %68 = vector.shape_cast %67 : vector<96x8xf32> to vector<4x24x8xf32>
    %69 = vector.extract_strided_slice %6 {offsets = [0, 80], sizes = [96, 8], strides = [1, 1]} : vector<96x96xf32> to vector<96x8xf32>
    %70 = vector.shape_cast %69 : vector<96x8xf32> to vector<4x24x8xf32>
    "tpu.trace_start"() <{level = 10 : i32, message = "bnd,bmd->bnm"}> : () -> ()
    %cst_24 = arith.constant dense<0.000000e+00> : vector<4x24x24xf32>
    %71 = tpu.matmul %66, %68, %cst_24 {dimension_numbers = #tpu.dot_dimension_numbers<[2], [2], [1], [1], [0, 0, 0, 1, 1, 1], [0], [0]>} : vector<4x24x8xf32>, vector<4x24x8xf32>, vector<4x24x24xf32> -> vector<4x24x24xf32>
    "tpu.trace_stop"() : () -> ()
    %c2 = arith.constant 2 : index
    %c0_25 = arith.constant 0 : index
    %c0_26 = arith.constant 0 : index
    %72 = vector.load %arg4[%c2, %c0_25, %c0_26] : memref<4x24x24xf32, #tpu.memory_space<vmem>>, vector<1x24x24xf32>
    %73 = vector.shape_cast %72 : vector<1x24x24xf32> to vector<24x24xf32>
    %74 = vector.shape_cast %73 : vector<24x24xf32> to vector<1x24x24xf32>
    %75 = vector.broadcast %74 : vector<1x24x24xf32> to vector<4x24x24xf32>
    %76 = arith.addf %71, %75 : vector<4x24x24xf32>
    %cst_27 = arith.constant dense<0xFF800000> : vector<4x24xf32>
    %77 = vector.multi_reduction <maximumf>, %76, %cst_27 [2] : vector<4x24x24xf32> to vector<4x24xf32>
    %78 = vector.shape_cast %77 : vector<4x24xf32> to vector<4x24x1xf32>
    %79 = vector.broadcast %78 : vector<4x24x1xf32> to vector<4x24x24xf32>
    %80 = arith.subf %76, %79 : vector<4x24x24xf32>
    %81 = math.exp %80 : vector<4x24x24xf32>
    %cst_28 = arith.constant dense<0.000000e+00> : vector<4x24xf32>
    %82 = vector.multi_reduction <add>, %81, %cst_28 [2] : vector<4x24x24xf32> to vector<4x24xf32>
    %83 = vector.shape_cast %82 : vector<4x24xf32> to vector<4x24x1xf32>
    %84 = tpu.reciprocal %83 {approx = true} : vector<4x24x1xf32> -> vector<4x24x1xf32>
    %85 = arith.mulf %83, %84 : vector<4x24x1xf32>
    %cst_29 = arith.constant 2.000000e+00 : f32
    %86 = vector.broadcast %cst_29 : f32 to vector<4x24x1xf32>
    %87 = arith.subf %86, %85 : vector<4x24x1xf32>
    %88 = arith.mulf %84, %87 : vector<4x24x1xf32>
    %89 = vector.broadcast %88 : vector<4x24x1xf32> to vector<4x24x24xf32>
    %90 = arith.mulf %81, %89 : vector<4x24x24xf32>
    "tpu.trace_start"() <{level = 10 : i32, message = "bnm,bmd->bnd"}> : () -> ()
    %cst_30 = arith.constant dense<0.000000e+00> : vector<4x24x8xf32>
    %91 = tpu.matmul %90, %70, %cst_30 {dimension_numbers = #tpu.dot_dimension_numbers<[2], [1], [1], [2], [0, 0, 0, 1, 1, 2], [0], [0]>} : vector<4x24x24xf32>, vector<4x24x8xf32>, vector<4x24x8xf32> -> vector<4x24x8xf32>
    "tpu.trace_stop"() : () -> ()
    %92 = vector.shape_cast %91 : vector<4x24x8xf32> to vector<96x8xf32>
    %c0_31 = arith.constant 0 : index
    %c16 = arith.constant 16 : index
    %93 = vector.load %arg8[%c0_31, %c16] : memref<96x32xf32, #tpu.memory_space<vmem>>, vector<96x8xf32>
    tpu.vector_store %arg8[%c0_31, %c16], %92 {strides = array<i32>} : memref<96x32xf32, #tpu.memory_space<vmem>>, vector<96x8xf32>,
    %94 = vector.extract_strided_slice %6 {offsets = [0, 24], sizes = [96, 8], strides = [1, 1]} : vector<96x96xf32> to vector<96x8xf32>
    %95 = vector.shape_cast %94 : vector<96x8xf32> to vector<4x24x8xf32>
    %96 = vector.extract_strided_slice %6 {offsets = [0, 56], sizes = [96, 8], strides = [1, 1]} : vector<96x96xf32> to vector<96x8xf32>
    %97 = vector.shape_cast %96 : vector<96x8xf32> to vector<4x24x8xf32>
    %98 = vector.extract_strided_slice %6 {offsets = [0, 88], sizes = [96, 8], strides = [1, 1]} : vector<96x96xf32> to vector<96x8xf32>
    %99 = vector.shape_cast %98 : vector<96x8xf32> to vector<4x24x8xf32>
    "tpu.trace_start"() <{level = 10 : i32, message = "bnd,bmd->bnm"}> : () -> ()
    %cst_32 = arith.constant dense<0.000000e+00> : vector<4x24x24xf32>
    %100 = tpu.matmul %95, %97, %cst_32 {dimension_numbers = #tpu.dot_dimension_numbers<[2], [2], [1], [1], [0, 0, 0, 1, 1, 1], [0], [0]>} : vector<4x24x8xf32>, vector<4x24x8xf32>, vector<4x24x24xf32> -> vector<4x24x24xf32>
    "tpu.trace_stop"() : () -> ()
    %c3 = arith.constant 3 : index
    %c0_33 = arith.constant 0 : index
    %c0_34 = arith.constant 0 : index
    %101 = vector.load %arg4[%c3, %c0_33, %c0_34] : memref<4x24x24xf32, #tpu.memory_space<vmem>>, vector<1x24x24xf32>
    %102 = vector.shape_cast %101 : vector<1x24x24xf32> to vector<24x24xf32>
    %103 = vector.shape_cast %102 : vector<24x24xf32> to vector<1x24x24xf32>
    %104 = vector.broadcast %103 : vector<1x24x24xf32> to vector<4x24x24xf32>
    %105 = arith.addf %100, %104 : vector<4x24x24xf32>
    %cst_35 = arith.constant dense<0xFF800000> : vector<4x24xf32>
    %106 = vector.multi_reduction <maximumf>, %105, %cst_35 [2] : vector<4x24x24xf32> to vector<4x24xf32>
    %107 = vector.shape_cast %106 : vector<4x24xf32> to vector<4x24x1xf32>
    %108 = vector.broadcast %107 : vector<4x24x1xf32> to vector<4x24x24xf32>
    %109 = arith.subf %105, %108 : vector<4x24x24xf32>
    %110 = math.exp %109 : vector<4x24x24xf32>
    %cst_36 = arith.constant dense<0.000000e+00> : vector<4x24xf32>
    %111 = vector.multi_reduction <add>, %110, %cst_36 [2] : vector<4x24x24xf32> to vector<4x24xf32>
    %112 = vector.shape_cast %111 : vector<4x24xf32> to vector<4x24x1xf32>
    %113 = tpu.reciprocal %112 {approx = true} : vector<4x24x1xf32> -> vector<4x24x1xf32>
    %114 = arith.mulf %112, %113 : vector<4x24x1xf32>
    %cst_37 = arith.constant 2.000000e+00 : f32
    %115 = vector.broadcast %cst_37 : f32 to vector<4x24x1xf32>
    %116 = arith.subf %115, %114 : vector<4x24x1xf32>
    %117 = arith.mulf %113, %116 : vector<4x24x1xf32>
    %118 = vector.broadcast %117 : vector<4x24x1xf32> to vector<4x24x24xf32>
    %119 = arith.mulf %110, %118 : vector<4x24x24xf32>
    "tpu.trace_start"() <{level = 10 : i32, message = "bnm,bmd->bnd"}> : () -> ()
    %cst_38 = arith.constant dense<0.000000e+00> : vector<4x24x8xf32>
    %120 = tpu.matmul %119, %99, %cst_38 {dimension_numbers = #tpu.dot_dimension_numbers<[2], [1], [1], [2], [0, 0, 0, 1, 1, 2], [0], [0]>} : vector<4x24x24xf32>, vector<4x24x8xf32>, vector<4x24x8xf32> -> vector<4x24x8xf32>
    "tpu.trace_stop"() : () -> ()
    %121 = vector.shape_cast %120 : vector<4x24x8xf32> to vector<96x8xf32>
    %c0_39 = arith.constant 0 : index
    %c24 = arith.constant 24 : index
    %122 = vector.load %arg8[%c0_39, %c24] : memref<96x32xf32, #tpu.memory_space<vmem>>, vector<96x8xf32>
    tpu.vector_store %arg8[%c0_39, %c24], %121 {strides = array<i32>} : memref<96x32xf32, #tpu.memory_space<vmem>>, vector<96x8xf32>,
    %c0_40 = arith.constant 0 : index
    %c0_41 = arith.constant 0 : index
    %123 = vector.load %arg8[%c0_40, %c0_41] : memref<96x32xf32, #tpu.memory_space<vmem>>, vector<96x32xf32>
    %c0_42 = arith.constant 0 : index
    %c0_43 = arith.constant 0 : index
    %124 = vector.load %arg5[%c0_42, %c0_43] : memref<32x32xf32, #tpu.memory_space<vmem>>, vector<32x32xf32>
    %cst_44 = arith.constant dense<0.000000e+00> : vector<96x32xf32>
    %125 = tpu.matmul %123, %124, %cst_44 {dimension_numbers = #tpu.dot_dimension_numbers<[1], [0], [0], [1], [0, 0, 1, 1], [], []>} : vector<96x32xf32>, vector<32x32xf32>, vector<96x32xf32> -> vector<96x32xf32>
    %c0_45 = arith.constant 0 : index
    %c0_46 = arith.constant 0 : index
    %126 = vector.load %arg6[%c0_45, %c0_46] : memref<1x32xf32, #tpu.memory_space<vmem>>, vector<1x32xf32>
    %127 = vector.broadcast %126 : vector<1x32xf32> to vector<96x32xf32>
    %128 = arith.addf %125, %127 : vector<96x32xf32>
    %129 = vector.shape_cast %128 : vector<96x32xf32> to vector<4x24x32xf32>
    %c0_47 = arith.constant 0 : index
    %c0_48 = arith.constant 0 : index
    %c0_49 = arith.constant 0 : index
    %130 = vector.load %arg7[%c0_47, %c0_48, %c0_49] : memref<4x24x32xf32, #tpu.memory_space<vmem>>, vector<4x24x32xf32>
    tpu.vector_store %arg7[%c0_47, %c0_48, %c0_49], %129 {strides = array<i32>} : memref<4x24x32xf32, #tpu.memory_space<vmem>>, vector<4x24x32xf32>,
    return
  }
  func.func @transform_0(%arg0: i32) -> (i32, i32, i32) {
    %c0_i32 = arith.constant 0 : i32
    %c0_i32_0 = arith.constant 0 : i32
    %c0_i32_1 = arith.constant 0 : i32
    return %arg0, %c0_i32, %c0_i32_0 : i32, i32, i32
  }
  func.func @transform_1(%arg0: i32) -> (i32, i32) {
    %c0_i32 = arith.constant 0 : i32
    %c0_i32_0 = arith.constant 0 : i32
    %c0_i32_1 = arith.constant 0 : i32
    return %c0_i32, %c0_i32_0 : i32, i32
  }
  func.func @transform_2(%arg0: i32) -> (i32, i32) {
    %c0_i32 = arith.constant 0 : i32
    %c0_i32_0 = arith.constant 0 : i32
    %c0_i32_1 = arith.constant 0 : i32
    return %c0_i32, %c0_i32_0 : i32, i32
  }
  func.func @transform_3(%arg0: i32) -> (i32, i32, i32) {
    %c0_i32 = arith.constant 0 : i32
    %c0_i32_0 = arith.constant 0 : i32
    %c0_i32_1 = arith.constant 0 : i32
    %c0_i32_2 = arith.constant 0 : i32
    return %c0_i32, %c0_i32_0, %c0_i32_1 : i32, i32, i32
  }
  func.func @transform_4(%arg0: i32) -> (i32, i32) {
    %c0_i32 = arith.constant 0 : i32
    %c0_i32_0 = arith.constant 0 : i32
    %c0_i32_1 = arith.constant 0 : i32
    return %c0_i32, %c0_i32_0 : i32, i32
  }
  func.func @transform_5(%arg0: i32) -> (i32, i32) {
    %c0_i32 = arith.constant 0 : i32
    %c0_i32_0 = arith.constant 0 : i32
    %c0_i32_1 = arith.constant 0 : i32
    return %c0_i32, %c0_i32_0 : i32, i32
  }
  func.func @transform_6(%arg0: i32) -> (i32, i32, i32) {
    %c0_i32 = arith.constant 0 : i32
    %c0_i32_0 = arith.constant 0 : i32
    %c0_i32_1 = arith.constant 0 : i32
    return %arg0, %c0_i32, %c0_i32_0 : i32, i32, i32
  }
}

</mosaic_0001>

<llo_original>
// kernel: tpu_custom_call.1
$region0: #{tpu_custom_call.1}
  #allocation0 [shape = 'u32[]', space=smem, size = 0x4, offset = 0x4, fixed_abs, tag = 'smem constant byte address 0x4 - core index']
  #allocation1 [shape = 'u32[144,128]{1,0:T(1,128)}', space=vmem, size = 0x12000, scoped, tag = 'internal scratch']
  #allocation2 [shape = 'f32[96,32]{1,0:T(8,128)}', space=vmem, size = 0xc000, scoped, tag = 'scratch operand']
  %s0 = inlined_call_operand.hbm [shape: f32[16,24,32], index: 0, kind: input, shape index: {}]
  %s1 = inlined_call_operand.hbm [shape: f32[32,96], index: 1, kind: input, shape index: {}]
  %s2 = inlined_call_operand.vmem [shape: f32[1,96], index: 2, kind: input, shape index: {}]
  %s3 = inlined_call_operand.hbm [shape: f32[4,24,24], index: 3, kind: input, shape index: {}]
  %s4 = inlined_call_operand.hbm [shape: f32[32,32], index: 4, kind: input, shape index: {}]
  %s5 = inlined_call_operand.vmem [shape: f32[1,32], index: 5, kind: input, shape index: {}]
  %s6 = inlined_call_operand.hbm [shape: f32[16,24,32], index: 6, kind: output, shape index: {}]
  %s7 = sld [smem:[#allocation0]]
  $region73: #{tpu_custom_call.1} parent=0
    _
  %s9 = ssub.s32 1, %s7
  %s10 = scalar_select 0, %s9, %s7
  $region1: #{tpu_custom_call.1} parent=0
    #allocation3 [shape = 'u8[98304]{0}', space=vmem, size = 0x18000, scoped, tag = 'input window, operand 0']
    #allocation4 [shape = 's32[2]{0}', space=sflag, size = 0x8, scoped, tag = 'scoped memory for tpu_custom_call.1']
    #allocation5 [shape = 's32[2]{0}', space=sflag, size = 0x8, scoped, tag = 'scoped memory for tpu_custom_call.1']
    #allocation6 [shape = 'u8[16384]{0}', space=vmem, size = 0x4000, scoped, tag = 'input window, operand 1, single buffered']
    #allocation7 [shape = 's32[1]{0}', space=sflag, size = 0x4, scoped, tag = 'scoped memory for tpu_custom_call.1']
    #allocation8 [shape = 'u8[49152]{0}', space=vmem, size = 0xc000, scoped, tag = 'input window, operand 3, single buffered']
    #allocation9 [shape = 'u8[16384]{0}', space=vmem, size = 0x4000, scoped, tag = 'input window, operand 4, single buffered']
    #allocation10 [shape = 's32[1]{0}', space=sflag, size = 0x4, scoped, tag = 'scoped memory for tpu_custom_call.1']
    #allocation11 [shape = 'u8[98304]{0}', space=vmem, size = 0x18000, scoped, tag = 'output window, operand 0']
    %11 = vsyncpa [#allocation4], 0
    %s12 = scalar_lea.sflag [#allocation4], 1
    %13 = vsyncpa %s12, 0
    %14 = vsyncpa [#allocation7], 0
    %15 = vsyncpa [#allocation10], 0
    %16 = vsyncpa [#allocation5], 0
    %s17 = scalar_lea.sflag [#allocation5], 1
    %18 = vsyncpa %s17, 0
    loop: start=0, step=1, limit=6
    $region2: #{tpu_custom_call.1} parent=1 // loop_pre_header
      _
    $region3: #{tpu_custom_call.1} parent=1 // loop_header
      %s20 = sphi 0, %s24
      %p21 = scmp.ge.s32.totalorder %s20, 6
      %s30 = sphi 0, %s32
      %s33 = sphi 0, %s30
      %s34 = sphi 0, %s33
      %s50 = sphi 0, %s34
      %s54 = sphi 0, %s54
      %s56 = sphi 0, %s54
      %s57 = sphi 0, %s56
      %s71 = sphi 0, %s57
      %s75 = sphi 0, %s75
      %s77 = sphi 0, %s75
      %s78 = sphi 0, %s77
      %s92 = sphi 0, %s78
      %s96 = sphi 0, %s96
      %s98 = sphi 0, %s96
      %s99 = sphi 0, %s98
      %s113 = sphi 0, %s99
      %s117 = sphi 0, %s117
      %s119 = sphi 0, %s117
      %s120 = sphi 0, %s119
      %s134 = sphi 0, %s120
      %s138 = sphi 0, %s138
      %s140 = sphi 0, %s138
      %s141 = sphi 0, %s140
      %s155 = sphi 0, %s141
      %s161 = sphi 0, %s163
      %s164 = sphi 0, %s161
      %s165 = sphi 0, %s164
      %s181 = sphi 0, %s165
    $region4: #{tpu_custom_call.1} parent=1 // loop_header_branch
      %23 = sbr.rel (%p21) target = $region8
    $region5: #{tpu_custom_call.1} parent=1 // loop_body
      %s25 = ssub.s32 %s20, 1
      %s26 = ssub.s32 %s20, 2
      %s27 = sadd.s32 %s20, 1
      %s28 = ssub.s32 %s20, %s27
      %p29 = scmp.eq.s32.totalorder %s28, 0
      %s31 = sadd.s32 %s30, 1
      %s32 = scalar_select %p29, %s30, %s31
      %p35 = pneg %p29
      %p36 = scmp.eq.s32.totalorder %s20, 3
      %p37 = por %p35, %p36
      %p38 = scmp.ne.s32.totalorder %s30, %s33
      %p39 = scmp.eq.s32.totalorder %s20, 0
      %p40 = por %p38, %p39
      %p41 = scmp.ne.s32.totalorder %s30, %s33
      %p42 = scmp.eq.s32.totalorder %s25, 3
      %p43 = por %p41, %p42
      %p44 = scmp.ne.s32.totalorder %s33, %s34
      %p45 = scmp.eq.s32.totalorder %s25, 0
      %p46 = por %p44, %p45
      %p47 = scmp.ne.s32.totalorder %s33, %s34
      %p48 = scmp.eq.s32.totalorder %s26, 3
      %p49 = por %p47, %p48
      %p51 = scmp.ne.s32.totalorder %s34, %s50
      %p52 = scmp.eq.s32.totalorder %s26, 0
      %p53 = por %p51, %p52
      %s55 = sadd.s32 %s54, 1
      %p58 = scmp.eq.s32.totalorder %s20, 3
      %p59 = scmp.ne.s32.totalorder %s54, %s56
      %p60 = scmp.eq.s32.totalorder %s20, 0
      %p61 = por %p59, %p60
      %p62 = scmp.ne.s32.totalorder %s54, %s56
      %p63 = scmp.eq.s32.totalorder %s25, 3
      %p64 = por %p62, %p63
      %p65 = scmp.ne.s32.totalorder %s56, %s57
      %p66 = scmp.eq.s32.totalorder %s25, 0
      %p67 = por %p65, %p66
      %p68 = scmp.ne.s32.totalorder %s56, %s57
      %p69 = scmp.eq.s32.totalorder %s26, 3
      %p70 = por %p68, %p69
      %p72 = scmp.ne.s32.totalorder %s57, %s71
      %p73 = scmp.eq.s32.totalorder %s26, 0
      %p74 = por %p72, %p73
      %s76 = sadd.s32 %s75, 1
      %p79 = scmp.eq.s32.totalorder %s20, 3
      %p80 = scmp.ne.s32.totalorder %s75, %s77
      %p81 = scmp.eq.s32.totalorder %s20, 0
      %p82 = por %p80, %p81
      %p83 = scmp.ne.s32.totalorder %s75, %s77
      %p84 = scmp.eq.s32.totalorder %s25, 3
      %p85 = por %p83, %p84
      %p86 = scmp.ne.s32.totalorder %s77, %s78
      %p87 = scmp.eq.s32.totalorder %s25, 0
      %p88 = por %p86, %p87
      %p89 = scmp.ne.s32.totalorder %s77, %s78
      %p90 = scmp.eq.s32.totalorder %s26, 3
      %p91 = por %p89, %p90
      %p93 = scmp.ne.s32.totalorder %s78, %s92
      %p94 = scmp.eq.s32.totalorder %s26, 0
      %p95 = por %p93, %p94
      %s97 = sadd.s32 %s96, 1
      %p100 = scmp.eq.s32.totalorder %s20, 3
      %p101 = scmp.ne.s32.totalorder %s96, %s98
      %p102 = scmp.eq.s32.totalorder %s20, 0
      %p103 = por %p101, %p102
      %p104 = scmp.ne.s32.totalorder %s96, %s98
      %p105 = scmp.eq.s32.totalorder %s25, 3
      %p106 = por %p104, %p105
      %p107 = scmp.ne.s32.totalorder %s98, %s99
      %p108 = scmp.eq.s32.totalorder %s25, 0
      %p109 = por %p107, %p108
      %p110 = scmp.ne.s32.totalorder %s98, %s99
      %p111 = scmp.eq.s32.totalorder %s26, 3
      %p112 = por %p110, %p111
      %p114 = scmp.ne.s32.totalorder %s99, %s113
      %p115 = scmp.eq.s32.totalorder %s26, 0
      %p116 = por %p114, %p115
      %s118 = sadd.s32 %s117, 1
      %p121 = scmp.eq.s32.totalorder %s20, 3
      %p122 = scmp.ne.s32.totalorder %s117, %s119
      %p123 = scmp.eq.s32.totalorder %s20, 0
      %p124 = por %p122, %p123
      %p125 = scmp.ne.s32.totalorder %s117, %s119
      %p126 = scmp.eq.s32.totalorder %s25, 3
      %p127 = por %p125, %p126
      %p128 = scmp.ne.s32.totalorder %s119, %s120
      %p129 = scmp.eq.s32.totalorder %s25, 0
      %p130 = por %p128, %p129
      %p131 = scmp.ne.s32.totalorder %s119, %s120
      %p132 = scmp.eq.s32.totalorder %s26, 3
      %p133 = por %p131, %p132
      %p135 = scmp.ne.s32.totalorder %s120, %s134
      %p136 = scmp.eq.s32.totalorder %s26, 0
      %p137 = por %p135, %p136
      %s139 = sadd.s32 %s138, 1
      %p142 = scmp.eq.s32.totalorder %s20, 3
      %p143 = scmp.ne.s32.totalorder %s138, %s140
      %p144 = scmp.eq.s32.totalorder %s20, 0
      %p145 = por %p143, %p144
      %p146 = scmp.ne.s32.totalorder %s138, %s140
      %p147 = scmp.eq.s32.totalorder %s25, 3
      %p148 = por %p146, %p147
      %p149 = scmp.ne.s32.totalorder %s140, %s141
      %p150 = scmp.eq.s32.totalorder %s25, 0
      %p151 = por %p149, %p150
      %p152 = scmp.ne.s32.totalorder %s140, %s141
      %p153 = scmp.eq.s32.totalorder %s26, 3
      %p154 = por %p152, %p153
      %p156 = scmp.ne.s32.totalorder %s141, %s155
      %p157 = scmp.eq.s32.totalorder %s26, 0
      %p158 = por %p156, %p157
      %s159 = ssub.s32 %s20, %s27
      %p160 = scmp.eq.s32.totalorder %s159, 0
      %s162 = sadd.s32 %s161, 1
      %s163 = scalar_select %p160, %s161, %s162
      %p166 = pneg %p160
      %p167 = scmp.eq.s32.totalorder %s20, 3
      %p168 = por %p166, %p167
      %p169 = scmp.ne.s32.totalorder %s161, %s164
      %p170 = scmp.eq.s32.totalorder %s20, 0
      %p171 = por %p169, %p170
      %p172 = scmp.ne.s32.totalorder %s161, %s164
      %p173 = scmp.eq.s32.totalorder %s25, 3
      %p174 = por %p172, %p173
      %p175 = scmp.ne.s32.totalorder %s164, %s165
      %p176 = scmp.eq.s32.totalorder %s25, 0
      %p177 = por %p175, %p176
      %p178 = scmp.ne.s32.totalorder %s164, %s165
      %p179 = scmp.eq.s32.totalorder %s26, 3
      %p180 = por %p178, %p179
      %p182 = scmp.ne.s32.totalorder %s165, %s181
      %p183 = scmp.eq.s32.totalorder %s26, 0
      %p184 = por %p182, %p183
      %p185 = scmp.le.s32.totalorder 1, %s20
      %p186 = scmp.lt.s32.totalorder %s20, 5
      %p187 = pnand %p185, %p186
      %p188 = pneg %p187
      // Predicated region
      $region9: #{tpu_custom_call.1} parent=5 // pred_check
        _
      $region10: #{tpu_custom_call.1} parent=5 // pred_check_branch
        %190 = sbr.rel (%p187) target = $region12
      $region11: #{tpu_custom_call.1} parent=5 // pred_region
        %s191 = ssub.s32 %s20, 1
        // Predicated region
        $region13: #{tpu_custom_call.1} parent=11 // pred_check
          %p192 = pneg %p67
        $region14: #{tpu_custom_call.1} parent=11 // pred_check_branch
          %194 = sbr.rel (%p192) target = $region16
        $region15: #{tpu_custom_call.1} parent=11 // pred_region
          %s196 = ssub.s32 512, 512
          %197 = vsyncadd [#allocation7], %s196
          %s198 = sshll.u32 [#allocation6], 4
          %s199 = int_to_ptr.vmem [resolvable:$true] %s198
          %204 = dma.hbm_to_vmem [thread:$0]  %s1, 512, %s199, [#allocation7], 128, 128, 8
        $region16: #{tpu_custom_call.1} parent=11 // pred_fallthru
          _
        // Predicated region
        $region17: #{tpu_custom_call.1} parent=11 // pred_check
          %p205 = pneg %p88
        $region18: #{tpu_custom_call.1} parent=11 // pred_check_branch
          %207 = sbr.rel (%p205) target = $region20
        $region19: #{tpu_custom_call.1} parent=11 // pred_region
          _
        $region20: #{tpu_custom_call.1} parent=11 // pred_fallthru
          _
        // Predicated region
        $region21: #{tpu_custom_call.1} parent=11 // pred_check
          %p208 = pneg %p109
        $region22: #{tpu_custom_call.1} parent=11 // pred_check_branch
          %210 = sbr.rel (%p208) target = $region24
        $region23: #{tpu_custom_call.1} parent=11 // pred_region
          %s212 = ssub.s32 1536, 1536
          %213 = vsyncadd [#allocation7], %s212
          %s214 = sshll.u32 [#allocation8], 4
          %s215 = int_to_ptr.vmem [resolvable:$true] %s214
          %220 = dma.hbm_to_vmem [thread:$0]  %s3, 1536, %s215, [#allocation7], 128, 128, 8
        $region24: #{tpu_custom_call.1} parent=11 // pred_fallthru
          _
        // Predicated region
        $region25: #{tpu_custom_call.1} parent=11 // pred_check
          %p221 = pneg %p130
        $region26: #{tpu_custom_call.1} parent=11 // pred_check_branch
          %223 = sbr.rel (%p221) target = $region28
        $region27: #{tpu_custom_call.1} parent=11 // pred_region
          %s225 = ssub.s32 512, 512
          %226 = vsyncadd [#allocation10], %s225
          %s227 = sshll.u32 [#allocation9], 4
          %s228 = int_to_ptr.vmem [resolvable:$true] %s227
          %233 = dma.hbm_to_vmem [thread:$0]  %s4, 512, %s228, [#allocation10], 128, 128, 8
        $region28: #{tpu_custom_call.1} parent=11 // pred_fallthru
          _
        // Predicated region
        $region29: #{tpu_custom_call.1} parent=11 // pred_check
          %p234 = pneg %p151
        $region30: #{tpu_custom_call.1} parent=11 // pred_check_branch
          %236 = sbr.rel (%p234) target = $region32
        $region31: #{tpu_custom_call.1} parent=11 // pred_region
          _
        $region32: #{tpu_custom_call.1} parent=11 // pred_fallthru
          _
      $region12: #{tpu_custom_call.1} parent=5 // pred_fallthru
        _
      %p237 = scmp.lt.s32.totalorder %s20, 4
      // Predicated region
      $region33: #{tpu_custom_call.1} parent=5 // pred_check
        %p238 = pneg %p237
      $region34: #{tpu_custom_call.1} parent=5 // pred_check_branch
        %240 = sbr.rel (%p238) target = $region36
      $region35: #{tpu_custom_call.1} parent=5 // pred_region
        // Predicated region
        $region37: #{tpu_custom_call.1} parent=35 // pred_check
          %p241 = pneg %p40
        $region38: #{tpu_custom_call.1} parent=35 // pred_check_branch
          %243 = sbr.rel (%p241) target = $region40
        $region39: #{tpu_custom_call.1} parent=35 // pred_region
          %s244 = sand.u32 %s30, 1
          %s245 = scalar_lea.sflag [#allocation4], %s244
          %s246 = sand.u32 %s30, 1
          %s247 = smul.addr %s246, 96
          %s248 = scalar_lea.vmem [#allocation3], %s247
          %s249 = smul.u32 4, %s20
          %s251 = ssub.s32 1536, 1536
          %252 = vsyncadd %s245, %s251
          %s253 = smul.addr %s249, 3
          %s254 = smul.addr %s253, 128
          %s255 = scalar_lea.hbm %s0, %s254
          %s256 = sshll.u32 %s248, 4
          %s257 = int_to_ptr.vmem [resolvable:$true] %s256
          %262 = dma.hbm_to_vmem [thread:$0]  %s255, 1536, %s257, %s245, 128, 128, 8
        $region40: #{tpu_custom_call.1} parent=35 // pred_fallthru
          _
      $region36: #{tpu_custom_call.1} parent=5 // pred_fallthru
        _
      %p263 = scmp.le.s32.totalorder 1, %s20
      %p264 = scmp.lt.s32.totalorder %s20, 5
      %p265 = pnand %p263, %p264
      %p266 = pneg %p265
      // Predicated region
      $region41: #{tpu_custom_call.1} parent=5 // pred_check
        _
      $region42: #{tpu_custom_call.1} parent=5 // pred_check_branch
        %268 = sbr.rel (%p265) target = $region44
      $region43: #{tpu_custom_call.1} parent=5 // pred_region
        %s269 = ssub.s32 %s20, 1
        %s270 = sand.u32 %s33, 1
        %s271 = scalar_lea.sflag [#allocation4], %s270
        %s272 = sand.u32 %s33, 1
        %s273 = smul.addr %s272, 96
        %s274 = scalar_lea.vmem [#allocation3], %s273
        // Predicated region
        $region45: #{tpu_custom_call.1} parent=43 // pred_check
          %p275 = pneg %p46
        $region46: #{tpu_custom_call.1} parent=43 // pred_check_branch
          %277 = sbr.rel (%p275) target = $region48
        $region47: #{tpu_custom_call.1} parent=43 // pred_region
          %278 = dma.done %s271, 1536
        $region48: #{tpu_custom_call.1} parent=43 // pred_fallthru
          _
        // Predicated region
        $region49: #{tpu_custom_call.1} parent=43 // pred_check
          %p279 = pneg %p67
        $region50: #{tpu_custom_call.1} parent=43 // pred_check_branch
          %281 = sbr.rel (%p279) target = $region52
        $region51: #{tpu_custom_call.1} parent=43 // pred_region
          %282 = dma.done [#allocation7], 512
        $region52: #{tpu_custom_call.1} parent=43 // pred_fallthru
          _
        // Predicated region
        $region53: #{tpu_custom_call.1} parent=43 // pred_check
          %p283 = pneg %p109
        $region54: #{tpu_custom_call.1} parent=43 // pred_check_branch
          %285 = sbr.rel (%p283) target = $region56
        $region55: #{tpu_custom_call.1} parent=43 // pred_region
          %286 = dma.done [#allocation7], 1536
        $region56: #{tpu_custom_call.1} parent=43 // pred_fallthru
          _
        // Predicated region
        $region57: #{tpu_custom_call.1} parent=43 // pred_check
          %p287 = pneg %p130
        $region58: #{tpu_custom_call.1} parent=43 // pred_check_branch
          %289 = sbr.rel (%p287) target = $region60
        $region59: #{tpu_custom_call.1} parent=43 // pred_region
          %290 = dma.done [#allocation10], 512
        $region60: #{tpu_custom_call.1} parent=43 // pred_fallthru
          _
        %s291 = sand.u32 %s33, 1
        %s292 = scalar_lea.sflag [#allocation4], %s291
        %s293 = sand.u32 %s33, 1
        %s294 = smul.addr %s293, 96
        %s295 = scalar_lea.vmem [#allocation3], %s294
        %p296 = pneg %p46
        %p297 = pneg %p43
        %p298 = pneg %p67
        %p299 = pneg %p64
        %p300 = pneg %p88
        %p301 = pneg %p85
        %p302 = pneg %p109
        %p303 = pneg %p106
        %p304 = pneg %p130
        %p305 = pneg %p127
        %p306 = pneg %p151
        %p307 = pneg %p148
        %p308 = pneg %p177
        %p309 = pneg %p174
        %s310 = sand.u32 %s164, 1
        %s311 = scalar_lea.sflag [#allocation5], %s310
        %s312 = sand.u32 %s164, 1
        %s313 = smul.addr %s312, 96
        %s314 = scalar_lea.vmem [#allocation11], %s313
        %s315 = smul.u32 4, %s25
        %s316 = smul.u32 4, %s25
        %v317 = vld [vmem:[%s274] sm:$0xff]
        %v318 = vld [vmem:[%s274 + $0x8] sm:$0xff]
        %v319 = vld [vmem:[%s274 + $0x10] sm:$0xff]
        %v320 = vld [vmem:[%s274 + $0x18] sm:$0xff]
        %v321 = vld [vmem:[%s274 + $0x20] sm:$0xff]
        %v322 = vld [vmem:[%s274 + $0x28] sm:$0xff]
        %v323 = vld [vmem:[%s274 + $0x30] sm:$0xff]
        %v324 = vld [vmem:[%s274 + $0x38] sm:$0xff]
        %v325 = vld [vmem:[%s274 + $0x40] sm:$0xff]
        %v326 = vld [vmem:[%s274 + $0x48] sm:$0xff]
        %v327 = vld [vmem:[%s274 + $0x50] sm:$0xff]
        %v328 = vld [vmem:[%s274 + $0x58] sm:$0xff]
        %v329 = vld [vmem:[#allocation6] sm:$0xff]
        %v330 = vld [vmem:[#allocation6 + $0x8] sm:$0xff]
        %v331 = vld [vmem:[#allocation6 + $0x10] sm:$0xff]
        %v332 = vld [vmem:[#allocation6 + $0x18] sm:$0xff]
        %v333 = vld [vmem:[%s2] sm:$0x1]
        %v335 = vlaneseq
        %v336 = vshrl.u32 %v335, 7
        %v337 = vsub.s32 0, %v336
        %v338 = vrot.slane %v333, %v337
        %vm340 = vcmask 261120
        %v342 = vsel %vm340, %v317, 0
        %v345 = vsel %vm340, %v318, 0
        %v348 = vsel %vm340, %v319, 0
        %v351 = vsel %vm340, %v320, 0
        %v354 = vsel %vm340, %v321, 0
        %v357 = vsel %vm340, %v322, 0
        %v360 = vsel %vm340, %v323, 0
        %v363 = vsel %vm340, %v324, 0
        %v366 = vsel %vm340, %v325, 0
        %v369 = vsel %vm340, %v326, 0
        %v372 = vsel %vm340, %v327, 0
        %v375 = vsel %vm340, %v328, 0
        %377 = vmatprep.subr.mxu0 0.0
        %378 = vmatpush1.msra.mxu0 %v329
        %379 = vmatprep.subr.mxu0 0.0
        %380 = vmatpush1.msra.mxu0 %v330
        %381 = vmatprep.subr.mxu0 0.0
        %382 = vmatpush1.msra.mxu0 %v331
        %383 = vmatprep.subr.mxu0 0.0
        %384 = vmatpush1.msra.mxu0 %v332
        %385 = vmatprep.subr.mxu0 0.0
        %386 = vmatpush1.msra.mxu0 0.0
        %387 = vmatprep.subr.mxu0 0.0
        %388 = vmatpush1.msra.mxu0 0.0
        %389 = vmatprep.subr.mxu0 0.0
        %390 = vmatpush1.msra.mxu0 0.0
        %391 = vmatprep.subr.mxu0 0.0
        %392 = vmatpush1.msra.mxu0 0.0
        %393 = vmatprep.subr.mxu0 0.0
        %394 = vmatpush1.msra.mxu0 0.0
        %395 = vmatprep.subr.mxu0 0.0
        %396 = vmatpush1.msra.mxu0 0.0
        %397 = vmatprep.subr.mxu0 0.0
        %398 = vmatpush1.msra.mxu0 0.0
        %399 = vmatprep.subr.mxu0 0.0
        %400 = vmatpush1.msra.mxu0 0.0
        %401 = vmatprep.subr.mxu0 0.0
        %402 = vmatpush1.msra.mxu0 0.0
        %403 = vmatprep.subr.mxu0 0.0
        %404 = vmatpush1.msra.mxu0 0.0
        %405 = vmatprep.subr.mxu0 0.0
        %406 = vmatpush1.msra.mxu0 0.0
        %407 = vmatprep.subr.mxu0 0.0
        %408 = vmatpush1.msra.mxu0 0.0
        %409 = vmatprep.subr.mxu0 0.0
        %410 = vmatpush1.msra.mxu0 0.0
        %411 = vmatprep.subr.mxu0 0.0
        %412 = vmatpush1.msra.mxu0 0.0
        %413 = vmatprep.subr.mxu0 0.0
        %414 = vmatpush1.msra.mxu0 0.0
        %415 = vmatprep.subr.mxu0 0.0
        %416 = vmatpush1.msra.mxu0 0.0
        %417 = vmatprep.subr.mxu0 0.0
        %418 = vmatpush1.msra.mxu0 0.0
        %419 = vmatprep.subr.mxu0 0.0
        %420 = vmatpush1.msra.mxu0 0.0
        %421 = vmatprep.subr.mxu0 0.0
        %422 = vmatpush1.msra.mxu0 0.0
        %423 = vmatprep.subr.mxu0 0.0
        %424 = vmatpush1.msra.mxu0 0.0
        %425 = vmatprep.subr.mxu0 0.0
        %426 = vmatpush1.msra.mxu0 0.0
        %427 = vmatprep.subr.mxu0 0.0
        %428 = vmatpush1.msra.mxu0 0.0
        %429 = vmatprep.subr.mxu0 0.0
        %430 = vmatpush1.msra.mxu0 0.0
        %431 = vmatprep.subr.mxu0 0.0
        %432 = vmatpush1.msra.mxu0 0.0
        %433 = vmatprep.subr.mxu0 0.0
        %434 = vmatpush1.msra.mxu0 0.0
        %435 = vmatprep.subr.mxu0 0.0
        %436 = vmatpush1.msra.mxu0 0.0
        %437 = vmatprep.subr.mxu0 0.0
        %438 = vmatpush1.msra.mxu0 0.0
        %439 = vmatprep.subr.mxu0 0.0
        %440 = vmatpush1.msra.mxu0 0.0
        %441 = vmatprep.mubr.f32.mxu0 0.0
        %442 = vmatmul.mubr.f32.gmra.mrb[0].mxu0 %v342
        %v443 = vpop.f32.mrb[0].mxu0
        %v444 = vadd.f32 %v338, %v443
        %v445 = vpop.f32.mrb[0].mxu0
        %446 = vmatprep.mubr.f32.mxu0 0.0
        %447 = vmatmul.mubr.f32.gmra.mrb[0].mxu0 %v345
        %v448 = vpop.f32.mrb[0].mxu0
        %v449 = vadd.f32 %v338, %v448
        %v450 = vpop.f32.mrb[0].mxu0
        %451 = vmatprep.mubr.f32.mxu0 0.0
        %452 = vmatmul.mubr.f32.gmra.mrb[0].mxu0 %v348
        %v453 = vpop.f32.mrb[0].mxu0
        %v454 = vadd.f32 %v338, %v453
        %v455 = vpop.f32.mrb[0].mxu0
        %456 = vmatprep.mubr.f32.mxu0 0.0
        %457 = vmatmul.mubr.f32.gmra.mrb[0].mxu0 %v351
        %v458 = vpop.f32.mrb[0].mxu0
        %v459 = vadd.f32 %v338, %v458
        %v460 = vpop.f32.mrb[0].mxu0
        %461 = vmatprep.mubr.f32.mxu0 0.0
        %462 = vmatmul.mubr.f32.gmra.mrb[0].mxu0 %v354
        %v463 = vpop.f32.mrb[0].mxu0
        %v464 = vadd.f32 %v338, %v463
        %v465 = vpop.f32.mrb[0].mxu0
        %466 = vmatprep.mubr.f32.mxu0 0.0
        %467 = vmatmul.mubr.f32.gmra.mrb[0].mxu0 %v357
        %v468 = vpop.f32.mrb[0].mxu0
        %v469 = vadd.f32 %v338, %v468
        %v470 = vpop.f32.mrb[0].mxu0
        %471 = vmatprep.mubr.f32.mxu0 0.0
        %472 = vmatmul.mubr.f32.gmra.mrb[0].mxu0 %v360
        %v473 = vpop.f32.mrb[0].mxu0
        %v474 = vadd.f32 %v338, %v473
        %v475 = vpop.f32.mrb[0].mxu0
        %476 = vmatprep.mubr.f32.mxu0 0.0
        %477 = vmatmul.mubr.f32.gmra.mrb[0].mxu0 %v363
        %v478 = vpop.f32.mrb[0].mxu0
        %v479 = vadd.f32 %v338, %v478
        %v480 = vpop.f32.mrb[0].mxu0
        %481 = vmatprep.mubr.f32.mxu0 0.0
        %482 = vmatmul.mubr.f32.gmra.mrb[0].mxu0 %v366
        %v483 = vpop.f32.mrb[0].mxu0
        %v484 = vadd.f32 %v338, %v483
        %v485 = vpop.f32.mrb[0].mxu0
        %486 = vmatprep.mubr.f32.mxu0 0.0
        %487 = vmatmul.mubr.f32.gmra.mrb[0].mxu0 %v369
        %v488 = vpop.f32.mrb[0].mxu0
        %v489 = vadd.f32 %v338, %v488
        %v490 = vpop.f32.mrb[0].mxu0
        %491 = vmatprep.mubr.f32.mxu0 0.0
        %492 = vmatmul.mubr.f32.gmra.mrb[0].mxu0 %v372
        %v493 = vpop.f32.mrb[0].mxu0
        %v494 = vadd.f32 %v338, %v493
        %v495 = vpop.f32.mrb[0].mxu0
        %496 = vmatprep.mubr.f32.mxu0 0.0
        %497 = vmatmul.mubr.f32.gmra.mrb[0].mxu0 %v375
        %v498 = vpop.f32.mrb[0].mxu0
        %v499 = vadd.f32 %v338, %v498
        %v500 = vpop.f32.mrb[0].mxu0
        %501 = vdwg.mxu0
        %v502 = vld [vmem:[#allocation8] sm:$0xff]
        %v503 = vld [vmem:[#allocation8 + $0x8] sm:$0xff]
        %v504 = vld [vmem:[#allocation8 + $0x10] sm:$0xff]
        %508 = vrot.lane.b32.xlu0 %v444, 96
        %v509 = vpop.permute.xlu0 %508
        %510 = vrot.lane.b32.xlu0 %v449, 96
        %v511 = vpop.permute.xlu0 %510
        %512 = vrot.lane.b32.xlu0 %v454, 96
        %v513 = vpop.permute.xlu0 %512
        %vm514 = vcmask 64512
        %v515 = vsel %vm514, %v444, 0
        %v517 = vsel %vm514, %v449, 0
        %v519 = vsel %vm514, %v454, 0
        %v521 = vsel %vm514, %v509, 0
        %v523 = vsel %vm514, %v511, 0
        %v525 = vsel %vm514, %v513, 0
        %527 = vmatprep.subr.mxu0 0.0
        %528 = vmatpush1.xpose.msra.mxu0 %v521
        %529 = vmatprep.subr.mxu0 0.0
        %530 = vmatpush1.xpose.msra.mxu0 %v523
        %531 = vmatprep.subr.mxu0 0.0
        %532 = vmatpush1.xpose.msra.mxu0 %v525
        %533 = vmatprep.subr.mxu0 0.0
        %534 = vmatpush1.xpose.msra.mxu0 0.0
        %535 = vmatprep.subr.mxu0 0.0
        %536 = vmatpush1.xpose.msra.mxu0 0.0
        %537 = vmatprep.subr.mxu0 0.0
        %538 = vmatpush1.xpose.msra.mxu0 0.0
        %539 = vmatprep.subr.mxu0 0.0
        %540 = vmatpush1.xpose.msra.mxu0 0.0
        %541 = vmatprep.subr.mxu0 0.0
        %542 = vmatpush1.xpose.msra.mxu0 0.0
        %543 = vmatprep.subr.mxu0 0.0
        %544 = vmatpush1.xpose.msra.mxu0 0.0
        %545 = vmatprep.subr.mxu0 0.0
        %546 = vmatpush1.xpose.msra.mxu0 0.0
        %547 = vmatprep.subr.mxu0 0.0
        %548 = vmatpush1.xpose.msra.mxu0 0.0
        %549 = vmatprep.subr.mxu0 0.0
        %550 = vmatpush1.xpose.msra.mxu0 0.0
        %551 = vmatprep.subr.mxu0 0.0
        %552 = vmatpush1.xpose.msra.mxu0 0.0
        %553 = vmatprep.subr.mxu0 0.0
        %554 = vmatpush1.xpose.msra.mxu0 0.0
        %555 = vmatprep.subr.mxu0 0.0
        %556 = vmatpush1.xpose.msra.mxu0 0.0
        %557 = vmatprep.subr.mxu0 0.0
        %558 = vmatpush1.xpose.msra.mxu0 0.0
        %559 = vmatprep.subr.mxu0 0.0
        %560 = vmatpush1.xpose.msra.mxu0 0.0
        %561 = vmatprep.subr.mxu0 0.0
        %562 = vmatpush1.xpose.msra.mxu0 0.0
        %563 = vmatprep.subr.mxu0 0.0
        %564 = vmatpush1.xpose.msra.mxu0 0.0
        %565 = vmatprep.subr.mxu0 0.0
        %566 = vmatpush1.xpose.msra.mxu0 0.0
        %567 = vmatprep.subr.mxu0 0.0
        %568 = vmatpush1.xpose.msra.mxu0 0.0
        %569 = vmatprep.subr.mxu0 0.0
        %570 = vmatpush1.xpose.msra.mxu0 0.0
        %571 = vmatprep.subr.mxu0 0.0
        %572 = vmatpush1.xpose.msra.mxu0 0.0
        %573 = vmatprep.subr.mxu0 0.0
        %574 = vmatpush1.xpose.msra.mxu0 0.0
        %575 = vmatprep.subr.mxu0 0.0
        %576 = vmatpush1.xpose.msra.mxu0 0.0
        %577 = vmatprep.subr.mxu0 0.0
        %578 = vmatpush1.xpose.msra.mxu0 0.0
        %579 = vmatprep.subr.mxu0 0.0
        %580 = vmatpush1.xpose.msra.mxu0 0.0
        %581 = vmatprep.subr.mxu0 0.0
        %582 = vmatpush1.xpose.msra.mxu0 0.0
        %583 = vmatprep.subr.mxu0 0.0
        %584 = vmatpush1.xpose.msra.mxu0 0.0
        %585 = vmatprep.subr.mxu0 0.0
        %586 = vmatpush1.xpose.msra.mxu0 0.0
        %587 = vmatprep.subr.mxu0 0.0
        %588 = vmatpush1.xpose.msra.mxu0 0.0
        %589 = vmatprep.subr.mxu0 0.0
        %590 = vmatpush1.xpose.msra.mxu0 0.0
        %591 = vmatprep.mubr.f32.mxu0 0.0
        %592 = vmatmul.mubr.f32.gmra.mrb[0].mxu0 %v515
        %v593 = vpop.f32.mrb[0].mxu0
        %v594 = vadd.f32 %v502, %v593
        %v595 = vpop.f32.mrb[0].mxu0
        %596 = vmatprep.mubr.f32.mxu0 0.0
        %597 = vmatmul.mubr.f32.gmra.mrb[0].mxu0 %v517
        %v598 = vpop.f32.mrb[0].mxu0
        %v599 = vadd.f32 %v503, %v598
        %v600 = vpop.f32.mrb[0].mxu0
        %601 = vmatprep.mubr.f32.mxu0 0.0
        %602 = vmatmul.mubr.f32.gmra.mrb[0].mxu0 %v519
        %v603 = vpop.f32.mrb[0].mxu0
        %v604 = vadd.f32 %v504, %v603
        %v605 = vpop.f32.mrb[0].mxu0
        %606 = vdwg.mxu0
        %610 = vrot.lane.b32.xlu0 %v459, 96
        %v611 = vpop.permute.xlu0 %610
        %612 = vrot.lane.b32.xlu0 %v464, 96
        %v613 = vpop.permute.xlu0 %612
        %614 = vrot.lane.b32.xlu0 %v469, 96
        %v615 = vpop.permute.xlu0 %614
        %v616 = vsel %vm514, %v459, 0
        %v618 = vsel %vm514, %v464, 0
        %v620 = vsel %vm514, %v469, 0
        %v622 = vsel %vm514, %v611, 0
        %v624 = vsel %vm514, %v613, 0
        %v626 = vsel %vm514, %v615, 0
        %628 = vmatprep.subr.mxu0 0.0
        %629 = vmatpush1.xpose.msra.mxu0 %v622
        %630 = vmatprep.subr.mxu0 0.0
        %631 = vmatpush1.xpose.msra.mxu0 %v624
        %632 = vmatprep.subr.mxu0 0.0
        %633 = vmatpush1.xpose.msra.mxu0 %v626
        %634 = vmatprep.subr.mxu0 0.0
        %635 = vmatpush1.xpose.msra.mxu0 0.0
        %636 = vmatprep.subr.mxu0 0.0
        %637 = vmatpush1.xpose.msra.mxu0 0.0
        %638 = vmatprep.subr.mxu0 0.0
        %639 = vmatpush1.xpose.msra.mxu0 0.0
        %640 = vmatprep.subr.mxu0 0.0
        %641 = vmatpush1.xpose.msra.mxu0 0.0
        %642 = vmatprep.subr.mxu0 0.0
        %643 = vmatpush1.xpose.msra.mxu0 0.0
        %644 = vmatprep.subr.mxu0 0.0
        %645 = vmatpush1.xpose.msra.mxu0 0.0
        %646 = vmatprep.subr.mxu0 0.0
        %647 = vmatpush1.xpose.msra.mxu0 0.0
        %648 = vmatprep.subr.mxu0 0.0
        %649 = vmatpush1.xpose.msra.mxu0 0.0
        %650 = vmatprep.subr.mxu0 0.0
        %651 = vmatpush1.xpose.msra.mxu0 0.0
        %652 = vmatprep.subr.mxu0 0.0
        %653 = vmatpush1.xpose.msra.mxu0 0.0
        %654 = vmatprep.subr.mxu0 0.0
        %655 = vmatpush1.xpose.msra.mxu0 0.0
        %656 = vmatprep.subr.mxu0 0.0
        %657 = vmatpush1.xpose.msra.mxu0 0.0
        %658 = vmatprep.subr.mxu0 0.0
        %659 = vmatpush1.xpose.msra.mxu0 0.0
        %660 = vmatprep.subr.mxu0 0.0
        %661 = vmatpush1.xpose.msra.mxu0 0.0
        %662 = vmatprep.subr.mxu0 0.0
        %663 = vmatpush1.xpose.msra.mxu0 0.0
        %664 = vmatprep.subr.mxu0 0.0
        %665 = vmatpush1.xpose.msra.mxu0 0.0
        %666 = vmatprep.subr.mxu0 0.0
        %667 = vmatpush1.xpose.msra.mxu0 0.0
        %668 = vmatprep.subr.mxu0 0.0
        %669 = vmatpush1.xpose.msra.mxu0 0.0
        %670 = vmatprep.subr.mxu0 0.0
        %671 = vmatpush1.xpose.msra.mxu0 0.0
        %672 = vmatprep.subr.mxu0 0.0
        %673 = vmatpush1.xpose.msra.mxu0 0.0
        %674 = vmatprep.subr.mxu0 0.0
        %675 = vmatpush1.xpose.msra.mxu0 0.0
        %676 = vmatprep.subr.mxu0 0.0
        %677 = vmatpush1.xpose.msra.mxu0 0.0
        %678 = vmatprep.subr.mxu0 0.0
        %679 = vmatpush1.xpose.msra.mxu0 0.0
        %680 = vmatprep.subr.mxu0 0.0
        %681 = vmatpush1.xpose.msra.mxu0 0.0
        %682 = vmatprep.subr.mxu0 0.0
        %683 = vmatpush1.xpose.msra.mxu0 0.0
        %684 = vmatprep.subr.mxu0 0.0
        %685 = vmatpush1.xpose.msra.mxu0 0.0
        %686 = vmatprep.subr.mxu0 0.0
        %687 = vmatpush1.xpose.msra.mxu0 0.0
        %688 = vmatprep.subr.mxu0 0.0
        %689 = vmatpush1.xpose.msra.mxu0 0.0
        %690 = vmatprep.subr.mxu0 0.0
        %691 = vmatpush1.xpose.msra.mxu0 0.0
        %692 = vmatprep.mubr.f32.mxu0 0.0
        %693 = vmatmul.mubr.f32.gmra.mrb[0].mxu0 %v616
        %v694 = vpop.f32.mrb[0].mxu0
        %v695 = vadd.f32 %v502, %v694
        %v696 = vpop.f32.mrb[0].mxu0
        %697 = vmatprep.mubr.f32.mxu0 0.0
        %698 = vmatmul.mubr.f32.gmra.mrb[0].mxu0 %v618
        %v699 = vpop.f32.mrb[0].mxu0
        %v700 = vadd.f32 %v503, %v699
        %v701 = vpop.f32.mrb[0].mxu0
        %702 = vmatprep.mubr.f32.mxu0 0.0
        %703 = vmatmul.mubr.f32.gmra.mrb[0].mxu0 %v620
        %v704 = vpop.f32.mrb[0].mxu0
        %v705 = vadd.f32 %v504, %v704
        %v706 = vpop.f32.mrb[0].mxu0
        %707 = vdwg.mxu0
        %711 = vrot.lane.b32.xlu0 %v474, 96
        %v712 = vpop.permute.xlu0 %711
        %713 = vrot.lane.b32.xlu0 %v479, 96
        %v714 = vpop.permute.xlu0 %713
        %715 = vrot.lane.b32.xlu0 %v484, 96
        %v716 = vpop.permute.xlu0 %715
        %v717 = vsel %vm514, %v474, 0
        %v719 = vsel %vm514, %v479, 0
        %v721 = vsel %vm514, %v484, 0
        %v723 = vsel %vm514, %v712, 0
        %v725 = vsel %vm514, %v714, 0
        %v727 = vsel %vm514, %v716, 0
        %729 = vmatprep.subr.mxu0 0.0
        %730 = vmatpush1.xpose.msra.mxu0 %v723
        %731 = vmatprep.subr.mxu0 0.0
        %732 = vmatpush1.xpose.msra.mxu0 %v725
        %733 = vmatprep.subr.mxu0 0.0
        %734 = vmatpush1.xpose.msra.mxu0 %v727
        %735 = vmatprep.subr.mxu0 0.0
        %736 = vmatpush1.xpose.msra.mxu0 0.0
        %737 = vmatprep.subr.mxu0 0.0
        %738 = vmatpush1.xpose.msra.mxu0 0.0
        %739 = vmatprep.subr.mxu0 0.0
        %740 = vmatpush1.xpose.msra.mxu0 0.0
        %741 = vmatprep.subr.mxu0 0.0
        %742 = vmatpush1.xpose.msra.mxu0 0.0
        %743 = vmatprep.subr.mxu0 0.0
        %744 = vmatpush1.xpose.msra.mxu0 0.0
        %745 = vmatprep.subr.mxu0 0.0
        %746 = vmatpush1.xpose.msra.mxu0 0.0
        %747 = vmatprep.subr.mxu0 0.0
        %748 = vmatpush1.xpose.msra.mxu0 0.0
        %749 = vmatprep.subr.mxu0 0.0
        %750 = vmatpush1.xpose.msra.mxu0 0.0
        %751 = vmatprep.subr.mxu0 0.0
        %752 = vmatpush1.xpose.msra.mxu0 0.0
        %753 = vmatprep.subr.mxu0 0.0
        %754 = vmatpush1.xpose.msra.mxu0 0.0
        %755 = vmatprep.subr.mxu0 0.0
        %756 = vmatpush1.xpose.msra.mxu0 0.0
        %757 = vmatprep.subr.mxu0 0.0
        %758 = vmatpush1.xpose.msra.mxu0 0.0
        %759 = vmatprep.subr.mxu0 0.0
        %760 = vmatpush1.xpose.msra.mxu0 0.0
        %761 = vmatprep.subr.mxu0 0.0
        %762 = vmatpush1.xpose.msra.mxu0 0.0
        %763 = vmatprep.subr.mxu0 0.0
        %764 = vmatpush1.xpose.msra.mxu0 0.0
        %765 = vmatprep.subr.mxu0 0.0
        %766 = vmatpush1.xpose.msra.mxu0 0.0
        %767 = vmatprep.subr.mxu0 0.0
        %768 = vmatpush1.xpose.msra.mxu0 0.0
        %769 = vmatprep.subr.mxu0 0.0
        %770 = vmatpush1.xpose.msra.mxu0 0.0
        %771 = vmatprep.subr.mxu0 0.0
        %772 = vmatpush1.xpose.msra.mxu0 0.0
        %773 = vmatprep.subr.mxu0 0.0
        %774 = vmatpush1.xpose.msra.mxu0 0.0
        %775 = vmatprep.subr.mxu0 0.0
        %776 = vmatpush1.xpose.msra.mxu0 0.0
        %777 = vmatprep.subr.mxu0 0.0
        %778 = vmatpush1.xpose.msra.mxu0 0.0
        %779 = vmatprep.subr.mxu0 0.0
        %780 = vmatpush1.xpose.msra.mxu0 0.0
        %781 = vmatprep.subr.mxu0 0.0
        %782 = vmatpush1.xpose.msra.mxu0 0.0
        %783 = vmatprep.subr.mxu0 0.0
        %784 = vmatpush1.xpose.msra.mxu0 0.0
        %785 = vmatprep.subr.mxu0 0.0
        %786 = vmatpush1.xpose.msra.mxu0 0.0
        %787 = vmatprep.subr.mxu0 0.0
        %788 = vmatpush1.xpose.msra.mxu0 0.0
        %789 = vmatprep.subr.mxu0 0.0
        %790 = vmatpush1.xpose.msra.mxu0 0.0
        %791 = vmatprep.subr.mxu0 0.0
        %792 = vmatpush1.xpose.msra.mxu0 0.0
        %793 = vmatprep.mubr.f32.mxu0 0.0
        %794 = vmatmul.mubr.f32.gmra.mrb[0].mxu0 %v717
        %v795 = vpop.f32.mrb[0].mxu0
        %v796 = vadd.f32 %v502, %v795
        %v797 = vpop.f32.mrb[0].mxu0
        %798 = vmatprep.mubr.f32.mxu0 0.0
        %799 = vmatmul.mubr.f32.gmra.mrb[0].mxu0 %v719
        %v800 = vpop.f32.mrb[0].mxu0
        %v801 = vadd.f32 %v503, %v800
        %v802 = vpop.f32.mrb[0].mxu0
        %803 = vmatprep.mubr.f32.mxu0 0.0
        %804 = vmatmul.mubr.f32.gmra.mrb[0].mxu0 %v721
        %v805 = vpop.f32.mrb[0].mxu0
        %v806 = vadd.f32 %v504, %v805
        %v807 = vpop.f32.mrb[0].mxu0
        %808 = vdwg.mxu0
        %812 = vrot.lane.b32.xlu0 %v489, 96
        %v813 = vpop.permute.xlu0 %812
        %814 = vrot.lane.b32.xlu0 %v494, 96
        %v815 = vpop.permute.xlu0 %814
        %816 = vrot.lane.b32.xlu0 %v499, 96
        %v817 = vpop.permute.xlu0 %816
        %v818 = vsel %vm514, %v489, 0
        %v820 = vsel %vm514, %v494, 0
        %v822 = vsel %vm514, %v499, 0
        %v824 = vsel %vm514, %v813, 0
        %v826 = vsel %vm514, %v815, 0
        %v828 = vsel %vm514, %v817, 0
        %830 = vmatprep.subr.mxu0 0.0
        %831 = vmatpush1.xpose.msra.mxu0 %v824
        %832 = vmatprep.subr.mxu0 0.0
        %833 = vmatpush1.xpose.msra.mxu0 %v826
        %834 = vmatprep.subr.mxu0 0.0
        %835 = vmatpush1.xpose.msra.mxu0 %v828
        %836 = vmatprep.subr.mxu0 0.0
        %837 = vmatpush1.xpose.msra.mxu0 0.0
        %838 = vmatprep.subr.mxu0 0.0
        %839 = vmatpush1.xpose.msra.mxu0 0.0
        %840 = vmatprep.subr.mxu0 0.0
        %841 = vmatpush1.xpose.msra.mxu0 0.0
        %842 = vmatprep.subr.mxu0 0.0
        %843 = vmatpush1.xpose.msra.mxu0 0.0
        %844 = vmatprep.subr.mxu0 0.0
        %845 = vmatpush1.xpose.msra.mxu0 0.0
        %846 = vmatprep.subr.mxu0 0.0
        %847 = vmatpush1.xpose.msra.mxu0 0.0
        %848 = vmatprep.subr.mxu0 0.0
        %849 = vmatpush1.xpose.msra.mxu0 0.0
        %850 = vmatprep.subr.mxu0 0.0
        %851 = vmatpush1.xpose.msra.mxu0 0.0
        %852 = vmatprep.subr.mxu0 0.0
        %853 = vmatpush1.xpose.msra.mxu0 0.0
        %854 = vmatprep.subr.mxu0 0.0
        %855 = vmatpush1.xpose.msra.mxu0 0.0
        %856 = vmatprep.subr.mxu0 0.0
        %857 = vmatpush1.xpose.msra.mxu0 0.0
        %858 = vmatprep.subr.mxu0 0.0
        %859 = vmatpush1.xpose.msra.mxu0 0.0
        %860 = vmatprep.subr.mxu0 0.0
        %861 = vmatpush1.xpose.msra.mxu0 0.0
        %862 = vmatprep.subr.mxu0 0.0
        %863 = vmatpush1.xpose.msra.mxu0 0.0
        %864 = vmatprep.subr.mxu0 0.0
        %865 = vmatpush1.xpose.msra.mxu0 0.0
        %866 = vmatprep.subr.mxu0 0.0
        %867 = vmatpush1.xpose.msra.mxu0 0.0
        %868 = vmatprep.subr.mxu0 0.0
        %869 = vmatpush1.xpose.msra.mxu0 0.0
        %870 = vmatprep.subr.mxu0 0.0
        %871 = vmatpush1.xpose.msra.mxu0 0.0
        %872 = vmatprep.subr.mxu0 0.0
        %873 = vmatpush1.xpose.msra.mxu0 0.0
        %874 = vmatprep.subr.mxu0 0.0
        %875 = vmatpush1.xpose.msra.mxu0 0.0
        %876 = vmatprep.subr.mxu0 0.0
        %877 = vmatpush1.xpose.msra.mxu0 0.0
        %878 = vmatprep.subr.mxu0 0.0
        %879 = vmatpush1.xpose.msra.mxu0 0.0
        %880 = vmatprep.subr.mxu0 0.0
        %881 = vmatpush1.xpose.msra.mxu0 0.0
        %882 = vmatprep.subr.mxu0 0.0
        %883 = vmatpush1.xpose.msra.mxu0 0.0
        %884 = vmatprep.subr.mxu0 0.0
        %885 = vmatpush1.xpose.msra.mxu0 0.0
        %886 = vmatprep.subr.mxu0 0.0
        %887 = vmatpush1.xpose.msra.mxu0 0.0
        %888 = vmatprep.subr.mxu0 0.0
        %889 = vmatpush1.xpose.msra.mxu0 0.0
        %890 = vmatprep.subr.mxu0 0.0
        %891 = vmatpush1.xpose.msra.mxu0 0.0
        %892 = vmatprep.subr.mxu0 0.0
        %893 = vmatpush1.xpose.msra.mxu0 0.0
        %894 = vmatprep.mubr.f32.mxu0 0.0
        %895 = vmatmul.mubr.f32.gmra.mrb[0].mxu0 %v818
        %v896 = vpop.f32.mrb[0].mxu0
        %v897 = vadd.f32 %v502, %v896
        %v898 = vpop.f32.mrb[0].mxu0
        %899 = vmatprep.mubr.f32.mxu0 0.0
        %900 = vmatmul.mubr.f32.gmra.mrb[0].mxu0 %v820
        %v901 = vpop.f32.mrb[0].mxu0
        %v902 = vadd.f32 %v503, %v901
        %v903 = vpop.f32.mrb[0].mxu0
        %904 = vmatprep.mubr.f32.mxu0 0.0
        %905 = vmatmul.mubr.f32.gmra.mrb[0].mxu0 %v822
        %v906 = vpop.f32.mrb[0].mxu0
        %v907 = vadd.f32 %v504, %v906
        %v908 = vpop.f32.mrb[0].mxu0
        %909 = vdwg.mxu0
        %vm910 = vcmask 195584
        %v911 = vsel %vm910, %v594, -inf
        %912 = vmax.xlane.f32.xlu0 %v911
        %v913 = vpop.xlane.xlu0 %912
        %v914 = vsel %vm910, %v599, -inf
        %915 = vmax.xlane.f32.xlu0 %v914
        %v916 = vpop.xlane.xlu0 %915
        %v917 = vsel %vm910, %v604, -inf
        %918 = vmax.xlane.f32.xlu0 %v917
        %v919 = vpop.xlane.xlu0 %918
        %v920 = vsel %vm910, %v695, -inf
        %921 = vmax.xlane.f32.xlu0 %v920
        %v922 = vpop.xlane.xlu0 %921
        %v923 = vsel %vm910, %v700, -inf
        %924 = vmax.xlane.f32.xlu0 %v923
        %v925 = vpop.xlane.xlu0 %924
        %v926 = vsel %vm910, %v705, -inf
        %927 = vmax.xlane.f32.xlu0 %v926
        %v928 = vpop.xlane.xlu0 %927
        %v929 = vsel %vm910, %v796, -inf
        %930 = vmax.xlane.f32.xlu0 %v929
        %v931 = vpop.xlane.xlu0 %930
        %v932 = vsel %vm910, %v801, -inf
        %933 = vmax.xlane.f32.xlu0 %v932
        %v934 = vpop.xlane.xlu0 %933
        %v935 = vsel %vm910, %v806, -inf
        %936 = vmax.xlane.f32.xlu0 %v935
        %v937 = vpop.xlane.xlu0 %936
        %v938 = vsel %vm910, %v897, -inf
        %939 = vmax.xlane.f32.xlu0 %v938
        %v940 = vpop.xlane.xlu0 %939
        %v941 = vsel %vm910, %v902, -inf
        %942 = vmax.xlane.f32.xlu0 %v941
        %v943 = vpop.xlane.xlu0 %942
        %v944 = vsel %vm910, %v907, -inf
        %945 = vmax.xlane.f32.xlu0 %v944
        %v946 = vpop.xlane.xlu0 %945
        %v947 = vsub.f32 %v594, %v913
        %v948 = vsub.f32 %v599, %v916
        %v949 = vsub.f32 %v604, %v919
        %v950 = vsub.f32 %v695, %v922
        %v951 = vsub.f32 %v700, %v925
        %v952 = vsub.f32 %v705, %v928
        %v953 = vsub.f32 %v796, %v931
        %v954 = vsub.f32 %v801, %v934
        %v955 = vsub.f32 %v806, %v937
        %v956 = vsub.f32 %v897, %v940
        %v957 = vsub.f32 %v902, %v943
        %v958 = vsub.f32 %v907, %v946
        %v959 = vmul.f32 %v947, 1.442695
        %v960 = vpow.pop %v959
        %v961 = vmul.f32 %v948, 1.442695
        %v962 = vpow.pop %v961
        %v963 = vmul.f32 %v949, 1.442695
        %v964 = vpow.pop %v963
        %v965 = vmul.f32 %v950, 1.442695
        %v966 = vpow.pop %v965
        %v967 = vmul.f32 %v951, 1.442695
        %v968 = vpow.pop %v967
        %v969 = vmul.f32 %v952, 1.442695
        %v970 = vpow.pop %v969
        %v971 = vmul.f32 %v953, 1.442695
        %v972 = vpow.pop %v971
        %v973 = vmul.f32 %v954, 1.442695
        %v974 = vpow.pop %v973
        %v975 = vmul.f32 %v955, 1.442695
        %v976 = vpow.pop %v975
        %v977 = vmul.f32 %v956, 1.442695
        %v978 = vpow.pop %v977
        %v979 = vmul.f32 %v957, 1.442695
        %v980 = vpow.pop %v979
        %v981 = vmul.f32 %v958, 1.442695
        %v982 = vpow.pop %v981
        %v983 = vsel %vm910, %v960, 0.0
        %984 = vadd.xlane.f32.xlu0 %v983
        %v985 = vpop.xlane.xlu0 %984
        %v986 = vsel %vm910, %v962, 0.0
        %987 = vadd.xlane.f32.xlu0 %v986
        %v988 = vpop.xlane.xlu0 %987
        %v989 = vsel %vm910, %v964, 0.0
        %990 = vadd.xlane.f32.xlu0 %v989
        %v991 = vpop.xlane.xlu0 %990
        %v992 = vsel %vm910, %v966, 0.0
        %993 = vadd.xlane.f32.xlu0 %v992
        %v994 = vpop.xlane.xlu0 %993
        %v995 = vsel %vm910, %v968, 0.0
        %996 = vadd.xlane.f32.xlu0 %v995
        %v997 = vpop.xlane.xlu0 %996
        %v998 = vsel %vm910, %v970, 0.0
        %999 = vadd.xlane.f32.xlu0 %v998
        %v1000 = vpop.xlane.xlu0 %999
        %v1001 = vsel %vm910, %v972, 0.0
        %1002 = vadd.xlane.f32.xlu0 %v1001
        %v1003 = vpop.xlane.xlu0 %1002
        %v1004 = vsel %vm910, %v974, 0.0
        %1005 = vadd.xlane.f32.xlu0 %v1004
        %v1006 = vpop.xlane.xlu0 %1005
        %v1007 = vsel %vm910, %v976, 0.0
        %1008 = vadd.xlane.f32.xlu0 %v1007
        %v1009 = vpop.xlane.xlu0 %1008
        %v1010 = vsel %vm910, %v978, 0.0
        %1011 = vadd.xlane.f32.xlu0 %v1010
        %v1012 = vpop.xlane.xlu0 %1011
        %v1013 = vsel %vm910, %v980, 0.0
        %1014 = vadd.xlane.f32.xlu0 %v1013
        %v1015 = vpop.xlane.xlu0 %1014
        %v1016 = vsel %vm910, %v982, 0.0
        %1017 = vadd.xlane.f32.xlu0 %v1016
        %v1018 = vpop.xlane.xlu0 %1017
        %v1019 = vrcp.pop %v985
        %v1020 = vrcp.pop %v988
        %v1021 = vrcp.pop %v991
        %v1022 = vrcp.pop %v994
        %v1023 = vrcp.pop %v997
        %v1024 = vrcp.pop %v1000
        %v1025 = vrcp.pop %v1003
        %v1026 = vrcp.pop %v1006
        %v1027 = vrcp.pop %v1009
        %v1028 = vrcp.pop %v1012
        %v1029 = vrcp.pop %v1015
        %v1030 = vrcp.pop %v1018
        %v1031 = vmul.f32 %v985, %v1019
        %v1032 = vmul.f32 %v988, %v1020
        %v1033 = vmul.f32 %v991, %v1021
        %v1034 = vmul.f32 %v994, %v1022
        %v1035 = vmul.f32 %v997, %v1023
        %v1036 = vmul.f32 %v1000, %v1024
        %v1037 = vmul.f32 %v1003, %v1025
        %v1038 = vmul.f32 %v1006, %v1026
        %v1039 = vmul.f32 %v1009, %v1027
        %v1040 = vmul.f32 %v1012, %v1028
        %v1041 = vmul.f32 %v1015, %v1029
        %v1042 = vmul.f32 %v1018, %v1030
        %v1043 = vsub.f32 2.0, %v1031
        %v1044 = vsub.f32 2.0, %v1032
        %v1045 = vsub.f32 2.0, %v1033
        %v1046 = vsub.f32 2.0, %v1034
        %v1047 = vsub.f32 2.0, %v1035
        %v1048 = vsub.f32 2.0, %v1036
        %v1049 = vsub.f32 2.0, %v1037
        %v1050 = vsub.f32 2.0, %v1038
        %v1051 = vsub.f32 2.0, %v1039
        %v1052 = vsub.f32 2.0, %v1040
        %v1053 = vsub.f32 2.0, %v1041
        %v1054 = vsub.f32 2.0, %v1042
        %v1055 = vmul.f32 %v1019, %v1043
        %v1056 = vmul.f32 %v1020, %v1044
        %v1057 = vmul.f32 %v1021, %v1045
        %v1058 = vmul.f32 %v1022, %v1046
        %v1059 = vmul.f32 %v1023, %v1047
        %v1060 = vmul.f32 %v1024, %v1048
        %v1061 = vmul.f32 %v1025, %v1049
        %v1062 = vmul.f32 %v1026, %v1050
        %v1063 = vmul.f32 %v1027, %v1051
        %v1064 = vmul.f32 %v1028, %v1052
        %v1065 = vmul.f32 %v1029, %v1053
        %v1066 = vmul.f32 %v1030, %v1054
        %v1067 = vmul.f32 %v960, %v1055
        %v1068 = vmul.f32 %v962, %v1056
        %v1069 = vmul.f32 %v964, %v1057
        %v1070 = vmul.f32 %v966, %v1058
        %v1071 = vmul.f32 %v968, %v1059
        %v1072 = vmul.f32 %v970, %v1060
        %v1073 = vmul.f32 %v972, %v1061
        %v1074 = vmul.f32 %v974, %v1062
        %v1075 = vmul.f32 %v976, %v1063
        %v1076 = vmul.f32 %v978, %v1064
        %v1077 = vmul.f32 %v980, %v1065
        %v1078 = vmul.f32 %v982, %v1066
        %1079 = vrot.lane.b32.xlu0 %v444, 64
        %v1080 = vpop.permute.xlu0 %1079
        %1081 = vrot.lane.b32.xlu0 %v449, 64
        %v1082 = vpop.permute.xlu0 %1081
        %1083 = vrot.lane.b32.xlu0 %v454, 64
        %v1084 = vpop.permute.xlu0 %1083
        %v1089 = vsel %vm910, %v1067, 0
        %v1092 = vsel %vm910, %v1068, 0
        %v1095 = vsel %vm910, %v1069, 0
        %1097 = vmatprep.subr.mxu0 0.0
        %1098 = vmatpush1.msra.mxu0 %v1080
        %1099 = vmatprep.subr.mxu0 0.0
        %1100 = vmatpush1.msra.mxu0 %v1082
        %1101 = vmatprep.subr.mxu0 0.0
        %1102 = vmatpush1.msra.mxu0 %v1084
        %1103 = vmatprep.subr.mxu0 0.0
        %1104 = vmatpush1.msra.mxu0 0.0
        %1105 = vmatprep.subr.mxu0 0.0
        %1106 = vmatpush1.msra.mxu0 0.0
        %1107 = vmatprep.subr.mxu0 0.0
        %1108 = vmatpush1.msra.mxu0 0.0
        %1109 = vmatprep.subr.mxu0 0.0
        %1110 = vmatpush1.msra.mxu0 0.0
        %1111 = vmatprep.subr.mxu0 0.0
        %1112 = vmatpush1.msra.mxu0 0.0
        %1113 = vmatprep.subr.mxu0 0.0
        %1114 = vmatpush1.msra.mxu0 0.0
        %1115 = vmatprep.subr.mxu0 0.0
        %1116 = vmatpush1.msra.mxu0 0.0
        %1117 = vmatprep.subr.mxu0 0.0
        %1118 = vmatpush1.msra.mxu0 0.0
        %1119 = vmatprep.subr.mxu0 0.0
        %1120 = vmatpush1.msra.mxu0 0.0
        %1121 = vmatprep.subr.mxu0 0.0
        %1122 = vmatpush1.msra.mxu0 0.0
        %1123 = vmatprep.subr.mxu0 0.0
        %1124 = vmatpush1.msra.mxu0 0.0
        %1125 = vmatprep.subr.mxu0 0.0
        %1126 = vmatpush1.msra.mxu0 0.0
        %1127 = vmatprep.subr.mxu0 0.0
        %1128 = vmatpush1.msra.mxu0 0.0
        %1129 = vmatprep.subr.mxu0 0.0
        %1130 = vmatpush1.msra.mxu0 0.0
        %1131 = vmatprep.subr.mxu0 0.0
        %1132 = vmatpush1.msra.mxu0 0.0
        %1133 = vmatprep.subr.mxu0 0.0
        %1134 = vmatpush1.msra.mxu0 0.0
        %1135 = vmatprep.subr.mxu0 0.0
        %1136 = vmatpush1.msra.mxu0 0.0
        %1137 = vmatprep.subr.mxu0 0.0
        %1138 = vmatpush1.msra.mxu0 0.0
        %1139 = vmatprep.subr.mxu0 0.0
        %1140 = vmatpush1.msra.mxu0 0.0
        %1141 = vmatprep.subr.mxu0 0.0
        %1142 = vmatpush1.msra.mxu0 0.0
        %1143 = vmatprep.subr.mxu0 0.0
        %1144 = vmatpush1.msra.mxu0 0.0
        %1145 = vmatprep.subr.mxu0 0.0
        %1146 = vmatpush1.msra.mxu0 0.0
        %1147 = vmatprep.subr.mxu0 0.0
        %1148 = vmatpush1.msra.mxu0 0.0
        %1149 = vmatprep.subr.mxu0 0.0
        %1150 = vmatpush1.msra.mxu0 0.0
        %1151 = vmatprep.subr.mxu0 0.0
        %1152 = vmatpush1.msra.mxu0 0.0
        %1153 = vmatprep.subr.mxu0 0.0
        %1154 = vmatpush1.msra.mxu0 0.0
        %1155 = vmatprep.subr.mxu0 0.0
        %1156 = vmatpush1.msra.mxu0 0.0
        %1157 = vmatprep.subr.mxu0 0.0
        %1158 = vmatpush1.msra.mxu0 0.0
        %1159 = vmatprep.subr.mxu0 0.0
        %1160 = vmatpush1.msra.mxu0 0.0
        %1161 = vmatprep.mubr.f32.mxu0 0.0
        %1162 = vmatmul.mubr.f32.gmra.mrb[0].mxu0 %v1089
        %v1163 = vpop.f32.mrb[0].mxu0
        %v1164 = vadd.f32 0.0, %v1163
        %v1165 = vpop.f32.mrb[0].mxu0
        %1166 = vmatprep.mubr.f32.mxu0 0.0
        %1167 = vmatmul.mubr.f32.gmra.mrb[0].mxu0 %v1092
        %v1168 = vpop.f32.mrb[0].mxu0
        %v1169 = vadd.f32 0.0, %v1168
        %v1170 = vpop.f32.mrb[0].mxu0
        %1171 = vmatprep.mubr.f32.mxu0 0.0
        %1172 = vmatmul.mubr.f32.gmra.mrb[0].mxu0 %v1095
        %v1173 = vpop.f32.mrb[0].mxu0
        %v1174 = vadd.f32 0.0, %v1173
        %v1175 = vpop.f32.mrb[0].mxu0
        %1176 = vdwg.mxu0
        %1177 = vrot.lane.b32.xlu0 %v459, 64
        %v1178 = vpop.permute.xlu0 %1177
        %1179 = vrot.lane.b32.xlu0 %v464, 64
        %v1180 = vpop.permute.xlu0 %1179
        %1181 = vrot.lane.b32.xlu0 %v469, 64
        %v1182 = vpop.permute.xlu0 %1181
        %v1187 = vsel %vm910, %v1070, 0
        %v1190 = vsel %vm910, %v1071, 0
        %v1193 = vsel %vm910, %v1072, 0
        %1195 = vmatprep.subr.mxu0 0.0
        %1196 = vmatpush1.msra.mxu0 %v1178
        %1197 = vmatprep.subr.mxu0 0.0
        %1198 = vmatpush1.msra.mxu0 %v1180
        %1199 = vmatprep.subr.mxu0 0.0
        %1200 = vmatpush1.msra.mxu0 %v1182
        %1201 = vmatprep.subr.mxu0 0.0
        %1202 = vmatpush1.msra.mxu0 0.0
        %1203 = vmatprep.subr.mxu0 0.0
        %1204 = vmatpush1.msra.mxu0 0.0
        %1205 = vmatprep.subr.mxu0 0.0
        %1206 = vmatpush1.msra.mxu0 0.0
        %1207 = vmatprep.subr.mxu0 0.0
        %1208 = vmatpush1.msra.mxu0 0.0
        %1209 = vmatprep.subr.mxu0 0.0
        %1210 = vmatpush1.msra.mxu0 0.0
        %1211 = vmatprep.subr.mxu0 0.0
        %1212 = vmatpush1.msra.mxu0 0.0
        %1213 = vmatprep.subr.mxu0 0.0
        %1214 = vmatpush1.msra.mxu0 0.0
        %1215 = vmatprep.subr.mxu0 0.0
        %1216 = vmatpush1.msra.mxu0 0.0
        %1217 = vmatprep.subr.mxu0 0.0
        %1218 = vmatpush1.msra.mxu0 0.0
        %1219 = vmatprep.subr.mxu0 0.0
        %1220 = vmatpush1.msra.mxu0 0.0
        %1221 = vmatprep.subr.mxu0 0.0
        %1222 = vmatpush1.msra.mxu0 0.0
        %1223 = vmatprep.subr.mxu0 0.0
        %1224 = vmatpush1.msra.mxu0 0.0
        %1225 = vmatprep.subr.mxu0 0.0
        %1226 = vmatpush1.msra.mxu0 0.0
        %1227 = vmatprep.subr.mxu0 0.0
        %1228 = vmatpush1.msra.mxu0 0.0
        %1229 = vmatprep.subr.mxu0 0.0
        %1230 = vmatpush1.msra.mxu0 0.0
        %1231 = vmatprep.subr.mxu0 0.0
        %1232 = vmatpush1.msra.mxu0 0.0
        %1233 = vmatprep.subr.mxu0 0.0
        %1234 = vmatpush1.msra.mxu0 0.0
        %1235 = vmatprep.subr.mxu0 0.0
        %1236 = vmatpush1.msra.mxu0 0.0
        %1237 = vmatprep.subr.mxu0 0.0
        %1238 = vmatpush1.msra.mxu0 0.0
        %1239 = vmatprep.subr.mxu0 0.0
        %1240 = vmatpush1.msra.mxu0 0.0
        %1241 = vmatprep.subr.mxu0 0.0
        %1242 = vmatpush1.msra.mxu0 0.0
        %1243 = vmatprep.subr.mxu0 0.0
        %1244 = vmatpush1.msra.mxu0 0.0
        %1245 = vmatprep.subr.mxu0 0.0
        %1246 = vmatpush1.msra.mxu0 0.0
        %1247 = vmatprep.subr.mxu0 0.0
        %1248 = vmatpush1.msra.mxu0 0.0
        %1249 = vmatprep.subr.mxu0 0.0
        %1250 = vmatpush1.msra.mxu0 0.0
        %1251 = vmatprep.subr.mxu0 0.0
        %1252 = vmatpush1.msra.mxu0 0.0
        %1253 = vmatprep.subr.mxu0 0.0
        %1254 = vmatpush1.msra.mxu0 0.0
        %1255 = vmatprep.subr.mxu0 0.0
        %1256 = vmatpush1.msra.mxu0 0.0
        %1257 = vmatprep.subr.mxu0 0.0
        %1258 = vmatpush1.msra.mxu0 0.0
        %1259 = vmatprep.mubr.f32.mxu0 0.0
        %1260 = vmatmul.mubr.f32.gmra.mrb[0].mxu0 %v1187
        %v1261 = vpop.f32.mrb[0].mxu0
        %v1262 = vadd.f32 0.0, %v1261
        %v1263 = vpop.f32.mrb[0].mxu0
        %1264 = vmatprep.mubr.f32.mxu0 0.0
        %1265 = vmatmul.mubr.f32.gmra.mrb[0].mxu0 %v1190
        %v1266 = vpop.f32.mrb[0].mxu0
        %v1267 = vadd.f32 0.0, %v1266
        %v1268 = vpop.f32.mrb[0].mxu0
        %1269 = vmatprep.mubr.f32.mxu0 0.0
        %1270 = vmatmul.mubr.f32.gmra.mrb[0].mxu0 %v1193
        %v1271 = vpop.f32.mrb[0].mxu0
        %v1272 = vadd.f32 0.0, %v1271
        %v1273 = vpop.f32.mrb[0].mxu0
        %1274 = vdwg.mxu0
        %1275 = vrot.lane.b32.xlu0 %v474, 64
        %v1276 = vpop.permute.xlu0 %1275
        %1277 = vrot.lane.b32.xlu0 %v479, 64
        %v1278 = vpop.permute.xlu0 %1277
        %1279 = vrot.lane.b32.xlu0 %v484, 64
        %v1280 = vpop.permute.xlu0 %1279
        %v1285 = vsel %vm910, %v1073, 0
        %v1288 = vsel %vm910, %v1074, 0
        %v1291 = vsel %vm910, %v1075, 0
        %1293 = vmatprep.subr.mxu0 0.0
        %1294 = vmatpush1.msra.mxu0 %v1276
        %1295 = vmatprep.subr.mxu0 0.0
        %1296 = vmatpush1.msra.mxu0 %v1278
        %1297 = vmatprep.subr.mxu0 0.0
        %1298 = vmatpush1.msra.mxu0 %v1280
        %1299 = vmatprep.subr.mxu0 0.0
        %1300 = vmatpush1.msra.mxu0 0.0
        %1301 = vmatprep.subr.mxu0 0.0
        %1302 = vmatpush1.msra.mxu0 0.0
        %1303 = vmatprep.subr.mxu0 0.0
        %1304 = vmatpush1.msra.mxu0 0.0
        %1305 = vmatprep.subr.mxu0 0.0
        %1306 = vmatpush1.msra.mxu0 0.0
        %1307 = vmatprep.subr.mxu0 0.0
        %1308 = vmatpush1.msra.mxu0 0.0
        %1309 = vmatprep.subr.mxu0 0.0
        %1310 = vmatpush1.msra.mxu0 0.0
        %1311 = vmatprep.subr.mxu0 0.0
        %1312 = vmatpush1.msra.mxu0 0.0
        %1313 = vmatprep.subr.mxu0 0.0
        %1314 = vmatpush1.msra.mxu0 0.0
        %1315 = vmatprep.subr.mxu0 0.0
        %1316 = vmatpush1.msra.mxu0 0.0
        %1317 = vmatprep.subr.mxu0 0.0
        %1318 = vmatpush1.msra.mxu0 0.0
        %1319 = vmatprep.subr.mxu0 0.0
        %1320 = vmatpush1.msra.mxu0 0.0
        %1321 = vmatprep.subr.mxu0 0.0
        %1322 = vmatpush1.msra.mxu0 0.0
        %1323 = vmatprep.subr.mxu0 0.0
        %1324 = vmatpush1.msra.mxu0 0.0
        %1325 = vmatprep.subr.mxu0 0.0
        %1326 = vmatpush1.msra.mxu0 0.0
        %1327 = vmatprep.subr.mxu0 0.0
        %1328 = vmatpush1.msra.mxu0 0.0
        %1329 = vmatprep.subr.mxu0 0.0
        %1330 = vmatpush1.msra.mxu0 0.0
        %1331 = vmatprep.subr.mxu0 0.0
        %1332 = vmatpush1.msra.mxu0 0.0
        %1333 = vmatprep.subr.mxu0 0.0
        %1334 = vmatpush1.msra.mxu0 0.0
        %1335 = vmatprep.subr.mxu0 0.0
        %1336 = vmatpush1.msra.mxu0 0.0
        %1337 = vmatprep.subr.mxu0 0.0
        %1338 = vmatpush1.msra.mxu0 0.0
        %1339 = vmatprep.subr.mxu0 0.0
        %1340 = vmatpush1.msra.mxu0 0.0
        %1341 = vmatprep.subr.mxu0 0.0
        %1342 = vmatpush1.msra.mxu0 0.0
        %1343 = vmatprep.subr.mxu0 0.0
        %1344 = vmatpush1.msra.mxu0 0.0
        %1345 = vmatprep.subr.mxu0 0.0
        %1346 = vmatpush1.msra.mxu0 0.0
        %1347 = vmatprep.subr.mxu0 0.0
        %1348 = vmatpush1.msra.mxu0 0.0
        %1349 = vmatprep.subr.mxu0 0.0
        %1350 = vmatpush1.msra.mxu0 0.0
        %1351 = vmatprep.subr.mxu0 0.0
        %1352 = vmatpush1.msra.mxu0 0.0
        %1353 = vmatprep.subr.mxu0 0.0
        %1354 = vmatpush1.msra.mxu0 0.0
        %1355 = vmatprep.subr.mxu0 0.0
        %1356 = vmatpush1.msra.mxu0 0.0
        %1357 = vmatprep.mubr.f32.mxu0 0.0
        %1358 = vmatmul.mubr.f32.gmra.mrb[0].mxu0 %v1285
        %v1359 = vpop.f32.mrb[0].mxu0
        %v1360 = vadd.f32 0.0, %v1359
        %v1361 = vpop.f32.mrb[0].mxu0
        %1362 = vmatprep.mubr.f32.mxu0 0.0
        %1363 = vmatmul.mubr.f32.gmra.mrb[0].mxu0 %v1288
        %v1364 = vpop.f32.mrb[0].mxu0
        %v1365 = vadd.f32 0.0, %v1364
        %v1366 = vpop.f32.mrb[0].mxu0
        %1367 = vmatprep.mubr.f32.mxu0 0.0
        %1368 = vmatmul.mubr.f32.gmra.mrb[0].mxu0 %v1291
        %v1369 = vpop.f32.mrb[0].mxu0
        %v1370 = vadd.f32 0.0, %v1369
        %v1371 = vpop.f32.mrb[0].mxu0
        %1372 = vdwg.mxu0
        %1373 = vrot.lane.b32.xlu0 %v489, 64
        %v1374 = vpop.permute.xlu0 %1373
        %1375 = vrot.lane.b32.xlu0 %v494, 64
        %v1376 = vpop.permute.xlu0 %1375
        %1377 = vrot.lane.b32.xlu0 %v499, 64
        %v1378 = vpop.permute.xlu0 %1377
        %v1383 = vsel %vm910, %v1076, 0
        %v1386 = vsel %vm910, %v1077, 0
        %v1389 = vsel %vm910, %v1078, 0
        %1391 = vmatprep.subr.mxu0 0.0
        %1392 = vmatpush1.msra.mxu0 %v1374
        %1393 = vmatprep.subr.mxu0 0.0
        %1394 = vmatpush1.msra.mxu0 %v1376
        %1395 = vmatprep.subr.mxu0 0.0
        %1396 = vmatpush1.msra.mxu0 %v1378
        %1397 = vmatprep.subr.mxu0 0.0
        %1398 = vmatpush1.msra.mxu0 0.0
        %1399 = vmatprep.subr.mxu0 0.0
        %1400 = vmatpush1.msra.mxu0 0.0
        %1401 = vmatprep.subr.mxu0 0.0
        %1402 = vmatpush1.msra.mxu0 0.0
        %1403 = vmatprep.subr.mxu0 0.0
        %1404 = vmatpush1.msra.mxu0 0.0
        %1405 = vmatprep.subr.mxu0 0.0
        %1406 = vmatpush1.msra.mxu0 0.0
        %1407 = vmatprep.subr.mxu0 0.0
        %1408 = vmatpush1.msra.mxu0 0.0
        %1409 = vmatprep.subr.mxu0 0.0
        %1410 = vmatpush1.msra.mxu0 0.0
        %1411 = vmatprep.subr.mxu0 0.0
        %1412 = vmatpush1.msra.mxu0 0.0
        %1413 = vmatprep.subr.mxu0 0.0
        %1414 = vmatpush1.msra.mxu0 0.0
        %1415 = vmatprep.subr.mxu0 0.0
        %1416 = vmatpush1.msra.mxu0 0.0
        %1417 = vmatprep.subr.mxu0 0.0
        %1418 = vmatpush1.msra.mxu0 0.0
        %1419 = vmatprep.subr.mxu0 0.0
        %1420 = vmatpush1.msra.mxu0 0.0
        %1421 = vmatprep.subr.mxu0 0.0
        %1422 = vmatpush1.msra.mxu0 0.0
        %1423 = vmatprep.subr.mxu0 0.0
        %1424 = vmatpush1.msra.mxu0 0.0
        %1425 = vmatprep.subr.mxu0 0.0
        %1426 = vmatpush1.msra.mxu0 0.0
        %1427 = vmatprep.subr.mxu0 0.0
        %1428 = vmatpush1.msra.mxu0 0.0
        %1429 = vmatprep.subr.mxu0 0.0
        %1430 = vmatpush1.msra.mxu0 0.0
        %1431 = vmatprep.subr.mxu0 0.0
        %1432 = vmatpush1.msra.mxu0 0.0
        %1433 = vmatprep.subr.mxu0 0.0
        %1434 = vmatpush1.msra.mxu0 0.0
        %1435 = vmatprep.subr.mxu0 0.0
        %1436 = vmatpush1.msra.mxu0 0.0
        %1437 = vmatprep.subr.mxu0 0.0
        %1438 = vmatpush1.msra.mxu0 0.0
        %1439 = vmatprep.subr.mxu0 0.0
        %1440 = vmatpush1.msra.mxu0 0.0
        %1441 = vmatprep.subr.mxu0 0.0
        %1442 = vmatpush1.msra.mxu0 0.0
        %1443 = vmatprep.subr.mxu0 0.0
        %1444 = vmatpush1.msra.mxu0 0.0
        %1445 = vmatprep.subr.mxu0 0.0
        %1446 = vmatpush1.msra.mxu0 0.0
        %1447 = vmatprep.subr.mxu0 0.0
        %1448 = vmatpush1.msra.mxu0 0.0
        %1449 = vmatprep.subr.mxu0 0.0
        %1450 = vmatpush1.msra.mxu0 0.0
        %1451 = vmatprep.subr.mxu0 0.0
        %1452 = vmatpush1.msra.mxu0 0.0
        %1453 = vmatprep.subr.mxu0 0.0
        %1454 = vmatpush1.msra.mxu0 0.0
        %1455 = vmatprep.mubr.f32.mxu0 0.0
        %1456 = vmatmul.mubr.f32.gmra.mrb[0].mxu0 %v1383
        %v1457 = vpop.f32.mrb[0].mxu0
        %v1458 = vadd.f32 0.0, %v1457
        %v1459 = vpop.f32.mrb[0].mxu0
        %1460 = vmatprep.mubr.f32.mxu0 0.0
        %1461 = vmatmul.mubr.f32.gmra.mrb[0].mxu0 %v1386
        %v1462 = vpop.f32.mrb[0].mxu0
        %v1463 = vadd.f32 0.0, %v1462
        %v1464 = vpop.f32.mrb[0].mxu0
        %1465 = vmatprep.mubr.f32.mxu0 0.0
        %1466 = vmatmul.mubr.f32.gmra.mrb[0].mxu0 %v1389
        %v1467 = vpop.f32.mrb[0].mxu0
        %v1468 = vadd.f32 0.0, %v1467
        %v1469 = vpop.f32.mrb[0].mxu0
        %1470 = vdwg.mxu0
        %1471 = vst.msk [vmem:[#allocation2] sm:$0xff] %vm514, %v1164
        %1472 = vst.msk [vmem:[#allocation2 + $0x8] sm:$0xff] %vm514, %v1169
        %1473 = vst.msk [vmem:[#allocation2 + $0x10] sm:$0xff] %vm514, %v1174
        %1474 = vst.msk [vmem:[#allocation2 + $0x18] sm:$0xff] %vm514, %v1262
        %1475 = vst.msk [vmem:[#allocation2 + $0x20] sm:$0xff] %vm514, %v1267
        %1476 = vst.msk [vmem:[#allocation2 + $0x28] sm:$0xff] %vm514, %v1272
        %1477 = vst.msk [vmem:[#allocation2 + $0x30] sm:$0xff] %vm514, %v1360
        %1478 = vst.msk [vmem:[#allocation2 + $0x38] sm:$0xff] %vm514, %v1365
        %1479 = vst.msk [vmem:[#allocation2 + $0x40] sm:$0xff] %vm514, %v1370
        %1480 = vst.msk [vmem:[#allocation2 + $0x48] sm:$0xff] %vm514, %v1458
        %1481 = vst.msk [vmem:[#allocation2 + $0x50] sm:$0xff] %vm514, %v1463
        %1482 = vst.msk [vmem:[#allocation2 + $0x58] sm:$0xff] %vm514, %v1468
        %s1483 = scalar_lea.vmem [#allocation8], 24
        %v1484 = vld [vmem:[%s1483] sm:$0xff]
        %v1485 = vld [vmem:[%s1483 + $0x8] sm:$0xff]
        %v1486 = vld [vmem:[%s1483 + $0x10] sm:$0xff]
        %1487 = vrot.lane.b32.xlu0 %v444, 120
        %v1488 = vpop.permute.xlu0 %1487
        %1489 = vrot.lane.b32.xlu0 %v449, 120
        %v1490 = vpop.permute.xlu0 %1489
        %1491 = vrot.lane.b32.xlu0 %v454, 120
        %v1492 = vpop.permute.xlu0 %1491
        %1493 = vrot.lane.b32.xlu0 %v444, 88
        %v1494 = vpop.permute.xlu0 %1493
        %1495 = vrot.lane.b32.xlu0 %v449, 88
        %v1496 = vpop.permute.xlu0 %1495
        %1497 = vrot.lane.b32.xlu0 %v454, 88
        %v1498 = vpop.permute.xlu0 %1497
        %v1499 = vsel %vm514, %v1488, 0
        %v1501 = vsel %vm514, %v1490, 0
        %v1503 = vsel %vm514, %v1492, 0
        %v1505 = vsel %vm514, %v1494, 0
        %v1507 = vsel %vm514, %v1496, 0
        %v1509 = vsel %vm514, %v1498, 0
        %1511 = vmatprep.subr.mxu0 0.0
        %1512 = vmatpush1.xpose.msra.mxu0 %v1505
        %1513 = vmatprep.subr.mxu0 0.0
        %1514 = vmatpush1.xpose.msra.mxu0 %v1507
        %1515 = vmatprep.subr.mxu0 0.0
        %1516 = vmatpush1.xpose.msra.mxu0 %v1509
        %1517 = vmatprep.subr.mxu0 0.0
        %1518 = vmatpush1.xpose.msra.mxu0 0.0
        %1519 = vmatprep.subr.mxu0 0.0
        %1520 = vmatpush1.xpose.msra.mxu0 0.0
        %1521 = vmatprep.subr.mxu0 0.0
        %1522 = vmatpush1.xpose.msra.mxu0 0.0
        %1523 = vmatprep.subr.mxu0 0.0
        %1524 = vmatpush1.xpose.msra.mxu0 0.0
        %1525 = vmatprep.subr.mxu0 0.0
        %1526 = vmatpush1.xpose.msra.mxu0 0.0
        %1527 = vmatprep.subr.mxu0 0.0
        %1528 = vmatpush1.xpose.msra.mxu0 0.0
        %1529 = vmatprep.subr.mxu0 0.0
        %1530 = vmatpush1.xpose.msra.mxu0 0.0
        %1531 = vmatprep.subr.mxu0 0.0
        %1532 = vmatpush1.xpose.msra.mxu0 0.0
        %1533 = vmatprep.subr.mxu0 0.0
        %1534 = vmatpush1.xpose.msra.mxu0 0.0
        %1535 = vmatprep.subr.mxu0 0.0
        %1536 = vmatpush1.xpose.msra.mxu0 0.0
        %1537 = vmatprep.subr.mxu0 0.0
        %1538 = vmatpush1.xpose.msra.mxu0 0.0
        %1539 = vmatprep.subr.mxu0 0.0
        %1540 = vmatpush1.xpose.msra.mxu0 0.0
        %1541 = vmatprep.subr.mxu0 0.0
        %1542 = vmatpush1.xpose.msra.mxu0 0.0
        %1543 = vmatprep.subr.mxu0 0.0
        %1544 = vmatpush1.xpose.msra.mxu0 0.0
        %1545 = vmatprep.subr.mxu0 0.0
        %1546 = vmatpush1.xpose.msra.mxu0 0.0
        %1547 = vmatprep.subr.mxu0 0.0
        %1548 = vmatpush1.xpose.msra.mxu0 0.0
        %1549 = vmatprep.subr.mxu0 0.0
        %1550 = vmatpush1.xpose.msra.mxu0 0.0
        %1551 = vmatprep.subr.mxu0 0.0
        %1552 = vmatpush1.xpose.msra.mxu0 0.0
        %1553 = vmatprep.subr.mxu0 0.0
        %1554 = vmatpush1.xpose.msra.mxu0 0.0
        %1555 = vmatprep.subr.mxu0 0.0
        %1556 = vmatpush1.xpose.msra.mxu0 0.0
        %1557 = vmatprep.subr.mxu0 0.0
        %1558 = vmatpush1.xpose.msra.mxu0 0.0
        %1559 = vmatprep.subr.mxu0 0.0
        %1560 = vmatpush1.xpose.msra.mxu0 0.0
        %1561 = vmatprep.subr.mxu0 0.0
        %1562 = vmatpush1.xpose.msra.mxu0 0.0
        %1563 = vmatprep.subr.mxu0 0.0
        %1564 = vmatpush1.xpose.msra.mxu0 0.0
        %1565 = vmatprep.subr.mxu0 0.0
        %1566 = vmatpush1.xpose.msra.mxu0 0.0
        %1567 = vmatprep.subr.mxu0 0.0
        %1568 = vmatpush1.xpose.msra.mxu0 0.0
        %1569 = vmatprep.subr.mxu0 0.0
        %1570 = vmatpush1.xpose.msra.mxu0 0.0
        %1571 = vmatprep.subr.mxu0 0.0
        %1572 = vmatpush1.xpose.msra.mxu0 0.0
        %1573 = vmatprep.subr.mxu0 0.0
        %1574 = vmatpush1.xpose.msra.mxu0 0.0
        %1575 = vmatprep.mubr.f32.mxu0 0.0
        %1576 = vmatmul.mubr.f32.gmra.mrb[0].mxu0 %v1499
        %v1577 = vpop.f32.mrb[0].mxu0
        %v1578 = vadd.f32 %v1484, %v1577
        %v1579 = vpop.f32.mrb[0].mxu0
        %1580 = vmatprep.mubr.f32.mxu0 0.0
        %1581 = vmatmul.mubr.f32.gmra.mrb[0].mxu0 %v1501
        %v1582 = vpop.f32.mrb[0].mxu0
        %v1583 = vadd.f32 %v1485, %v1582
        %v1584 = vpop.f32.mrb[0].mxu0
        %1585 = vmatprep.mubr.f32.mxu0 0.0
        %1586 = vmatmul.mubr.f32.gmra.mrb[0].mxu0 %v1503
        %v1587 = vpop.f32.mrb[0].mxu0
        %v1588 = vadd.f32 %v1486, %v1587
        %v1589 = vpop.f32.mrb[0].mxu0
        %1590 = vdwg.mxu0
        %1591 = vrot.lane.b32.xlu0 %v459, 120
        %v1592 = vpop.permute.xlu0 %1591
        %1593 = vrot.lane.b32.xlu0 %v464, 120
        %v1594 = vpop.permute.xlu0 %1593
        %1595 = vrot.lane.b32.xlu0 %v469, 120
        %v1596 = vpop.permute.xlu0 %1595
        %1597 = vrot.lane.b32.xlu0 %v459, 88
        %v1598 = vpop.permute.xlu0 %1597
        %1599 = vrot.lane.b32.xlu0 %v464, 88
        %v1600 = vpop.permute.xlu0 %1599
        %1601 = vrot.lane.b32.xlu0 %v469, 88
        %v1602 = vpop.permute.xlu0 %1601
        %v1603 = vsel %vm514, %v1592, 0
        %v1605 = vsel %vm514, %v1594, 0
        %v1607 = vsel %vm514, %v1596, 0
        %v1609 = vsel %vm514, %v1598, 0
        %v1611 = vsel %vm514, %v1600, 0
        %v1613 = vsel %vm514, %v1602, 0
        %1615 = vmatprep.subr.mxu0 0.0
        %1616 = vmatpush1.xpose.msra.mxu0 %v1609
        %1617 = vmatprep.subr.mxu0 0.0
        %1618 = vmatpush1.xpose.msra.mxu0 %v1611
        %1619 = vmatprep.subr.mxu0 0.0
        %1620 = vmatpush1.xpose.msra.mxu0 %v1613
        %1621 = vmatprep.subr.mxu0 0.0
        %1622 = vmatpush1.xpose.msra.mxu0 0.0
        %1623 = vmatprep.subr.mxu0 0.0
        %1624 = vmatpush1.xpose.msra.mxu0 0.0
        %1625 = vmatprep.subr.mxu0 0.0
        %1626 = vmatpush1.xpose.msra.mxu0 0.0
        %1627 = vmatprep.subr.mxu0 0.0
        %1628 = vmatpush1.xpose.msra.mxu0 0.0
        %1629 = vmatprep.subr.mxu0 0.0
        %1630 = vmatpush1.xpose.msra.mxu0 0.0
        %1631 = vmatprep.subr.mxu0 0.0
        %1632 = vmatpush1.xpose.msra.mxu0 0.0
        %1633 = vmatprep.subr.mxu0 0.0
        %1634 = vmatpush1.xpose.msra.mxu0 0.0
        %1635 = vmatprep.subr.mxu0 0.0
        %1636 = vmatpush1.xpose.msra.mxu0 0.0
        %1637 = vmatprep.subr.mxu0 0.0
        %1638 = vmatpush1.xpose.msra.mxu0 0.0
        %1639 = vmatprep.subr.mxu0 0.0
        %1640 = vmatpush1.xpose.msra.mxu0 0.0
        %1641 = vmatprep.subr.mxu0 0.0
        %1642 = vmatpush1.xpose.msra.mxu0 0.0
        %1643 = vmatprep.subr.mxu0 0.0
        %1644 = vmatpush1.xpose.msra.mxu0 0.0
        %1645 = vmatprep.subr.mxu0 0.0
        %1646 = vmatpush1.xpose.msra.mxu0 0.0
        %1647 = vmatprep.subr.mxu0 0.0
        %1648 = vmatpush1.xpose.msra.mxu0 0.0
        %1649 = vmatprep.subr.mxu0 0.0
        %1650 = vmatpush1.xpose.msra.mxu0 0.0
        %1651 = vmatprep.subr.mxu0 0.0
        %1652 = vmatpush1.xpose.msra.mxu0 0.0
        %1653 = vmatprep.subr.mxu0 0.0
        %1654 = vmatpush1.xpose.msra.mxu0 0.0
        %1655 = vmatprep.subr.mxu0 0.0
        %1656 = vmatpush1.xpose.msra.mxu0 0.0
        %1657 = vmatprep.subr.mxu0 0.0
        %1658 = vmatpush1.xpose.msra.mxu0 0.0
        %1659 = vmatprep.subr.mxu0 0.0
        %1660 = vmatpush1.xpose.msra.mxu0 0.0
        %1661 = vmatprep.subr.mxu0 0.0
        %1662 = vmatpush1.xpose.msra.mxu0 0.0
        %1663 = vmatprep.subr.mxu0 0.0
        %1664 = vmatpush1.xpose.msra.mxu0 0.0
        %1665 = vmatprep.subr.mxu0 0.0
        %1666 = vmatpush1.xpose.msra.mxu0 0.0
        %1667 = vmatprep.subr.mxu0 0.0
        %1668 = vmatpush1.xpose.msra.mxu0 0.0
        %1669 = vmatprep.subr.mxu0 0.0
        %1670 = vmatpush1.xpose.msra.mxu0 0.0
        %1671 = vmatprep.subr.mxu0 0.0
        %1672 = vmatpush1.xpose.msra.mxu0 0.0
        %1673 = vmatprep.subr.mxu0 0.0
        %1674 = vmatpush1.xpose.msra.mxu0 0.0
        %1675 = vmatprep.subr.mxu0 0.0
        %1676 = vmatpush1.xpose.msra.mxu0 0.0
        %1677 = vmatprep.subr.mxu0 0.0
        %1678 = vmatpush1.xpose.msra.mxu0 0.0
        %1679 = vmatprep.mubr.f32.mxu0 0.0
        %1680 = vmatmul.mubr.f32.gmra.mrb[0].mxu0 %v1603
        %v1681 = vpop.f32.mrb[0].mxu0
        %v1682 = vadd.f32 %v1484, %v1681
        %v1683 = vpop.f32.mrb[0].mxu0
        %1684 = vmatprep.mubr.f32.mxu0 0.0
        %1685 = vmatmul.mubr.f32.gmra.mrb[0].mxu0 %v1605
        %v1686 = vpop.f32.mrb[0].mxu0
        %v1687 = vadd.f32 %v1485, %v1686
        %v1688 = vpop.f32.mrb[0].mxu0
        %1689 = vmatprep.mubr.f32.mxu0 0.0
        %1690 = vmatmul.mubr.f32.gmra.mrb[0].mxu0 %v1607
        %v1691 = vpop.f32.mrb[0].mxu0
        %v1692 = vadd.f32 %v1486, %v1691
        %v1693 = vpop.f32.mrb[0].mxu0
        %1694 = vdwg.mxu0
        %1695 = vrot.lane.b32.xlu0 %v474, 120
        %v1696 = vpop.permute.xlu0 %1695
        %1697 = vrot.lane.b32.xlu0 %v479, 120
        %v1698 = vpop.permute.xlu0 %1697
        %1699 = vrot.lane.b32.xlu0 %v484, 120
        %v1700 = vpop.permute.xlu0 %1699
        %1701 = vrot.lane.b32.xlu0 %v474, 88
        %v1702 = vpop.permute.xlu0 %1701
        %1703 = vrot.lane.b32.xlu0 %v479, 88
        %v1704 = vpop.permute.xlu0 %1703
        %1705 = vrot.lane.b32.xlu0 %v484, 88
        %v1706 = vpop.permute.xlu0 %1705
        %v1707 = vsel %vm514, %v1696, 0
        %v1709 = vsel %vm514, %v1698, 0
        %v1711 = vsel %vm514, %v1700, 0
        %v1713 = vsel %vm514, %v1702, 0
        %v1715 = vsel %vm514, %v1704, 0
        %v1717 = vsel %vm514, %v1706, 0
        %1719 = vmatprep.subr.mxu0 0.0
        %1720 = vmatpush1.xpose.msra.mxu0 %v1713
        %1721 = vmatprep.subr.mxu0 0.0
        %1722 = vmatpush1.xpose.msra.mxu0 %v1715
        %1723 = vmatprep.subr.mxu0 0.0
        %1724 = vmatpush1.xpose.msra.mxu0 %v1717
        %1725 = vmatprep.subr.mxu0 0.0
        %1726 = vmatpush1.xpose.msra.mxu0 0.0
        %1727 = vmatprep.subr.mxu0 0.0
        %1728 = vmatpush1.xpose.msra.mxu0 0.0
        %1729 = vmatprep.subr.mxu0 0.0
        %1730 = vmatpush1.xpose.msra.mxu0 0.0
        %1731 = vmatprep.subr.mxu0 0.0
        %1732 = vmatpush1.xpose.msra.mxu0 0.0
        %1733 = vmatprep.subr.mxu0 0.0
        %1734 = vmatpush1.xpose.msra.mxu0 0.0
        %1735 = vmatprep.subr.mxu0 0.0
        %1736 = vmatpush1.xpose.msra.mxu0 0.0
        %1737 = vmatprep.subr.mxu0 0.0
        %1738 = vmatpush1.xpose.msra.mxu0 0.0
        %1739 = vmatprep.subr.mxu0 0.0
        %1740 = vmatpush1.xpose.msra.mxu0 0.0
        %1741 = vmatprep.subr.mxu0 0.0
        %1742 = vmatpush1.xpose.msra.mxu0 0.0
        %1743 = vmatprep.subr.mxu0 0.0
        %1744 = vmatpush1.xpose.msra.mxu0 0.0
        %1745 = vmatprep.subr.mxu0 0.0
        %1746 = vmatpush1.xpose.msra.mxu0 0.0
        %1747 = vmatprep.subr.mxu0 0.0
        %1748 = vmatpush1.xpose.msra.mxu0 0.0
        %1749 = vmatprep.subr.mxu0 0.0
        %1750 = vmatpush1.xpose.msra.mxu0 0.0
        %1751 = vmatprep.subr.mxu0 0.0
        %1752 = vmatpush1.xpose.msra.mxu0 0.0
        %1753 = vmatprep.subr.mxu0 0.0
        %1754 = vmatpush1.xpose.msra.mxu0 0.0
        %1755 = vmatprep.subr.mxu0 0.0
        %1756 = vmatpush1.xpose.msra.mxu0 0.0
        %1757 = vmatprep.subr.mxu0 0.0
        %1758 = vmatpush1.xpose.msra.mxu0 0.0
        %1759 = vmatprep.subr.mxu0 0.0
        %1760 = vmatpush1.xpose.msra.mxu0 0.0
        %1761 = vmatprep.subr.mxu0 0.0
        %1762 = vmatpush1.xpose.msra.mxu0 0.0
        %1763 = vmatprep.subr.mxu0 0.0
        %1764 = vmatpush1.xpose.msra.mxu0 0.0
        %1765 = vmatprep.subr.mxu0 0.0
        %1766 = vmatpush1.xpose.msra.mxu0 0.0
        %1767 = vmatprep.subr.mxu0 0.0
        %1768 = vmatpush1.xpose.msra.mxu0 0.0
        %1769 = vmatprep.subr.mxu0 0.0
        %1770 = vmatpush1.xpose.msra.mxu0 0.0
        %1771 = vmatprep.subr.mxu0 0.0
        %1772 = vmatpush1.xpose.msra.mxu0 0.0
        %1773 = vmatprep.subr.mxu0 0.0
        %1774 = vmatpush1.xpose.msra.mxu0 0.0
        %1775 = vmatprep.subr.mxu0 0.0
        %1776 = vmatpush1.xpose.msra.mxu0 0.0
        %1777 = vmatprep.subr.mxu0 0.0
        %1778 = vmatpush1.xpose.msra.mxu0 0.0
        %1779 = vmatprep.subr.mxu0 0.0
        %1780 = vmatpush1.xpose.msra.mxu0 0.0
        %1781 = vmatprep.subr.mxu0 0.0
        %1782 = vmatpush1.xpose.msra.mxu0 0.0
        %1783 = vmatprep.mubr.f32.mxu0 0.0
        %1784 = vmatmul.mubr.f32.gmra.mrb[0].mxu0 %v1707
        %v1785 = vpop.f32.mrb[0].mxu0
        %v1786 = vadd.f32 %v1484, %v1785
        %v1787 = vpop.f32.mrb[0].mxu0
        %1788 = vmatprep.mubr.f32.mxu0 0.0
        %1789 = vmatmul.mubr.f32.gmra.mrb[0].mxu0 %v1709
        %v1790 = vpop.f32.mrb[0].mxu0
        %v1791 = vadd.f32 %v1485, %v1790
        %v1792 = vpop.f32.mrb[0].mxu0
        %1793 = vmatprep.mubr.f32.mxu0 0.0
        %1794 = vmatmul.mubr.f32.gmra.mrb[0].mxu0 %v1711
        %v1795 = vpop.f32.mrb[0].mxu0
        %v1796 = vadd.f32 %v1486, %v1795
        %v1797 = vpop.f32.mrb[0].mxu0
        %1798 = vdwg.mxu0
        %1799 = vrot.lane.b32.xlu0 %v489, 120
        %v1800 = vpop.permute.xlu0 %1799
        %1801 = vrot.lane.b32.xlu0 %v494, 120
        %v1802 = vpop.permute.xlu0 %1801
        %1803 = vrot.lane.b32.xlu0 %v499, 120
        %v1804 = vpop.permute.xlu0 %1803
        %1805 = vrot.lane.b32.xlu0 %v489, 88
        %v1806 = vpop.permute.xlu0 %1805
        %1807 = vrot.lane.b32.xlu0 %v494, 88
        %v1808 = vpop.permute.xlu0 %1807
        %1809 = vrot.lane.b32.xlu0 %v499, 88
        %v1810 = vpop.permute.xlu0 %1809
        %v1811 = vsel %vm514, %v1800, 0
        %v1813 = vsel %vm514, %v1802, 0
        %v1815 = vsel %vm514, %v1804, 0
        %v1817 = vsel %vm514, %v1806, 0
        %v1819 = vsel %vm514, %v1808, 0
        %v1821 = vsel %vm514, %v1810, 0
        %1823 = vmatprep.subr.mxu0 0.0
        %1824 = vmatpush1.xpose.msra.mxu0 %v1817
        %1825 = vmatprep.subr.mxu0 0.0
        %1826 = vmatpush1.xpose.msra.mxu0 %v1819
        %1827 = vmatprep.subr.mxu0 0.0
        %1828 = vmatpush1.xpose.msra.mxu0 %v1821
        %1829 = vmatprep.subr.mxu0 0.0
        %1830 = vmatpush1.xpose.msra.mxu0 0.0
        %1831 = vmatprep.subr.mxu0 0.0
        %1832 = vmatpush1.xpose.msra.mxu0 0.0
        %1833 = vmatprep.subr.mxu0 0.0
        %1834 = vmatpush1.xpose.msra.mxu0 0.0
        %1835 = vmatprep.subr.mxu0 0.0
        %1836 = vmatpush1.xpose.msra.mxu0 0.0
        %1837 = vmatprep.subr.mxu0 0.0
        %1838 = vmatpush1.xpose.msra.mxu0 0.0
        %1839 = vmatprep.subr.mxu0 0.0
        %1840 = vmatpush1.xpose.msra.mxu0 0.0
        %1841 = vmatprep.subr.mxu0 0.0
        %1842 = vmatpush1.xpose.msra.mxu0 0.0
        %1843 = vmatprep.subr.mxu0 0.0
        %1844 = vmatpush1.xpose.msra.mxu0 0.0
        %1845 = vmatprep.subr.mxu0 0.0
        %1846 = vmatpush1.xpose.msra.mxu0 0.0
        %1847 = vmatprep.subr.mxu0 0.0
        %1848 = vmatpush1.xpose.msra.mxu0 0.0
        %1849 = vmatprep.subr.mxu0 0.0
        %1850 = vmatpush1.xpose.msra.mxu0 0.0
        %1851 = vmatprep.subr.mxu0 0.0
        %1852 = vmatpush1.xpose.msra.mxu0 0.0
        %1853 = vmatprep.subr.mxu0 0.0
        %1854 = vmatpush1.xpose.msra.mxu0 0.0
        %1855 = vmatprep.subr.mxu0 0.0
        %1856 = vmatpush1.xpose.msra.mxu0 0.0
        %1857 = vmatprep.subr.mxu0 0.0
        %1858 = vmatpush1.xpose.msra.mxu0 0.0
        %1859 = vmatprep.subr.mxu0 0.0
        %1860 = vmatpush1.xpose.msra.mxu0 0.0
        %1861 = vmatprep.subr.mxu0 0.0
        %1862 = vmatpush1.xpose.msra.mxu0 0.0
        %1863 = vmatprep.subr.mxu0 0.0
        %1864 = vmatpush1.xpose.msra.mxu0 0.0
        %1865 = vmatprep.subr.mxu0 0.0
        %1866 = vmatpush1.xpose.msra.mxu0 0.0
        %1867 = vmatprep.subr.mxu0 0.0
        %1868 = vmatpush1.xpose.msra.mxu0 0.0
        %1869 = vmatprep.subr.mxu0 0.0
        %1870 = vmatpush1.xpose.msra.mxu0 0.0
        %1871 = vmatprep.subr.mxu0 0.0
        %1872 = vmatpush1.xpose.msra.mxu0 0.0
        %1873 = vmatprep.subr.mxu0 0.0
        %1874 = vmatpush1.xpose.msra.mxu0 0.0
        %1875 = vmatprep.subr.mxu0 0.0
        %1876 = vmatpush1.xpose.msra.mxu0 0.0
        %1877 = vmatprep.subr.mxu0 0.0
        %1878 = vmatpush1.xpose.msra.mxu0 0.0
        %1879 = vmatprep.subr.mxu0 0.0
        %1880 = vmatpush1.xpose.msra.mxu0 0.0
        %1881 = vmatprep.subr.mxu0 0.0
        %1882 = vmatpush1.xpose.msra.mxu0 0.0
        %1883 = vmatprep.subr.mxu0 0.0
        %1884 = vmatpush1.xpose.msra.mxu0 0.0
        %1885 = vmatprep.subr.mxu0 0.0
        %1886 = vmatpush1.xpose.msra.mxu0 0.0
        %1887 = vmatprep.mubr.f32.mxu0 0.0
        %1888 = vmatmul.mubr.f32.gmra.mrb[0].mxu0 %v1811
        %v1889 = vpop.f32.mrb[0].mxu0
        %v1890 = vadd.f32 %v1484, %v1889
        %v1891 = vpop.f32.mrb[0].mxu0
        %1892 = vmatprep.mubr.f32.mxu0 0.0
        %1893 = vmatmul.mubr.f32.gmra.mrb[0].mxu0 %v1813
        %v1894 = vpop.f32.mrb[0].mxu0
        %v1895 = vadd.f32 %v1485, %v1894
        %v1896 = vpop.f32.mrb[0].mxu0
        %1897 = vmatprep.mubr.f32.mxu0 0.0
        %1898 = vmatmul.mubr.f32.gmra.mrb[0].mxu0 %v1815
        %v1899 = vpop.f32.mrb[0].mxu0
        %v1900 = vadd.f32 %v1486, %v1899
        %v1901 = vpop.f32.mrb[0].mxu0
        %1902 = vdwg.mxu0
        %v1903 = vsel %vm910, %v1578, -inf
        %1904 = vmax.xlane.f32.xlu0 %v1903
        %v1905 = vpop.xlane.xlu0 %1904
        %v1906 = vsel %vm910, %v1583, -inf
        %1907 = vmax.xlane.f32.xlu0 %v1906
        %v1908 = vpop.xlane.xlu0 %1907
        %v1909 = vsel %vm910, %v1588, -inf
        %1910 = vmax.xlane.f32.xlu0 %v1909
        %v1911 = vpop.xlane.xlu0 %1910
        %v1912 = vsel %vm910, %v1682, -inf
        %1913 = vmax.xlane.f32.xlu0 %v1912
        %v1914 = vpop.xlane.xlu0 %1913
        %v1915 = vsel %vm910, %v1687, -inf
        %1916 = vmax.xlane.f32.xlu0 %v1915
        %v1917 = vpop.xlane.xlu0 %1916
        %v1918 = vsel %vm910, %v1692, -inf
        %1919 = vmax.xlane.f32.xlu0 %v1918
        %v1920 = vpop.xlane.xlu0 %1919
        %v1921 = vsel %vm910, %v1786, -inf
        %1922 = vmax.xlane.f32.xlu0 %v1921
        %v1923 = vpop.xlane.xlu0 %1922
        %v1924 = vsel %vm910, %v1791, -inf
        %1925 = vmax.xlane.f32.xlu0 %v1924
        %v1926 = vpop.xlane.xlu0 %1925
        %v1927 = vsel %vm910, %v1796, -inf
        %1928 = vmax.xlane.f32.xlu0 %v1927
        %v1929 = vpop.xlane.xlu0 %1928
        %v1930 = vsel %vm910, %v1890, -inf
        %1931 = vmax.xlane.f32.xlu0 %v1930
        %v1932 = vpop.xlane.xlu0 %1931
        %v1933 = vsel %vm910, %v1895, -inf
        %1934 = vmax.xlane.f32.xlu0 %v1933
        %v1935 = vpop.xlane.xlu0 %1934
        %v1936 = vsel %vm910, %v1900, -inf
        %1937 = vmax.xlane.f32.xlu0 %v1936
        %v1938 = vpop.xlane.xlu0 %1937
        %v1939 = vsub.f32 %v1578, %v1905
        %v1940 = vsub.f32 %v1583, %v1908
        %v1941 = vsub.f32 %v1588, %v1911
        %v1942 = vsub.f32 %v1682, %v1914
        %v1943 = vsub.f32 %v1687, %v1917
        %v1944 = vsub.f32 %v1692, %v1920
        %v1945 = vsub.f32 %v1786, %v1923
        %v1946 = vsub.f32 %v1791, %v1926
        %v1947 = vsub.f32 %v1796, %v1929
        %v1948 = vsub.f32 %v1890, %v1932
        %v1949 = vsub.f32 %v1895, %v1935
        %v1950 = vsub.f32 %v1900, %v1938
        %v1951 = vmul.f32 %v1939, 1.442695
        %v1952 = vpow.pop %v1951
        %v1953 = vmul.f32 %v1940, 1.442695
        %v1954 = vpow.pop %v1953
        %v1955 = vmul.f32 %v1941, 1.442695
        %v1956 = vpow.pop %v1955
        %v1957 = vmul.f32 %v1942, 1.442695
        %v1958 = vpow.pop %v1957
        %v1959 = vmul.f32 %v1943, 1.442695
        %v1960 = vpow.pop %v1959
        %v1961 = vmul.f32 %v1944, 1.442695
        %v1962 = vpow.pop %v1961
        %v1963 = vmul.f32 %v1945, 1.442695
        %v1964 = vpow.pop %v1963
        %v1965 = vmul.f32 %v1946, 1.442695
        %v1966 = vpow.pop %v1965
        %v1967 = vmul.f32 %v1947, 1.442695
        %v1968 = vpow.pop %v1967
        %v1969 = vmul.f32 %v1948, 1.442695
        %v1970 = vpow.pop %v1969
        %v1971 = vmul.f32 %v1949, 1.442695
        %v1972 = vpow.pop %v1971
        %v1973 = vmul.f32 %v1950, 1.442695
        %v1974 = vpow.pop %v1973
        %v1975 = vsel %vm910, %v1952, 0.0
        %1976 = vadd.xlane.f32.xlu0 %v1975
        %v1977 = vpop.xlane.xlu0 %1976
        %v1978 = vsel %vm910, %v1954, 0.0
        %1979 = vadd.xlane.f32.xlu0 %v1978
        %v1980 = vpop.xlane.xlu0 %1979
        %v1981 = vsel %vm910, %v1956, 0.0
        %1982 = vadd.xlane.f32.xlu0 %v1981
        %v1983 = vpop.xlane.xlu0 %1982
        %v1984 = vsel %vm910, %v1958, 0.0
        %1985 = vadd.xlane.f32.xlu0 %v1984
        %v1986 = vpop.xlane.xlu0 %1985
        %v1987 = vsel %vm910, %v1960, 0.0
        %1988 = vadd.xlane.f32.xlu0 %v1987
        %v1989 = vpop.xlane.xlu0 %1988
        %v1990 = vsel %vm910, %v1962, 0.0
        %1991 = vadd.xlane.f32.xlu0 %v1990
        %v1992 = vpop.xlane.xlu0 %1991
        %v1993 = vsel %vm910, %v1964, 0.0
        %1994 = vadd.xlane.f32.xlu0 %v1993
        %v1995 = vpop.xlane.xlu0 %1994
        %v1996 = vsel %vm910, %v1966, 0.0
        %1997 = vadd.xlane.f32.xlu0 %v1996
        %v1998 = vpop.xlane.xlu0 %1997
        %v1999 = vsel %vm910, %v1968, 0.0
        %2000 = vadd.xlane.f32.xlu0 %v1999
        %v2001 = vpop.xlane.xlu0 %2000
        %v2002 = vsel %vm910, %v1970, 0.0
        %2003 = vadd.xlane.f32.xlu0 %v2002
        %v2004 = vpop.xlane.xlu0 %2003
        %v2005 = vsel %vm910, %v1972, 0.0
        %2006 = vadd.xlane.f32.xlu0 %v2005
        %v2007 = vpop.xlane.xlu0 %2006
        %v2008 = vsel %vm910, %v1974, 0.0
        %2009 = vadd.xlane.f32.xlu0 %v2008
        %v2010 = vpop.xlane.xlu0 %2009
        %v2011 = vrcp.pop %v1977
        %v2012 = vrcp.pop %v1980
        %v2013 = vrcp.pop %v1983
        %v2014 = vrcp.pop %v1986
        %v2015 = vrcp.pop %v1989
        %v2016 = vrcp.pop %v1992
        %v2017 = vrcp.pop %v1995
        %v2018 = vrcp.pop %v1998
        %v2019 = vrcp.pop %v2001
        %v2020 = vrcp.pop %v2004
        %v2021 = vrcp.pop %v2007
        %v2022 = vrcp.pop %v2010
        %v2023 = vmul.f32 %v1977, %v2011
        %v2024 = vmul.f32 %v1980, %v2012
        %v2025 = vmul.f32 %v1983, %v2013
        %v2026 = vmul.f32 %v1986, %v2014
        %v2027 = vmul.f32 %v1989, %v2015
        %v2028 = vmul.f32 %v1992, %v2016
        %v2029 = vmul.f32 %v1995, %v2017
        %v2030 = vmul.f32 %v1998, %v2018
        %v2031 = vmul.f32 %v2001, %v2019
        %v2032 = vmul.f32 %v2004, %v2020
        %v2033 = vmul.f32 %v2007, %v2021
        %v2034 = vmul.f32 %v2010, %v2022
        %v2035 = vsub.f32 2.0, %v2023
        %v2036 = vsub.f32 2.0, %v2024
        %v2037 = vsub.f32 2.0, %v2025
        %v2038 = vsub.f32 2.0, %v2026
        %v2039 = vsub.f32 2.0, %v2027
        %v2040 = vsub.f32 2.0, %v2028
        %v2041 = vsub.f32 2.0, %v2029
        %v2042 = vsub.f32 2.0, %v2030
        %v2043 = vsub.f32 2.0, %v2031
        %v2044 = vsub.f32 2.0, %v2032
        %v2045 = vsub.f32 2.0, %v2033
        %v2046 = vsub.f32 2.0, %v2034
        %v2047 = vmul.f32 %v2011, %v2035
        %v2048 = vmul.f32 %v2012, %v2036
        %v2049 = vmul.f32 %v2013, %v2037
        %v2050 = vmul.f32 %v2014, %v2038
        %v2051 = vmul.f32 %v2015, %v2039
        %v2052 = vmul.f32 %v2016, %v2040
        %v2053 = vmul.f32 %v2017, %v2041
        %v2054 = vmul.f32 %v2018, %v2042
        %v2055 = vmul.f32 %v2019, %v2043
        %v2056 = vmul.f32 %v2020, %v2044
        %v2057 = vmul.f32 %v2021, %v2045
        %v2058 = vmul.f32 %v2022, %v2046
        %v2059 = vmul.f32 %v1952, %v2047
        %v2060 = vmul.f32 %v1954, %v2048
        %v2061 = vmul.f32 %v1956, %v2049
        %v2062 = vmul.f32 %v1958, %v2050
        %v2063 = vmul.f32 %v1960, %v2051
        %v2064 = vmul.f32 %v1962, %v2052
        %v2065 = vmul.f32 %v1964, %v2053
        %v2066 = vmul.f32 %v1966, %v2054
        %v2067 = vmul.f32 %v1968, %v2055
        %v2068 = vmul.f32 %v1970, %v2056
        %v2069 = vmul.f32 %v1972, %v2057
        %v2070 = vmul.f32 %v1974, %v2058
        %2071 = vrot.lane.b32.xlu0 %v444, 56
        %v2072 = vpop.permute.xlu0 %2071
        %2073 = vrot.lane.b32.xlu0 %v449, 56
        %v2074 = vpop.permute.xlu0 %2073
        %2075 = vrot.lane.b32.xlu0 %v454, 56
        %v2076 = vpop.permute.xlu0 %2075
        %v2081 = vsel %vm910, %v2059, 0
        %v2084 = vsel %vm910, %v2060, 0
        %v2087 = vsel %vm910, %v2061, 0
        %2089 = vmatprep.subr.mxu0 0.0
        %2090 = vmatpush1.msra.mxu0 %v2072
        %2091 = vmatprep.subr.mxu0 0.0
        %2092 = vmatpush1.msra.mxu0 %v2074
        %2093 = vmatprep.subr.mxu0 0.0
        %2094 = vmatpush1.msra.mxu0 %v2076
        %2095 = vmatprep.subr.mxu0 0.0
        %2096 = vmatpush1.msra.mxu0 0.0
        %2097 = vmatprep.subr.mxu0 0.0
        %2098 = vmatpush1.msra.mxu0 0.0
        %2099 = vmatprep.subr.mxu0 0.0
        %2100 = vmatpush1.msra.mxu0 0.0
        %2101 = vmatprep.subr.mxu0 0.0
        %2102 = vmatpush1.msra.mxu0 0.0
        %2103 = vmatprep.subr.mxu0 0.0
        %2104 = vmatpush1.msra.mxu0 0.0
        %2105 = vmatprep.subr.mxu0 0.0
        %2106 = vmatpush1.msra.mxu0 0.0
        %2107 = vmatprep.subr.mxu0 0.0
        %2108 = vmatpush1.msra.mxu0 0.0
        %2109 = vmatprep.subr.mxu0 0.0
        %2110 = vmatpush1.msra.mxu0 0.0
        %2111 = vmatprep.subr.mxu0 0.0
        %2112 = vmatpush1.msra.mxu0 0.0
        %2113 = vmatprep.subr.mxu0 0.0
        %2114 = vmatpush1.msra.mxu0 0.0
        %2115 = vmatprep.subr.mxu0 0.0
        %2116 = vmatpush1.msra.mxu0 0.0
        %2117 = vmatprep.subr.mxu0 0.0
        %2118 = vmatpush1.msra.mxu0 0.0
        %2119 = vmatprep.subr.mxu0 0.0
        %2120 = vmatpush1.msra.mxu0 0.0
        %2121 = vmatprep.subr.mxu0 0.0
        %2122 = vmatpush1.msra.mxu0 0.0
        %2123 = vmatprep.subr.mxu0 0.0
        %2124 = vmatpush1.msra.mxu0 0.0
        %2125 = vmatprep.subr.mxu0 0.0
        %2126 = vmatpush1.msra.mxu0 0.0
        %2127 = vmatprep.subr.mxu0 0.0
        %2128 = vmatpush1.msra.mxu0 0.0
        %2129 = vmatprep.subr.mxu0 0.0
        %2130 = vmatpush1.msra.mxu0 0.0
        %2131 = vmatprep.subr.mxu0 0.0
        %2132 = vmatpush1.msra.mxu0 0.0
        %2133 = vmatprep.subr.mxu0 0.0
        %2134 = vmatpush1.msra.mxu0 0.0
        %2135 = vmatprep.subr.mxu0 0.0
        %2136 = vmatpush1.msra.mxu0 0.0
        %2137 = vmatprep.subr.mxu0 0.0
        %2138 = vmatpush1.msra.mxu0 0.0
        %2139 = vmatprep.subr.mxu0 0.0
        %2140 = vmatpush1.msra.mxu0 0.0
        %2141 = vmatprep.subr.mxu0 0.0
        %2142 = vmatpush1.msra.mxu0 0.0
        %2143 = vmatprep.subr.mxu0 0.0
        %2144 = vmatpush1.msra.mxu0 0.0
        %2145 = vmatprep.subr.mxu0 0.0
        %2146 = vmatpush1.msra.mxu0 0.0
        %2147 = vmatprep.subr.mxu0 0.0
        %2148 = vmatpush1.msra.mxu0 0.0
        %2149 = vmatprep.subr.mxu0 0.0
        %2150 = vmatpush1.msra.mxu0 0.0
        %2151 = vmatprep.subr.mxu0 0.0
        %2152 = vmatpush1.msra.mxu0 0.0
        %2153 = vmatprep.mubr.f32.mxu0 0.0
        %2154 = vmatmul.mubr.f32.gmra.mrb[0].mxu0 %v2081
        %v2155 = vpop.f32.mrb[0].mxu0
        %v2156 = vadd.f32 0.0, %v2155
        %v2157 = vpop.f32.mrb[0].mxu0
        %2158 = vmatprep.mubr.f32.mxu0 0.0
        %2159 = vmatmul.mubr.f32.gmra.mrb[0].mxu0 %v2084
        %v2160 = vpop.f32.mrb[0].mxu0
        %v2161 = vadd.f32 0.0, %v2160
        %v2162 = vpop.f32.mrb[0].mxu0
        %2163 = vmatprep.mubr.f32.mxu0 0.0
        %2164 = vmatmul.mubr.f32.gmra.mrb[0].mxu0 %v2087
        %v2165 = vpop.f32.mrb[0].mxu0
        %v2166 = vadd.f32 0.0, %v2165
        %v2167 = vpop.f32.mrb[0].mxu0
        %2168 = vdwg.mxu0
        %2169 = vrot.lane.b32.xlu0 %v459, 56
        %v2170 = vpop.permute.xlu0 %2169
        %2171 = vrot.lane.b32.xlu0 %v464, 56
        %v2172 = vpop.permute.xlu0 %2171
        %2173 = vrot.lane.b32.xlu0 %v469, 56
        %v2174 = vpop.permute.xlu0 %2173
        %v2179 = vsel %vm910, %v2062, 0
        %v2182 = vsel %vm910, %v2063, 0
        %v2185 = vsel %vm910, %v2064, 0
        %2187 = vmatprep.subr.mxu0 0.0
        %2188 = vmatpush1.msra.mxu0 %v2170
        %2189 = vmatprep.subr.mxu0 0.0
        %2190 = vmatpush1.msra.mxu0 %v2172
        %2191 = vmatprep.subr.mxu0 0.0
        %2192 = vmatpush1.msra.mxu0 %v2174
        %2193 = vmatprep.subr.mxu0 0.0
        %2194 = vmatpush1.msra.mxu0 0.0
        %2195 = vmatprep.subr.mxu0 0.0
        %2196 = vmatpush1.msra.mxu0 0.0
        %2197 = vmatprep.subr.mxu0 0.0
        %2198 = vmatpush1.msra.mxu0 0.0
        %2199 = vmatprep.subr.mxu0 0.0
        %2200 = vmatpush1.msra.mxu0 0.0
        %2201 = vmatprep.subr.mxu0 0.0
        %2202 = vmatpush1.msra.mxu0 0.0
        %2203 = vmatprep.subr.mxu0 0.0
        %2204 = vmatpush1.msra.mxu0 0.0
        %2205 = vmatprep.subr.mxu0 0.0
        %2206 = vmatpush1.msra.mxu0 0.0
        %2207 = vmatprep.subr.mxu0 0.0
        %2208 = vmatpush1.msra.mxu0 0.0
        %2209 = vmatprep.subr.mxu0 0.0
        %2210 = vmatpush1.msra.mxu0 0.0
        %2211 = vmatprep.subr.mxu0 0.0
        %2212 = vmatpush1.msra.mxu0 0.0
        %2213 = vmatprep.subr.mxu0 0.0
        %2214 = vmatpush1.msra.mxu0 0.0
        %2215 = vmatprep.subr.mxu0 0.0
        %2216 = vmatpush1.msra.mxu0 0.0
        %2217 = vmatprep.subr.mxu0 0.0
        %2218 = vmatpush1.msra.mxu0 0.0
        %2219 = vmatprep.subr.mxu0 0.0
        %2220 = vmatpush1.msra.mxu0 0.0
        %2221 = vmatprep.subr.mxu0 0.0
        %2222 = vmatpush1.msra.mxu0 0.0
        %2223 = vmatprep.subr.mxu0 0.0
        %2224 = vmatpush1.msra.mxu0 0.0
        %2225 = vmatprep.subr.mxu0 0.0
        %2226 = vmatpush1.msra.mxu0 0.0
        %2227 = vmatprep.subr.mxu0 0.0
        %2228 = vmatpush1.msra.mxu0 0.0
        %2229 = vmatprep.subr.mxu0 0.0
        %2230 = vmatpush1.msra.mxu0 0.0
        %2231 = vmatprep.subr.mxu0 0.0
        %2232 = vmatpush1.msra.mxu0 0.0
        %2233 = vmatprep.subr.mxu0 0.0
        %2234 = vmatpush1.msra.mxu0 0.0
        %2235 = vmatprep.subr.mxu0 0.0
        %2236 = vmatpush1.msra.mxu0 0.0
        %2237 = vmatprep.subr.mxu0 0.0
        %2238 = vmatpush1.msra.mxu0 0.0
        %2239 = vmatprep.subr.mxu0 0.0
        %2240 = vmatpush1.msra.mxu0 0.0
        %2241 = vmatprep.subr.mxu0 0.0
        %2242 = vmatpush1.msra.mxu0 0.0
        %2243 = vmatprep.subr.mxu0 0.0
        %2244 = vmatpush1.msra.mxu0 0.0
        %2245 = vmatprep.subr.mxu0 0.0
        %2246 = vmatpush1.msra.mxu0 0.0
        %2247 = vmatprep.subr.mxu0 0.0
        %2248 = vmatpush1.msra.mxu0 0.0
        %2249 = vmatprep.subr.mxu0 0.0
        %2250 = vmatpush1.msra.mxu0 0.0
        %2251 = vmatprep.mubr.f32.mxu0 0.0
        %2252 = vmatmul.mubr.f32.gmra.mrb[0].mxu0 %v2179
        %v2253 = vpop.f32.mrb[0].mxu0
        %v2254 = vadd.f32 0.0, %v2253
        %v2255 = vpop.f32.mrb[0].mxu0
        %2256 = vmatprep.mubr.f32.mxu0 0.0
        %2257 = vmatmul.mubr.f32.gmra.mrb[0].mxu0 %v2182
        %v2258 = vpop.f32.mrb[0].mxu0
        %v2259 = vadd.f32 0.0, %v2258
        %v2260 = vpop.f32.mrb[0].mxu0
        %2261 = vmatprep.mubr.f32.mxu0 0.0
        %2262 = vmatmul.mubr.f32.gmra.mrb[0].mxu0 %v2185
        %v2263 = vpop.f32.mrb[0].mxu0
        %v2264 = vadd.f32 0.0, %v2263
        %v2265 = vpop.f32.mrb[0].mxu0
        %2266 = vdwg.mxu0
        %2267 = vrot.lane.b32.xlu0 %v474, 56
        %v2268 = vpop.permute.xlu0 %2267
        %2269 = vrot.lane.b32.xlu0 %v479, 56
        %v2270 = vpop.permute.xlu0 %2269
        %2271 = vrot.lane.b32.xlu0 %v484, 56
        %v2272 = vpop.permute.xlu0 %2271
        %v2277 = vsel %vm910, %v2065, 0
        %v2280 = vsel %vm910, %v2066, 0
        %v2283 = vsel %vm910, %v2067, 0
        %2285 = vmatprep.subr.mxu0 0.0
        %2286 = vmatpush1.msra.mxu0 %v2268
        %2287 = vmatprep.subr.mxu0 0.0
        %2288 = vmatpush1.msra.mxu0 %v2270
        %2289 = vmatprep.subr.mxu0 0.0
        %2290 = vmatpush1.msra.mxu0 %v2272
        %2291 = vmatprep.subr.mxu0 0.0
        %2292 = vmatpush1.msra.mxu0 0.0
        %2293 = vmatprep.subr.mxu0 0.0
        %2294 = vmatpush1.msra.mxu0 0.0
        %2295 = vmatprep.subr.mxu0 0.0
        %2296 = vmatpush1.msra.mxu0 0.0
        %2297 = vmatprep.subr.mxu0 0.0
        %2298 = vmatpush1.msra.mxu0 0.0
        %2299 = vmatprep.subr.mxu0 0.0
        %2300 = vmatpush1.msra.mxu0 0.0
        %2301 = vmatprep.subr.mxu0 0.0
        %2302 = vmatpush1.msra.mxu0 0.0
        %2303 = vmatprep.subr.mxu0 0.0
        %2304 = vmatpush1.msra.mxu0 0.0
        %2305 = vmatprep.subr.mxu0 0.0
        %2306 = vmatpush1.msra.mxu0 0.0
        %2307 = vmatprep.subr.mxu0 0.0
        %2308 = vmatpush1.msra.mxu0 0.0
        %2309 = vmatprep.subr.mxu0 0.0
        %2310 = vmatpush1.msra.mxu0 0.0
        %2311 = vmatprep.subr.mxu0 0.0
        %2312 = vmatpush1.msra.mxu0 0.0
        %2313 = vmatprep.subr.mxu0 0.0
        %2314 = vmatpush1.msra.mxu0 0.0
        %2315 = vmatprep.subr.mxu0 0.0
        %2316 = vmatpush1.msra.mxu0 0.0
        %2317 = vmatprep.subr.mxu0 0.0
        %2318 = vmatpush1.msra.mxu0 0.0
        %2319 = vmatprep.subr.mxu0 0.0
        %2320 = vmatpush1.msra.mxu0 0.0
        %2321 = vmatprep.subr.mxu0 0.0
        %2322 = vmatpush1.msra.mxu0 0.0
        %2323 = vmatprep.subr.mxu0 0.0
        %2324 = vmatpush1.msra.mxu0 0.0
        %2325 = vmatprep.subr.mxu0 0.0
        %2326 = vmatpush1.msra.mxu0 0.0
        %2327 = vmatprep.subr.mxu0 0.0
        %2328 = vmatpush1.msra.mxu0 0.0
        %2329 = vmatprep.subr.mxu0 0.0
        %2330 = vmatpush1.msra.mxu0 0.0
        %2331 = vmatprep.subr.mxu0 0.0
        %2332 = vmatpush1.msra.mxu0 0.0
        %2333 = vmatprep.subr.mxu0 0.0
        %2334 = vmatpush1.msra.mxu0 0.0
        %2335 = vmatprep.subr.mxu0 0.0
        %2336 = vmatpush1.msra.mxu0 0.0
        %2337 = vmatprep.subr.mxu0 0.0
        %2338 = vmatpush1.msra.mxu0 0.0
        %2339 = vmatprep.subr.mxu0 0.0
        %2340 = vmatpush1.msra.mxu0 0.0
        %2341 = vmatprep.subr.mxu0 0.0
        %2342 = vmatpush1.msra.mxu0 0.0
        %2343 = vmatprep.subr.mxu0 0.0
        %2344 = vmatpush1.msra.mxu0 0.0
        %2345 = vmatprep.subr.mxu0 0.0
        %2346 = vmatpush1.msra.mxu0 0.0
        %2347 = vmatprep.subr.mxu0 0.0
        %2348 = vmatpush1.msra.mxu0 0.0
        %2349 = vmatprep.mubr.f32.mxu0 0.0
        %2350 = vmatmul.mubr.f32.gmra.mrb[0].mxu0 %v2277
        %v2351 = vpop.f32.mrb[0].mxu0
        %v2352 = vadd.f32 0.0, %v2351
        %v2353 = vpop.f32.mrb[0].mxu0
        %2354 = vmatprep.mubr.f32.mxu0 0.0
        %2355 = vmatmul.mubr.f32.gmra.mrb[0].mxu0 %v2280
        %v2356 = vpop.f32.mrb[0].mxu0
        %v2357 = vadd.f32 0.0, %v2356
        %v2358 = vpop.f32.mrb[0].mxu0
        %2359 = vmatprep.mubr.f32.mxu0 0.0
        %2360 = vmatmul.mubr.f32.gmra.mrb[0].mxu0 %v2283
        %v2361 = vpop.f32.mrb[0].mxu0
        %v2362 = vadd.f32 0.0, %v2361
        %v2363 = vpop.f32.mrb[0].mxu0
        %2364 = vdwg.mxu0
        %2365 = vrot.lane.b32.xlu0 %v489, 56
        %v2366 = vpop.permute.xlu0 %2365
        %2367 = vrot.lane.b32.xlu0 %v494, 56
        %v2368 = vpop.permute.xlu0 %2367
        %2369 = vrot.lane.b32.xlu0 %v499, 56
        %v2370 = vpop.permute.xlu0 %2369
        %v2375 = vsel %vm910, %v2068, 0
        %v2378 = vsel %vm910, %v2069, 0
        %v2381 = vsel %vm910, %v2070, 0
        %2383 = vmatprep.subr.mxu0 0.0
        %2384 = vmatpush1.msra.mxu0 %v2366
        %2385 = vmatprep.subr.mxu0 0.0
        %2386 = vmatpush1.msra.mxu0 %v2368
        %2387 = vmatprep.subr.mxu0 0.0
        %2388 = vmatpush1.msra.mxu0 %v2370
        %2389 = vmatprep.subr.mxu0 0.0
        %2390 = vmatpush1.msra.mxu0 0.0
        %2391 = vmatprep.subr.mxu0 0.0
        %2392 = vmatpush1.msra.mxu0 0.0
        %2393 = vmatprep.subr.mxu0 0.0
        %2394 = vmatpush1.msra.mxu0 0.0
        %2395 = vmatprep.subr.mxu0 0.0
        %2396 = vmatpush1.msra.mxu0 0.0
        %2397 = vmatprep.subr.mxu0 0.0
        %2398 = vmatpush1.msra.mxu0 0.0
        %2399 = vmatprep.subr.mxu0 0.0
        %2400 = vmatpush1.msra.mxu0 0.0
        %2401 = vmatprep.subr.mxu0 0.0
        %2402 = vmatpush1.msra.mxu0 0.0
        %2403 = vmatprep.subr.mxu0 0.0
        %2404 = vmatpush1.msra.mxu0 0.0
        %2405 = vmatprep.subr.mxu0 0.0
        %2406 = vmatpush1.msra.mxu0 0.0
        %2407 = vmatprep.subr.mxu0 0.0
        %2408 = vmatpush1.msra.mxu0 0.0
        %2409 = vmatprep.subr.mxu0 0.0
        %2410 = vmatpush1.msra.mxu0 0.0
        %2411 = vmatprep.subr.mxu0 0.0
        %2412 = vmatpush1.msra.mxu0 0.0
        %2413 = vmatprep.subr.mxu0 0.0
        %2414 = vmatpush1.msra.mxu0 0.0
        %2415 = vmatprep.subr.mxu0 0.0
        %2416 = vmatpush1.msra.mxu0 0.0
        %2417 = vmatprep.subr.mxu0 0.0
        %2418 = vmatpush1.msra.mxu0 0.0
        %2419 = vmatprep.subr.mxu0 0.0
        %2420 = vmatpush1.msra.mxu0 0.0
        %2421 = vmatprep.subr.mxu0 0.0
        %2422 = vmatpush1.msra.mxu0 0.0
        %2423 = vmatprep.subr.mxu0 0.0
        %2424 = vmatpush1.msra.mxu0 0.0
        %2425 = vmatprep.subr.mxu0 0.0
        %2426 = vmatpush1.msra.mxu0 0.0
        %2427 = vmatprep.subr.mxu0 0.0
        %2428 = vmatpush1.msra.mxu0 0.0
        %2429 = vmatprep.subr.mxu0 0.0
        %2430 = vmatpush1.msra.mxu0 0.0
        %2431 = vmatprep.subr.mxu0 0.0
        %2432 = vmatpush1.msra.mxu0 0.0
        %2433 = vmatprep.subr.mxu0 0.0
        %2434 = vmatpush1.msra.mxu0 0.0
        %2435 = vmatprep.subr.mxu0 0.0
        %2436 = vmatpush1.msra.mxu0 0.0
        %2437 = vmatprep.subr.mxu0 0.0
        %2438 = vmatpush1.msra.mxu0 0.0
        %2439 = vmatprep.subr.mxu0 0.0
        %2440 = vmatpush1.msra.mxu0 0.0
        %2441 = vmatprep.subr.mxu0 0.0
        %2442 = vmatpush1.msra.mxu0 0.0
        %2443 = vmatprep.subr.mxu0 0.0
        %2444 = vmatpush1.msra.mxu0 0.0
        %2445 = vmatprep.subr.mxu0 0.0
        %2446 = vmatpush1.msra.mxu0 0.0
        %2447 = vmatprep.mubr.f32.mxu0 0.0
        %2448 = vmatmul.mubr.f32.gmra.mrb[0].mxu0 %v2375
        %v2449 = vpop.f32.mrb[0].mxu0
        %v2450 = vadd.f32 0.0, %v2449
        %v2451 = vpop.f32.mrb[0].mxu0
        %2452 = vmatprep.mubr.f32.mxu0 0.0
        %2453 = vmatmul.mubr.f32.gmra.mrb[0].mxu0 %v2378
        %v2454 = vpop.f32.mrb[0].mxu0
        %v2455 = vadd.f32 0.0, %v2454
        %v2456 = vpop.f32.mrb[0].mxu0
        %2457 = vmatprep.mubr.f32.mxu0 0.0
        %2458 = vmatmul.mubr.f32.gmra.mrb[0].mxu0 %v2381
        %v2459 = vpop.f32.mrb[0].mxu0
        %v2460 = vadd.f32 0.0, %v2459
        %v2461 = vpop.f32.mrb[0].mxu0
        %2462 = vdwg.mxu0
        %2475 = vrot.lane.b32.xlu0 %v2156, 8
        %v2476 = vpop.permute.xlu0 %2475
        %2477 = vrot.lane.b32.xlu0 %v2161, 8
        %v2478 = vpop.permute.xlu0 %2477
        %2479 = vrot.lane.b32.xlu0 %v2166, 8
        %v2480 = vpop.permute.xlu0 %2479
        %2481 = vrot.lane.b32.xlu0 %v2254, 8
        %v2482 = vpop.permute.xlu0 %2481
        %2483 = vrot.lane.b32.xlu0 %v2259, 8
        %v2484 = vpop.permute.xlu0 %2483
        %2485 = vrot.lane.b32.xlu0 %v2264, 8
        %v2486 = vpop.permute.xlu0 %2485
        %2487 = vrot.lane.b32.xlu0 %v2352, 8
        %v2488 = vpop.permute.xlu0 %2487
        %2489 = vrot.lane.b32.xlu0 %v2357, 8
        %v2490 = vpop.permute.xlu0 %2489
        %2491 = vrot.lane.b32.xlu0 %v2362, 8
        %v2492 = vpop.permute.xlu0 %2491
        %2493 = vrot.lane.b32.xlu0 %v2450, 8
        %v2494 = vpop.permute.xlu0 %2493
        %2495 = vrot.lane.b32.xlu0 %v2455, 8
        %v2496 = vpop.permute.xlu0 %2495
        %2497 = vrot.lane.b32.xlu0 %v2460, 8
        %v2498 = vpop.permute.xlu0 %2497
        %vm2511 = vcmask 130112
        %2512 = vst.msk [vmem:[#allocation2] sm:$0xff] %vm2511, %v2476
        %2513 = vst.msk [vmem:[#allocation2 + $0x8] sm:$0xff] %vm2511, %v2478
        %2514 = vst.msk [vmem:[#allocation2 + $0x10] sm:$0xff] %vm2511, %v2480
        %2515 = vst.msk [vmem:[#allocation2 + $0x18] sm:$0xff] %vm2511, %v2482
        %2516 = vst.msk [vmem:[#allocation2 + $0x20] sm:$0xff] %vm2511, %v2484
        %2517 = vst.msk [vmem:[#allocation2 + $0x28] sm:$0xff] %vm2511, %v2486
        %2518 = vst.msk [vmem:[#allocation2 + $0x30] sm:$0xff] %vm2511, %v2488
        %2519 = vst.msk [vmem:[#allocation2 + $0x38] sm:$0xff] %vm2511, %v2490
        %2520 = vst.msk [vmem:[#allocation2 + $0x40] sm:$0xff] %vm2511, %v2492
        %2521 = vst.msk [vmem:[#allocation2 + $0x48] sm:$0xff] %vm2511, %v2494
        %2522 = vst.msk [vmem:[#allocation2 + $0x50] sm:$0xff] %vm2511, %v2496
        %2523 = vst.msk [vmem:[#allocation2 + $0x58] sm:$0xff] %vm2511, %v2498
        %s2524 = scalar_lea.vmem [#allocation8], 48
        %v2525 = vld [vmem:[%s2524] sm:$0xff]
        %v2526 = vld [vmem:[%s2524 + $0x8] sm:$0xff]
        %v2527 = vld [vmem:[%s2524 + $0x10] sm:$0xff]
        %2528 = vrot.lane.b32.xlu0 %v444, 112
        %v2529 = vpop.permute.xlu0 %2528
        %2530 = vrot.lane.b32.xlu0 %v449, 112
        %v2531 = vpop.permute.xlu0 %2530
        %2532 = vrot.lane.b32.xlu0 %v454, 112
        %v2533 = vpop.permute.xlu0 %2532
        %2534 = vrot.lane.b32.xlu0 %v444, 80
        %v2535 = vpop.permute.xlu0 %2534
        %2536 = vrot.lane.b32.xlu0 %v449, 80
        %v2537 = vpop.permute.xlu0 %2536
        %2538 = vrot.lane.b32.xlu0 %v454, 80
        %v2539 = vpop.permute.xlu0 %2538
        %v2540 = vsel %vm514, %v2529, 0
        %v2542 = vsel %vm514, %v2531, 0
        %v2544 = vsel %vm514, %v2533, 0
        %v2546 = vsel %vm514, %v2535, 0
        %v2548 = vsel %vm514, %v2537, 0
        %v2550 = vsel %vm514, %v2539, 0
        %2552 = vmatprep.subr.mxu0 0.0
        %2553 = vmatpush1.xpose.msra.mxu0 %v2546
        %2554 = vmatprep.subr.mxu0 0.0
        %2555 = vmatpush1.xpose.msra.mxu0 %v2548
        %2556 = vmatprep.subr.mxu0 0.0
        %2557 = vmatpush1.xpose.msra.mxu0 %v2550
        %2558 = vmatprep.subr.mxu0 0.0
        %2559 = vmatpush1.xpose.msra.mxu0 0.0
        %2560 = vmatprep.subr.mxu0 0.0
        %2561 = vmatpush1.xpose.msra.mxu0 0.0
        %2562 = vmatprep.subr.mxu0 0.0
        %2563 = vmatpush1.xpose.msra.mxu0 0.0
        %2564 = vmatprep.subr.mxu0 0.0
        %2565 = vmatpush1.xpose.msra.mxu0 0.0
        %2566 = vmatprep.subr.mxu0 0.0
        %2567 = vmatpush1.xpose.msra.mxu0 0.0
        %2568 = vmatprep.subr.mxu0 0.0
        %2569 = vmatpush1.xpose.msra.mxu0 0.0
        %2570 = vmatprep.subr.mxu0 0.0
        %2571 = vmatpush1.xpose.msra.mxu0 0.0
        %2572 = vmatprep.subr.mxu0 0.0
        %2573 = vmatpush1.xpose.msra.mxu0 0.0
        %2574 = vmatprep.subr.mxu0 0.0
        %2575 = vmatpush1.xpose.msra.mxu0 0.0
        %2576 = vmatprep.subr.mxu0 0.0
        %2577 = vmatpush1.xpose.msra.mxu0 0.0
        %2578 = vmatprep.subr.mxu0 0.0
        %2579 = vmatpush1.xpose.msra.mxu0 0.0
        %2580 = vmatprep.subr.mxu0 0.0
        %2581 = vmatpush1.xpose.msra.mxu0 0.0
        %2582 = vmatprep.subr.mxu0 0.0
        %2583 = vmatpush1.xpose.msra.mxu0 0.0
        %2584 = vmatprep.subr.mxu0 0.0
        %2585 = vmatpush1.xpose.msra.mxu0 0.0
        %2586 = vmatprep.subr.mxu0 0.0
        %2587 = vmatpush1.xpose.msra.mxu0 0.0
        %2588 = vmatprep.subr.mxu0 0.0
        %2589 = vmatpush1.xpose.msra.mxu0 0.0
        %2590 = vmatprep.subr.mxu0 0.0
        %2591 = vmatpush1.xpose.msra.mxu0 0.0
        %2592 = vmatprep.subr.mxu0 0.0
        %2593 = vmatpush1.xpose.msra.mxu0 0.0
        %2594 = vmatprep.subr.mxu0 0.0
        %2595 = vmatpush1.xpose.msra.mxu0 0.0
        %2596 = vmatprep.subr.mxu0 0.0
        %2597 = vmatpush1.xpose.msra.mxu0 0.0
        %2598 = vmatprep.subr.mxu0 0.0
        %2599 = vmatpush1.xpose.msra.mxu0 0.0
        %2600 = vmatprep.subr.mxu0 0.0
        %2601 = vmatpush1.xpose.msra.mxu0 0.0
        %2602 = vmatprep.subr.mxu0 0.0
        %2603 = vmatpush1.xpose.msra.mxu0 0.0
        %2604 = vmatprep.subr.mxu0 0.0
        %2605 = vmatpush1.xpose.msra.mxu0 0.0
        %2606 = vmatprep.subr.mxu0 0.0
        %2607 = vmatpush1.xpose.msra.mxu0 0.0
        %2608 = vmatprep.subr.mxu0 0.0
        %2609 = vmatpush1.xpose.msra.mxu0 0.0
        %2610 = vmatprep.subr.mxu0 0.0
        %2611 = vmatpush1.xpose.msra.mxu0 0.0
        %2612 = vmatprep.subr.mxu0 0.0
        %2613 = vmatpush1.xpose.msra.mxu0 0.0
        %2614 = vmatprep.subr.mxu0 0.0
        %2615 = vmatpush1.xpose.msra.mxu0 0.0
        %2616 = vmatprep.mubr.f32.mxu0 0.0
        %2617 = vmatmul.mubr.f32.gmra.mrb[0].mxu0 %v2540
        %v2618 = vpop.f32.mrb[0].mxu0
        %v2619 = vadd.f32 %v2525, %v2618
        %v2620 = vpop.f32.mrb[0].mxu0
        %2621 = vmatprep.mubr.f32.mxu0 0.0
        %2622 = vmatmul.mubr.f32.gmra.mrb[0].mxu0 %v2542
        %v2623 = vpop.f32.mrb[0].mxu0
        %v2624 = vadd.f32 %v2526, %v2623
        %v2625 = vpop.f32.mrb[0].mxu0
        %2626 = vmatprep.mubr.f32.mxu0 0.0
        %2627 = vmatmul.mubr.f32.gmra.mrb[0].mxu0 %v2544
        %v2628 = vpop.f32.mrb[0].mxu0
        %v2629 = vadd.f32 %v2527, %v2628
        %v2630 = vpop.f32.mrb[0].mxu0
        %2631 = vdwg.mxu0
        %2632 = vrot.lane.b32.xlu0 %v459, 112
        %v2633 = vpop.permute.xlu0 %2632
        %2634 = vrot.lane.b32.xlu0 %v464, 112
        %v2635 = vpop.permute.xlu0 %2634
        %2636 = vrot.lane.b32.xlu0 %v469, 112
        %v2637 = vpop.permute.xlu0 %2636
        %2638 = vrot.lane.b32.xlu0 %v459, 80
        %v2639 = vpop.permute.xlu0 %2638
        %2640 = vrot.lane.b32.xlu0 %v464, 80
        %v2641 = vpop.permute.xlu0 %2640
        %2642 = vrot.lane.b32.xlu0 %v469, 80
        %v2643 = vpop.permute.xlu0 %2642
        %v2644 = vsel %vm514, %v2633, 0
        %v2646 = vsel %vm514, %v2635, 0
        %v2648 = vsel %vm514, %v2637, 0
        %v2650 = vsel %vm514, %v2639, 0
        %v2652 = vsel %vm514, %v2641, 0
        %v2654 = vsel %vm514, %v2643, 0
        %2656 = vmatprep.subr.mxu0 0.0
        %2657 = vmatpush1.xpose.msra.mxu0 %v2650
        %2658 = vmatprep.subr.mxu0 0.0
        %2659 = vmatpush1.xpose.msra.mxu0 %v2652
        %2660 = vmatprep.subr.mxu0 0.0
        %2661 = vmatpush1.xpose.msra.mxu0 %v2654
        %2662 = vmatprep.subr.mxu0 0.0
        %2663 = vmatpush1.xpose.msra.mxu0 0.0
        %2664 = vmatprep.subr.mxu0 0.0
        %2665 = vmatpush1.xpose.msra.mxu0 0.0
        %2666 = vmatprep.subr.mxu0 0.0
        %2667 = vmatpush1.xpose.msra.mxu0 0.0
        %2668 = vmatprep.subr.mxu0 0.0
        %2669 = vmatpush1.xpose.msra.mxu0 0.0
        %2670 = vmatprep.subr.mxu0 0.0
        %2671 = vmatpush1.xpose.msra.mxu0 0.0
        %2672 = vmatprep.subr.mxu0 0.0
        %2673 = vmatpush1.xpose.msra.mxu0 0.0
        %2674 = vmatprep.subr.mxu0 0.0
        %2675 = vmatpush1.xpose.msra.mxu0 0.0
        %2676 = vmatprep.subr.mxu0 0.0
        %2677 = vmatpush1.xpose.msra.mxu0 0.0
        %2678 = vmatprep.subr.mxu0 0.0
        %2679 = vmatpush1.xpose.msra.mxu0 0.0
        %2680 = vmatprep.subr.mxu0 0.0
        %2681 = vmatpush1.xpose.msra.mxu0 0.0
        %2682 = vmatprep.subr.mxu0 0.0
        %2683 = vmatpush1.xpose.msra.mxu0 0.0
        %2684 = vmatprep.subr.mxu0 0.0
        %2685 = vmatpush1.xpose.msra.mxu0 0.0
        %2686 = vmatprep.subr.mxu0 0.0
        %2687 = vmatpush1.xpose.msra.mxu0 0.0
        %2688 = vmatprep.subr.mxu0 0.0
        %2689 = vmatpush1.xpose.msra.mxu0 0.0
        %2690 = vmatprep.subr.mxu0 0.0
        %2691 = vmatpush1.xpose.msra.mxu0 0.0
        %2692 = vmatprep.subr.mxu0 0.0
        %2693 = vmatpush1.xpose.msra.mxu0 0.0
        %2694 = vmatprep.subr.mxu0 0.0
        %2695 = vmatpush1.xpose.msra.mxu0 0.0
        %2696 = vmatprep.subr.mxu0 0.0
        %2697 = vmatpush1.xpose.msra.mxu0 0.0
        %2698 = vmatprep.subr.mxu0 0.0
        %2699 = vmatpush1.xpose.msra.mxu0 0.0
        %2700 = vmatprep.subr.mxu0 0.0
        %2701 = vmatpush1.xpose.msra.mxu0 0.0
        %2702 = vmatprep.subr.mxu0 0.0
        %2703 = vmatpush1.xpose.msra.mxu0 0.0
        %2704 = vmatprep.subr.mxu0 0.0
        %2705 = vmatpush1.xpose.msra.mxu0 0.0
        %2706 = vmatprep.subr.mxu0 0.0
        %2707 = vmatpush1.xpose.msra.mxu0 0.0
        %2708 = vmatprep.subr.mxu0 0.0
        %2709 = vmatpush1.xpose.msra.mxu0 0.0
        %2710 = vmatprep.subr.mxu0 0.0
        %2711 = vmatpush1.xpose.msra.mxu0 0.0
        %2712 = vmatprep.subr.mxu0 0.0
        %2713 = vmatpush1.xpose.msra.mxu0 0.0
        %2714 = vmatprep.subr.mxu0 0.0
        %2715 = vmatpush1.xpose.msra.mxu0 0.0
        %2716 = vmatprep.subr.mxu0 0.0
        %2717 = vmatpush1.xpose.msra.mxu0 0.0
        %2718 = vmatprep.subr.mxu0 0.0
        %2719 = vmatpush1.xpose.msra.mxu0 0.0
        %2720 = vmatprep.mubr.f32.mxu0 0.0
        %2721 = vmatmul.mubr.f32.gmra.mrb[0].mxu0 %v2644
        %v2722 = vpop.f32.mrb[0].mxu0
        %v2723 = vadd.f32 %v2525, %v2722
        %v2724 = vpop.f32.mrb[0].mxu0
        %2725 = vmatprep.mubr.f32.mxu0 0.0
        %2726 = vmatmul.mubr.f32.gmra.mrb[0].mxu0 %v2646
        %v2727 = vpop.f32.mrb[0].mxu0
        %v2728 = vadd.f32 %v2526, %v2727
        %v2729 = vpop.f32.mrb[0].mxu0
        %2730 = vmatprep.mubr.f32.mxu0 0.0
        %2731 = vmatmul.mubr.f32.gmra.mrb[0].mxu0 %v2648
        %v2732 = vpop.f32.mrb[0].mxu0
        %v2733 = vadd.f32 %v2527, %v2732
        %v2734 = vpop.f32.mrb[0].mxu0
        %2735 = vdwg.mxu0
        %2736 = vrot.lane.b32.xlu0 %v474, 112
        %v2737 = vpop.permute.xlu0 %2736
        %2738 = vrot.lane.b32.xlu0 %v479, 112
        %v2739 = vpop.permute.xlu0 %2738
        %2740 = vrot.lane.b32.xlu0 %v484, 112
        %v2741 = vpop.permute.xlu0 %2740
        %2742 = vrot.lane.b32.xlu0 %v474, 80
        %v2743 = vpop.permute.xlu0 %2742
        %2744 = vrot.lane.b32.xlu0 %v479, 80
        %v2745 = vpop.permute.xlu0 %2744
        %2746 = vrot.lane.b32.xlu0 %v484, 80
        %v2747 = vpop.permute.xlu0 %2746
        %v2748 = vsel %vm514, %v2737, 0
        %v2750 = vsel %vm514, %v2739, 0
        %v2752 = vsel %vm514, %v2741, 0
        %v2754 = vsel %vm514, %v2743, 0
        %v2756 = vsel %vm514, %v2745, 0
        %v2758 = vsel %vm514, %v2747, 0
        %2760 = vmatprep.subr.mxu0 0.0
        %2761 = vmatpush1.xpose.msra.mxu0 %v2754
        %2762 = vmatprep.subr.mxu0 0.0
        %2763 = vmatpush1.xpose.msra.mxu0 %v2756
        %2764 = vmatprep.subr.mxu0 0.0
        %2765 = vmatpush1.xpose.msra.mxu0 %v2758
        %2766 = vmatprep.subr.mxu0 0.0
        %2767 = vmatpush1.xpose.msra.mxu0 0.0
        %2768 = vmatprep.subr.mxu0 0.0
        %2769 = vmatpush1.xpose.msra.mxu0 0.0
        %2770 = vmatprep.subr.mxu0 0.0
        %2771 = vmatpush1.xpose.msra.mxu0 0.0
        %2772 = vmatprep.subr.mxu0 0.0
        %2773 = vmatpush1.xpose.msra.mxu0 0.0
        %2774 = vmatprep.subr.mxu0 0.0
        %2775 = vmatpush1.xpose.msra.mxu0 0.0
        %2776 = vmatprep.subr.mxu0 0.0
        %2777 = vmatpush1.xpose.msra.mxu0 0.0
        %2778 = vmatprep.subr.mxu0 0.0
        %2779 = vmatpush1.xpose.msra.mxu0 0.0
        %2780 = vmatprep.subr.mxu0 0.0
        %2781 = vmatpush1.xpose.msra.mxu0 0.0
        %2782 = vmatprep.subr.mxu0 0.0
        %2783 = vmatpush1.xpose.msra.mxu0 0.0
        %2784 = vmatprep.subr.mxu0 0.0
        %2785 = vmatpush1.xpose.msra.mxu0 0.0
        %2786 = vmatprep.subr.mxu0 0.0
        %2787 = vmatpush1.xpose.msra.mxu0 0.0
        %2788 = vmatprep.subr.mxu0 0.0
        %2789 = vmatpush1.xpose.msra.mxu0 0.0
        %2790 = vmatprep.subr.mxu0 0.0
        %2791 = vmatpush1.xpose.msra.mxu0 0.0
        %2792 = vmatprep.subr.mxu0 0.0
        %2793 = vmatpush1.xpose.msra.mxu0 0.0
        %2794 = vmatprep.subr.mxu0 0.0
        %2795 = vmatpush1.xpose.msra.mxu0 0.0
        %2796 = vmatprep.subr.mxu0 0.0
        %2797 = vmatpush1.xpose.msra.mxu0 0.0
        %2798 = vmatprep.subr.mxu0 0.0
        %2799 = vmatpush1.xpose.msra.mxu0 0.0
        %2800 = vmatprep.subr.mxu0 0.0
        %2801 = vmatpush1.xpose.msra.mxu0 0.0
        %2802 = vmatprep.subr.mxu0 0.0
        %2803 = vmatpush1.xpose.msra.mxu0 0.0
        %2804 = vmatprep.subr.mxu0 0.0
        %2805 = vmatpush1.xpose.msra.mxu0 0.0
        %2806 = vmatprep.subr.mxu0 0.0
        %2807 = vmatpush1.xpose.msra.mxu0 0.0
        %2808 = vmatprep.subr.mxu0 0.0
        %2809 = vmatpush1.xpose.msra.mxu0 0.0
        %2810 = vmatprep.subr.mxu0 0.0
        %2811 = vmatpush1.xpose.msra.mxu0 0.0
        %2812 = vmatprep.subr.mxu0 0.0
        %2813 = vmatpush1.xpose.msra.mxu0 0.0
        %2814 = vmatprep.subr.mxu0 0.0
        %2815 = vmatpush1.xpose.msra.mxu0 0.0
        %2816 = vmatprep.subr.mxu0 0.0
        %2817 = vmatpush1.xpose.msra.mxu0 0.0
        %2818 = vmatprep.subr.mxu0 0.0
        %2819 = vmatpush1.xpose.msra.mxu0 0.0
        %2820 = vmatprep.subr.mxu0 0.0
        %2821 = vmatpush1.xpose.msra.mxu0 0.0
        %2822 = vmatprep.subr.mxu0 0.0
        %2823 = vmatpush1.xpose.msra.mxu0 0.0
        %2824 = vmatprep.mubr.f32.mxu0 0.0
        %2825 = vmatmul.mubr.f32.gmra.mrb[0].mxu0 %v2748
        %v2826 = vpop.f32.mrb[0].mxu0
        %v2827 = vadd.f32 %v2525, %v2826
        %v2828 = vpop.f32.mrb[0].mxu0
        %2829 = vmatprep.mubr.f32.mxu0 0.0
        %2830 = vmatmul.mubr.f32.gmra.mrb[0].mxu0 %v2750
        %v2831 = vpop.f32.mrb[0].mxu0
        %v2832 = vadd.f32 %v2526, %v2831
        %v2833 = vpop.f32.mrb[0].mxu0
        %2834 = vmatprep.mubr.f32.mxu0 0.0
        %2835 = vmatmul.mubr.f32.gmra.mrb[0].mxu0 %v2752
        %v2836 = vpop.f32.mrb[0].mxu0
        %v2837 = vadd.f32 %v2527, %v2836
        %v2838 = vpop.f32.mrb[0].mxu0
        %2839 = vdwg.mxu0
        %2840 = vrot.lane.b32.xlu0 %v489, 112
        %v2841 = vpop.permute.xlu0 %2840
        %2842 = vrot.lane.b32.xlu0 %v494, 112
        %v2843 = vpop.permute.xlu0 %2842
        %2844 = vrot.lane.b32.xlu0 %v499, 112
        %v2845 = vpop.permute.xlu0 %2844
        %2846 = vrot.lane.b32.xlu0 %v489, 80
        %v2847 = vpop.permute.xlu0 %2846
        %2848 = vrot.lane.b32.xlu0 %v494, 80
        %v2849 = vpop.permute.xlu0 %2848
        %2850 = vrot.lane.b32.xlu0 %v499, 80
        %v2851 = vpop.permute.xlu0 %2850
        %v2852 = vsel %vm514, %v2841, 0
        %v2854 = vsel %vm514, %v2843, 0
        %v2856 = vsel %vm514, %v2845, 0
        %v2858 = vsel %vm514, %v2847, 0
        %v2860 = vsel %vm514, %v2849, 0
        %v2862 = vsel %vm514, %v2851, 0
        %2864 = vmatprep.subr.mxu0 0.0
        %2865 = vmatpush1.xpose.msra.mxu0 %v2858
        %2866 = vmatprep.subr.mxu0 0.0
        %2867 = vmatpush1.xpose.msra.mxu0 %v2860
        %2868 = vmatprep.subr.mxu0 0.0
        %2869 = vmatpush1.xpose.msra.mxu0 %v2862
        %2870 = vmatprep.subr.mxu0 0.0
        %2871 = vmatpush1.xpose.msra.mxu0 0.0
        %2872 = vmatprep.subr.mxu0 0.0
        %2873 = vmatpush1.xpose.msra.mxu0 0.0
        %2874 = vmatprep.subr.mxu0 0.0
        %2875 = vmatpush1.xpose.msra.mxu0 0.0
        %2876 = vmatprep.subr.mxu0 0.0
        %2877 = vmatpush1.xpose.msra.mxu0 0.0
        %2878 = vmatprep.subr.mxu0 0.0
        %2879 = vmatpush1.xpose.msra.mxu0 0.0
        %2880 = vmatprep.subr.mxu0 0.0
        %2881 = vmatpush1.xpose.msra.mxu0 0.0
        %2882 = vmatprep.subr.mxu0 0.0
        %2883 = vmatpush1.xpose.msra.mxu0 0.0
        %2884 = vmatprep.subr.mxu0 0.0
        %2885 = vmatpush1.xpose.msra.mxu0 0.0
        %2886 = vmatprep.subr.mxu0 0.0
        %2887 = vmatpush1.xpose.msra.mxu0 0.0
        %2888 = vmatprep.subr.mxu0 0.0
        %2889 = vmatpush1.xpose.msra.mxu0 0.0
        %2890 = vmatprep.subr.mxu0 0.0
        %2891 = vmatpush1.xpose.msra.mxu0 0.0
        %2892 = vmatprep.subr.mxu0 0.0
        %2893 = vmatpush1.xpose.msra.mxu0 0.0
        %2894 = vmatprep.subr.mxu0 0.0
        %2895 = vmatpush1.xpose.msra.mxu0 0.0
        %2896 = vmatprep.subr.mxu0 0.0
        %2897 = vmatpush1.xpose.msra.mxu0 0.0
        %2898 = vmatprep.subr.mxu0 0.0
        %2899 = vmatpush1.xpose.msra.mxu0 0.0
        %2900 = vmatprep.subr.mxu0 0.0
        %2901 = vmatpush1.xpose.msra.mxu0 0.0
        %2902 = vmatprep.subr.mxu0 0.0
        %2903 = vmatpush1.xpose.msra.mxu0 0.0
        %2904 = vmatprep.subr.mxu0 0.0
        %2905 = vmatpush1.xpose.msra.mxu0 0.0
        %2906 = vmatprep.subr.mxu0 0.0
        %2907 = vmatpush1.xpose.msra.mxu0 0.0
        %2908 = vmatprep.subr.mxu0 0.0
        %2909 = vmatpush1.xpose.msra.mxu0 0.0
        %2910 = vmatprep.subr.mxu0 0.0
        %2911 = vmatpush1.xpose.msra.mxu0 0.0
        %2912 = vmatprep.subr.mxu0 0.0
        %2913 = vmatpush1.xpose.msra.mxu0 0.0
        %2914 = vmatprep.subr.mxu0 0.0
        %2915 = vmatpush1.xpose.msra.mxu0 0.0
        %2916 = vmatprep.subr.mxu0 0.0
        %2917 = vmatpush1.xpose.msra.mxu0 0.0
        %2918 = vmatprep.subr.mxu0 0.0
        %2919 = vmatpush1.xpose.msra.mxu0 0.0
        %2920 = vmatprep.subr.mxu0 0.0
        %2921 = vmatpush1.xpose.msra.mxu0 0.0
        %2922 = vmatprep.subr.mxu0 0.0
        %2923 = vmatpush1.xpose.msra.mxu0 0.0
        %2924 = vmatprep.subr.mxu0 0.0
        %2925 = vmatpush1.xpose.msra.mxu0 0.0
        %2926 = vmatprep.subr.mxu0 0.0
        %2927 = vmatpush1.xpose.msra.mxu0 0.0
        %2928 = vmatprep.mubr.f32.mxu0 0.0
        %2929 = vmatmul.mubr.f32.gmra.mrb[0].mxu0 %v2852
        %v2930 = vpop.f32.mrb[0].mxu0
        %v2931 = vadd.f32 %v2525, %v2930
        %v2932 = vpop.f32.mrb[0].mxu0
        %2933 = vmatprep.mubr.f32.mxu0 0.0
        %2934 = vmatmul.mubr.f32.gmra.mrb[0].mxu0 %v2854
        %v2935 = vpop.f32.mrb[0].mxu0
        %v2936 = vadd.f32 %v2526, %v2935
        %v2937 = vpop.f32.mrb[0].mxu0
        %2938 = vmatprep.mubr.f32.mxu0 0.0
        %2939 = vmatmul.mubr.f32.gmra.mrb[0].mxu0 %v2856
        %v2940 = vpop.f32.mrb[0].mxu0
        %v2941 = vadd.f32 %v2527, %v2940
        %v2942 = vpop.f32.mrb[0].mxu0
        %2943 = vdwg.mxu0
        %v2944 = vsel %vm910, %v2619, -inf
        %2945 = vmax.xlane.f32.xlu0 %v2944
        %v2946 = vpop.xlane.xlu0 %2945
        %v2947 = vsel %vm910, %v2624, -inf
        %2948 = vmax.xlane.f32.xlu0 %v2947
        %v2949 = vpop.xlane.xlu0 %2948
        %v2950 = vsel %vm910, %v2629, -inf
        %2951 = vmax.xlane.f32.xlu0 %v2950
        %v2952 = vpop.xlane.xlu0 %2951
        %v2953 = vsel %vm910, %v2723, -inf
        %2954 = vmax.xlane.f32.xlu0 %v2953
        %v2955 = vpop.xlane.xlu0 %2954
        %v2956 = vsel %vm910, %v2728, -inf
        %2957 = vmax.xlane.f32.xlu0 %v2956
        %v2958 = vpop.xlane.xlu0 %2957
        %v2959 = vsel %vm910, %v2733, -inf
        %2960 = vmax.xlane.f32.xlu0 %v2959
        %v2961 = vpop.xlane.xlu0 %2960
        %v2962 = vsel %vm910, %v2827, -inf
        %2963 = vmax.xlane.f32.xlu0 %v2962
        %v2964 = vpop.xlane.xlu0 %2963
        %v2965 = vsel %vm910, %v2832, -inf
        %2966 = vmax.xlane.f32.xlu0 %v2965
        %v2967 = vpop.xlane.xlu0 %2966
        %v2968 = vsel %vm910, %v2837, -inf
        %2969 = vmax.xlane.f32.xlu0 %v2968
        %v2970 = vpop.xlane.xlu0 %2969
        %v2971 = vsel %vm910, %v2931, -inf
        %2972 = vmax.xlane.f32.xlu0 %v2971
        %v2973 = vpop.xlane.xlu0 %2972
        %v2974 = vsel %vm910, %v2936, -inf
        %2975 = vmax.xlane.f32.xlu0 %v2974
        %v2976 = vpop.xlane.xlu0 %2975
        %v2977 = vsel %vm910, %v2941, -inf
        %2978 = vmax.xlane.f32.xlu0 %v2977
        %v2979 = vpop.xlane.xlu0 %2978
        %v2980 = vsub.f32 %v2619, %v2946
        %v2981 = vsub.f32 %v2624, %v2949
        %v2982 = vsub.f32 %v2629, %v2952
        %v2983 = vsub.f32 %v2723, %v2955
        %v2984 = vsub.f32 %v2728, %v2958
        %v2985 = vsub.f32 %v2733, %v2961
        %v2986 = vsub.f32 %v2827, %v2964
        %v2987 = vsub.f32 %v2832, %v2967
        %v2988 = vsub.f32 %v2837, %v2970
        %v2989 = vsub.f32 %v2931, %v2973
        %v2990 = vsub.f32 %v2936, %v2976
        %v2991 = vsub.f32 %v2941, %v2979
        %v2992 = vmul.f32 %v2980, 1.442695
        %v2993 = vpow.pop %v2992
        %v2994 = vmul.f32 %v2981, 1.442695
        %v2995 = vpow.pop %v2994
        %v2996 = vmul.f32 %v2982, 1.442695
        %v2997 = vpow.pop %v2996
        %v2998 = vmul.f32 %v2983, 1.442695
        %v2999 = vpow.pop %v2998
        %v3000 = vmul.f32 %v2984, 1.442695
        %v3001 = vpow.pop %v3000
        %v3002 = vmul.f32 %v2985, 1.442695
        %v3003 = vpow.pop %v3002
        %v3004 = vmul.f32 %v2986, 1.442695
        %v3005 = vpow.pop %v3004
        %v3006 = vmul.f32 %v2987, 1.442695
        %v3007 = vpow.pop %v3006
        %v3008 = vmul.f32 %v2988, 1.442695
        %v3009 = vpow.pop %v3008
        %v3010 = vmul.f32 %v2989, 1.442695
        %v3011 = vpow.pop %v3010
        %v3012 = vmul.f32 %v2990, 1.442695
        %v3013 = vpow.pop %v3012
        %v3014 = vmul.f32 %v2991, 1.442695
        %v3015 = vpow.pop %v3014
        %v3016 = vsel %vm910, %v2993, 0.0
        %3017 = vadd.xlane.f32.xlu0 %v3016
        %v3018 = vpop.xlane.xlu0 %3017
        %v3019 = vsel %vm910, %v2995, 0.0
        %3020 = vadd.xlane.f32.xlu0 %v3019
        %v3021 = vpop.xlane.xlu0 %3020
        %v3022 = vsel %vm910, %v2997, 0.0
        %3023 = vadd.xlane.f32.xlu0 %v3022
        %v3024 = vpop.xlane.xlu0 %3023
        %v3025 = vsel %vm910, %v2999, 0.0
        %3026 = vadd.xlane.f32.xlu0 %v3025
        %v3027 = vpop.xlane.xlu0 %3026
        %v3028 = vsel %vm910, %v3001, 0.0
        %3029 = vadd.xlane.f32.xlu0 %v3028
        %v3030 = vpop.xlane.xlu0 %3029
        %v3031 = vsel %vm910, %v3003, 0.0
        %3032 = vadd.xlane.f32.xlu0 %v3031
        %v3033 = vpop.xlane.xlu0 %3032
        %v3034 = vsel %vm910, %v3005, 0.0
        %3035 = vadd.xlane.f32.xlu0 %v3034
        %v3036 = vpop.xlane.xlu0 %3035
        %v3037 = vsel %vm910, %v3007, 0.0
        %3038 = vadd.xlane.f32.xlu0 %v3037
        %v3039 = vpop.xlane.xlu0 %3038
        %v3040 = vsel %vm910, %v3009, 0.0
        %3041 = vadd.xlane.f32.xlu0 %v3040
        %v3042 = vpop.xlane.xlu0 %3041
        %v3043 = vsel %vm910, %v3011, 0.0
        %3044 = vadd.xlane.f32.xlu0 %v3043
        %v3045 = vpop.xlane.xlu0 %3044
        %v3046 = vsel %vm910, %v3013, 0.0
        %3047 = vadd.xlane.f32.xlu0 %v3046
        %v3048 = vpop.xlane.xlu0 %3047
        %v3049 = vsel %vm910, %v3015, 0.0
        %3050 = vadd.xlane.f32.xlu0 %v3049
        %v3051 = vpop.xlane.xlu0 %3050
        %v3052 = vrcp.pop %v3018
        %v3053 = vrcp.pop %v3021
        %v3054 = vrcp.pop %v3024
        %v3055 = vrcp.pop %v3027
        %v3056 = vrcp.pop %v3030
        %v3057 = vrcp.pop %v3033
        %v3058 = vrcp.pop %v3036
        %v3059 = vrcp.pop %v3039
        %v3060 = vrcp.pop %v3042
        %v3061 = vrcp.pop %v3045
        %v3062 = vrcp.pop %v3048
        %v3063 = vrcp.pop %v3051
        %v3064 = vmul.f32 %v3018, %v3052
        %v3065 = vmul.f32 %v3021, %v3053
        %v3066 = vmul.f32 %v3024, %v3054
        %v3067 = vmul.f32 %v3027, %v3055
        %v3068 = vmul.f32 %v3030, %v3056
        %v3069 = vmul.f32 %v3033, %v3057
        %v3070 = vmul.f32 %v3036, %v3058
        %v3071 = vmul.f32 %v3039, %v3059
        %v3072 = vmul.f32 %v3042, %v3060
        %v3073 = vmul.f32 %v3045, %v3061
        %v3074 = vmul.f32 %v3048, %v3062
        %v3075 = vmul.f32 %v3051, %v3063
        %v3076 = vsub.f32 2.0, %v3064
        %v3077 = vsub.f32 2.0, %v3065
        %v3078 = vsub.f32 2.0, %v3066
        %v3079 = vsub.f32 2.0, %v3067
        %v3080 = vsub.f32 2.0, %v3068
        %v3081 = vsub.f32 2.0, %v3069
        %v3082 = vsub.f32 2.0, %v3070
        %v3083 = vsub.f32 2.0, %v3071
        %v3084 = vsub.f32 2.0, %v3072
        %v3085 = vsub.f32 2.0, %v3073
        %v3086 = vsub.f32 2.0, %v3074
        %v3087 = vsub.f32 2.0, %v3075
        %v3088 = vmul.f32 %v3052, %v3076
        %v3089 = vmul.f32 %v3053, %v3077
        %v3090 = vmul.f32 %v3054, %v3078
        %v3091 = vmul.f32 %v3055, %v3079
        %v3092 = vmul.f32 %v3056, %v3080
        %v3093 = vmul.f32 %v3057, %v3081
        %v3094 = vmul.f32 %v3058, %v3082
        %v3095 = vmul.f32 %v3059, %v3083
        %v3096 = vmul.f32 %v3060, %v3084
        %v3097 = vmul.f32 %v3061, %v3085
        %v3098 = vmul.f32 %v3062, %v3086
        %v3099 = vmul.f32 %v3063, %v3087
        %v3100 = vmul.f32 %v2993, %v3088
        %v3101 = vmul.f32 %v2995, %v3089
        %v3102 = vmul.f32 %v2997, %v3090
        %v3103 = vmul.f32 %v2999, %v3091
        %v3104 = vmul.f32 %v3001, %v3092
        %v3105 = vmul.f32 %v3003, %v3093
        %v3106 = vmul.f32 %v3005, %v3094
        %v3107 = vmul.f32 %v3007, %v3095
        %v3108 = vmul.f32 %v3009, %v3096
        %v3109 = vmul.f32 %v3011, %v3097
        %v3110 = vmul.f32 %v3013, %v3098
        %v3111 = vmul.f32 %v3015, %v3099
        %3112 = vrot.lane.b32.xlu0 %v444, 48
        %v3113 = vpop.permute.xlu0 %3112
        %3114 = vrot.lane.b32.xlu0 %v449, 48
        %v3115 = vpop.permute.xlu0 %3114
        %3116 = vrot.lane.b32.xlu0 %v454, 48
        %v3117 = vpop.permute.xlu0 %3116
        %v3122 = vsel %vm910, %v3100, 0
        %v3125 = vsel %vm910, %v3101, 0
        %v3128 = vsel %vm910, %v3102, 0
        %3130 = vmatprep.subr.mxu0 0.0
        %3131 = vmatpush1.msra.mxu0 %v3113
        %3132 = vmatprep.subr.mxu0 0.0
        %3133 = vmatpush1.msra.mxu0 %v3115
        %3134 = vmatprep.subr.mxu0 0.0
        %3135 = vmatpush1.msra.mxu0 %v3117
        %3136 = vmatprep.subr.mxu0 0.0
        %3137 = vmatpush1.msra.mxu0 0.0
        %3138 = vmatprep.subr.mxu0 0.0
        %3139 = vmatpush1.msra.mxu0 0.0
        %3140 = vmatprep.subr.mxu0 0.0
        %3141 = vmatpush1.msra.mxu0 0.0
        %3142 = vmatprep.subr.mxu0 0.0
        %3143 = vmatpush1.msra.mxu0 0.0
        %3144 = vmatprep.subr.mxu0 0.0
        %3145 = vmatpush1.msra.mxu0 0.0
        %3146 = vmatprep.subr.mxu0 0.0
        %3147 = vmatpush1.msra.mxu0 0.0
        %3148 = vmatprep.subr.mxu0 0.0
        %3149 = vmatpush1.msra.mxu0 0.0
        %3150 = vmatprep.subr.mxu0 0.0
        %3151 = vmatpush1.msra.mxu0 0.0
        %3152 = vmatprep.subr.mxu0 0.0
        %3153 = vmatpush1.msra.mxu0 0.0
        %3154 = vmatprep.subr.mxu0 0.0
        %3155 = vmatpush1.msra.mxu0 0.0
        %3156 = vmatprep.subr.mxu0 0.0
        %3157 = vmatpush1.msra.mxu0 0.0
        %3158 = vmatprep.subr.mxu0 0.0
        %3159 = vmatpush1.msra.mxu0 0.0
        %3160 = vmatprep.subr.mxu0 0.0
        %3161 = vmatpush1.msra.mxu0 0.0
        %3162 = vmatprep.subr.mxu0 0.0
        %3163 = vmatpush1.msra.mxu0 0.0
        %3164 = vmatprep.subr.mxu0 0.0
        %3165 = vmatpush1.msra.mxu0 0.0
        %3166 = vmatprep.subr.mxu0 0.0
        %3167 = vmatpush1.msra.mxu0 0.0
        %3168 = vmatprep.subr.mxu0 0.0
        %3169 = vmatpush1.msra.mxu0 0.0
        %3170 = vmatprep.subr.mxu0 0.0
        %3171 = vmatpush1.msra.mxu0 0.0
        %3172 = vmatprep.subr.mxu0 0.0
        %3173 = vmatpush1.msra.mxu0 0.0
        %3174 = vmatprep.subr.mxu0 0.0
        %3175 = vmatpush1.msra.mxu0 0.0
        %3176 = vmatprep.subr.mxu0 0.0
        %3177 = vmatpush1.msra.mxu0 0.0
        %3178 = vmatprep.subr.mxu0 0.0
        %3179 = vmatpush1.msra.mxu0 0.0
        %3180 = vmatprep.subr.mxu0 0.0
        %3181 = vmatpush1.msra.mxu0 0.0
        %3182 = vmatprep.subr.mxu0 0.0
        %3183 = vmatpush1.msra.mxu0 0.0
        %3184 = vmatprep.subr.mxu0 0.0
        %3185 = vmatpush1.msra.mxu0 0.0
        %3186 = vmatprep.subr.mxu0 0.0
        %3187 = vmatpush1.msra.mxu0 0.0
        %3188 = vmatprep.subr.mxu0 0.0
        %3189 = vmatpush1.msra.mxu0 0.0
        %3190 = vmatprep.subr.mxu0 0.0
        %3191 = vmatpush1.msra.mxu0 0.0
        %3192 = vmatprep.subr.mxu0 0.0
        %3193 = vmatpush1.msra.mxu0 0.0
        %3194 = vmatprep.mubr.f32.mxu0 0.0
        %3195 = vmatmul.mubr.f32.gmra.mrb[0].mxu0 %v3122
        %v3196 = vpop.f32.mrb[0].mxu0
        %v3197 = vadd.f32 0.0, %v3196
        %v3198 = vpop.f32.mrb[0].mxu0
        %3199 = vmatprep.mubr.f32.mxu0 0.0
        %3200 = vmatmul.mubr.f32.gmra.mrb[0].mxu0 %v3125
        %v3201 = vpop.f32.mrb[0].mxu0
        %v3202 = vadd.f32 0.0, %v3201
        %v3203 = vpop.f32.mrb[0].mxu0
        %3204 = vmatprep.mubr.f32.mxu0 0.0
        %3205 = vmatmul.mubr.f32.gmra.mrb[0].mxu0 %v3128
        %v3206 = vpop.f32.mrb[0].mxu0
        %v3207 = vadd.f32 0.0, %v3206
        %v3208 = vpop.f32.mrb[0].mxu0
        %3209 = vdwg.mxu0
        %3210 = vrot.lane.b32.xlu0 %v459, 48
        %v3211 = vpop.permute.xlu0 %3210
        %3212 = vrot.lane.b32.xlu0 %v464, 48
        %v3213 = vpop.permute.xlu0 %3212
        %3214 = vrot.lane.b32.xlu0 %v469, 48
        %v3215 = vpop.permute.xlu0 %3214
        %v3220 = vsel %vm910, %v3103, 0
        %v3223 = vsel %vm910, %v3104, 0
        %v3226 = vsel %vm910, %v3105, 0
        %3228 = vmatprep.subr.mxu0 0.0
        %3229 = vmatpush1.msra.mxu0 %v3211
        %3230 = vmatprep.subr.mxu0 0.0
        %3231 = vmatpush1.msra.mxu0 %v3213
        %3232 = vmatprep.subr.mxu0 0.0
        %3233 = vmatpush1.msra.mxu0 %v3215
        %3234 = vmatprep.subr.mxu0 0.0
        %3235 = vmatpush1.msra.mxu0 0.0
        %3236 = vmatprep.subr.mxu0 0.0
        %3237 = vmatpush1.msra.mxu0 0.0
        %3238 = vmatprep.subr.mxu0 0.0
        %3239 = vmatpush1.msra.mxu0 0.0
        %3240 = vmatprep.subr.mxu0 0.0
        %3241 = vmatpush1.msra.mxu0 0.0
        %3242 = vmatprep.subr.mxu0 0.0
        %3243 = vmatpush1.msra.mxu0 0.0
        %3244 = vmatprep.subr.mxu0 0.0
        %3245 = vmatpush1.msra.mxu0 0.0
        %3246 = vmatprep.subr.mxu0 0.0
        %3247 = vmatpush1.msra.mxu0 0.0
        %3248 = vmatprep.subr.mxu0 0.0
        %3249 = vmatpush1.msra.mxu0 0.0
        %3250 = vmatprep.subr.mxu0 0.0
        %3251 = vmatpush1.msra.mxu0 0.0
        %3252 = vmatprep.subr.mxu0 0.0
        %3253 = vmatpush1.msra.mxu0 0.0
        %3254 = vmatprep.subr.mxu0 0.0
        %3255 = vmatpush1.msra.mxu0 0.0
        %3256 = vmatprep.subr.mxu0 0.0
        %3257 = vmatpush1.msra.mxu0 0.0
        %3258 = vmatprep.subr.mxu0 0.0
        %3259 = vmatpush1.msra.mxu0 0.0
        %3260 = vmatprep.subr.mxu0 0.0
        %3261 = vmatpush1.msra.mxu0 0.0
        %3262 = vmatprep.subr.mxu0 0.0
        %3263 = vmatpush1.msra.mxu0 0.0
        %3264 = vmatprep.subr.mxu0 0.0
        %3265 = vmatpush1.msra.mxu0 0.0
        %3266 = vmatprep.subr.mxu0 0.0
        %3267 = vmatpush1.msra.mxu0 0.0
        %3268 = vmatprep.subr.mxu0 0.0
        %3269 = vmatpush1.msra.mxu0 0.0
        %3270 = vmatprep.subr.mxu0 0.0
        %3271 = vmatpush1.msra.mxu0 0.0
        %3272 = vmatprep.subr.mxu0 0.0
        %3273 = vmatpush1.msra.mxu0 0.0
        %3274 = vmatprep.subr.mxu0 0.0
        %3275 = vmatpush1.msra.mxu0 0.0
        %3276 = vmatprep.subr.mxu0 0.0
        %3277 = vmatpush1.msra.mxu0 0.0
        %3278 = vmatprep.subr.mxu0 0.0
        %3279 = vmatpush1.msra.mxu0 0.0
        %3280 = vmatprep.subr.mxu0 0.0
        %3281 = vmatpush1.msra.mxu0 0.0
        %3282 = vmatprep.subr.mxu0 0.0
        %3283 = vmatpush1.msra.mxu0 0.0
        %3284 = vmatprep.subr.mxu0 0.0
        %3285 = vmatpush1.msra.mxu0 0.0
        %3286 = vmatprep.subr.mxu0 0.0
        %3287 = vmatpush1.msra.mxu0 0.0
        %3288 = vmatprep.subr.mxu0 0.0
        %3289 = vmatpush1.msra.mxu0 0.0
        %3290 = vmatprep.subr.mxu0 0.0
        %3291 = vmatpush1.msra.mxu0 0.0
        %3292 = vmatprep.mubr.f32.mxu0 0.0
        %3293 = vmatmul.mubr.f32.gmra.mrb[0].mxu0 %v3220
        %v3294 = vpop.f32.mrb[0].mxu0
        %v3295 = vadd.f32 0.0, %v3294
        %v3296 = vpop.f32.mrb[0].mxu0
        %3297 = vmatprep.mubr.f32.mxu0 0.0
        %3298 = vmatmul.mubr.f32.gmra.mrb[0].mxu0 %v3223
        %v3299 = vpop.f32.mrb[0].mxu0
        %v3300 = vadd.f32 0.0, %v3299
        %v3301 = vpop.f32.mrb[0].mxu0
        %3302 = vmatprep.mubr.f32.mxu0 0.0
        %3303 = vmatmul.mubr.f32.gmra.mrb[0].mxu0 %v3226
        %v3304 = vpop.f32.mrb[0].mxu0
        %v3305 = vadd.f32 0.0, %v3304
        %v3306 = vpop.f32.mrb[0].mxu0
        %3307 = vdwg.mxu0
        %3308 = vrot.lane.b32.xlu0 %v474, 48
        %v3309 = vpop.permute.xlu0 %3308
        %3310 = vrot.lane.b32.xlu0 %v479, 48
        %v3311 = vpop.permute.xlu0 %3310
        %3312 = vrot.lane.b32.xlu0 %v484, 48
        %v3313 = vpop.permute.xlu0 %3312
        %v3318 = vsel %vm910, %v3106, 0
        %v3321 = vsel %vm910, %v3107, 0
        %v3324 = vsel %vm910, %v3108, 0
        %3326 = vmatprep.subr.mxu0 0.0
        %3327 = vmatpush1.msra.mxu0 %v3309
        %3328 = vmatprep.subr.mxu0 0.0
        %3329 = vmatpush1.msra.mxu0 %v3311
        %3330 = vmatprep.subr.mxu0 0.0
        %3331 = vmatpush1.msra.mxu0 %v3313
        %3332 = vmatprep.subr.mxu0 0.0
        %3333 = vmatpush1.msra.mxu0 0.0
        %3334 = vmatprep.subr.mxu0 0.0
        %3335 = vmatpush1.msra.mxu0 0.0
        %3336 = vmatprep.subr.mxu0 0.0
        %3337 = vmatpush1.msra.mxu0 0.0
        %3338 = vmatprep.subr.mxu0 0.0
        %3339 = vmatpush1.msra.mxu0 0.0
        %3340 = vmatprep.subr.mxu0 0.0
        %3341 = vmatpush1.msra.mxu0 0.0
        %3342 = vmatprep.subr.mxu0 0.0
        %3343 = vmatpush1.msra.mxu0 0.0
        %3344 = vmatprep.subr.mxu0 0.0
        %3345 = vmatpush1.msra.mxu0 0.0
        %3346 = vmatprep.subr.mxu0 0.0
        %3347 = vmatpush1.msra.mxu0 0.0
        %3348 = vmatprep.subr.mxu0 0.0
        %3349 = vmatpush1.msra.mxu0 0.0
        %3350 = vmatprep.subr.mxu0 0.0
        %3351 = vmatpush1.msra.mxu0 0.0
        %3352 = vmatprep.subr.mxu0 0.0
        %3353 = vmatpush1.msra.mxu0 0.0
        %3354 = vmatprep.subr.mxu0 0.0
        %3355 = vmatpush1.msra.mxu0 0.0
        %3356 = vmatprep.subr.mxu0 0.0
        %3357 = vmatpush1.msra.mxu0 0.0
        %3358 = vmatprep.subr.mxu0 0.0
        %3359 = vmatpush1.msra.mxu0 0.0
        %3360 = vmatprep.subr.mxu0 0.0
        %3361 = vmatpush1.msra.mxu0 0.0
        %3362 = vmatprep.subr.mxu0 0.0
        %3363 = vmatpush1.msra.mxu0 0.0
        %3364 = vmatprep.subr.mxu0 0.0
        %3365 = vmatpush1.msra.mxu0 0.0
        %3366 = vmatprep.subr.mxu0 0.0
        %3367 = vmatpush1.msra.mxu0 0.0
        %3368 = vmatprep.subr.mxu0 0.0
        %3369 = vmatpush1.msra.mxu0 0.0
        %3370 = vmatprep.subr.mxu0 0.0
        %3371 = vmatpush1.msra.mxu0 0.0
        %3372 = vmatprep.subr.mxu0 0.0
        %3373 = vmatpush1.msra.mxu0 0.0
        %3374 = vmatprep.subr.mxu0 0.0
        %3375 = vmatpush1.msra.mxu0 0.0
        %3376 = vmatprep.subr.mxu0 0.0
        %3377 = vmatpush1.msra.mxu0 0.0
        %3378 = vmatprep.subr.mxu0 0.0
        %3379 = vmatpush1.msra.mxu0 0.0
        %3380 = vmatprep.subr.mxu0 0.0
        %3381 = vmatpush1.msra.mxu0 0.0
        %3382 = vmatprep.subr.mxu0 0.0
        %3383 = vmatpush1.msra.mxu0 0.0
        %3384 = vmatprep.subr.mxu0 0.0
        %3385 = vmatpush1.msra.mxu0 0.0
        %3386 = vmatprep.subr.mxu0 0.0
        %3387 = vmatpush1.msra.mxu0 0.0
        %3388 = vmatprep.subr.mxu0 0.0
        %3389 = vmatpush1.msra.mxu0 0.0
        %3390 = vmatprep.mubr.f32.mxu0 0.0
        %3391 = vmatmul.mubr.f32.gmra.mrb[0].mxu0 %v3318
        %v3392 = vpop.f32.mrb[0].mxu0
        %v3393 = vadd.f32 0.0, %v3392
        %v3394 = vpop.f32.mrb[0].mxu0
        %3395 = vmatprep.mubr.f32.mxu0 0.0
        %3396 = vmatmul.mubr.f32.gmra.mrb[0].mxu0 %v3321
        %v3397 = vpop.f32.mrb[0].mxu0
        %v3398 = vadd.f32 0.0, %v3397
        %v3399 = vpop.f32.mrb[0].mxu0
        %3400 = vmatprep.mubr.f32.mxu0 0.0
        %3401 = vmatmul.mubr.f32.gmra.mrb[0].mxu0 %v3324
        %v3402 = vpop.f32.mrb[0].mxu0
        %v3403 = vadd.f32 0.0, %v3402
        %v3404 = vpop.f32.mrb[0].mxu0
        %3405 = vdwg.mxu0
        %3406 = vrot.lane.b32.xlu0 %v489, 48
        %v3407 = vpop.permute.xlu0 %3406
        %3408 = vrot.lane.b32.xlu0 %v494, 48
        %v3409 = vpop.permute.xlu0 %3408
        %3410 = vrot.lane.b32.xlu0 %v499, 48
        %v3411 = vpop.permute.xlu0 %3410
        %v3416 = vsel %vm910, %v3109, 0
        %v3419 = vsel %vm910, %v3110, 0
        %v3422 = vsel %vm910, %v3111, 0
        %3424 = vmatprep.subr.mxu0 0.0
        %3425 = vmatpush1.msra.mxu0 %v3407
        %3426 = vmatprep.subr.mxu0 0.0
        %3427 = vmatpush1.msra.mxu0 %v3409
        %3428 = vmatprep.subr.mxu0 0.0
        %3429 = vmatpush1.msra.mxu0 %v3411
        %3430 = vmatprep.subr.mxu0 0.0
        %3431 = vmatpush1.msra.mxu0 0.0
        %3432 = vmatprep.subr.mxu0 0.0
        %3433 = vmatpush1.msra.mxu0 0.0
        %3434 = vmatprep.subr.mxu0 0.0
        %3435 = vmatpush1.msra.mxu0 0.0
        %3436 = vmatprep.subr.mxu0 0.0
        %3437 = vmatpush1.msra.mxu0 0.0
        %3438 = vmatprep.subr.mxu0 0.0
        %3439 = vmatpush1.msra.mxu0 0.0
        %3440 = vmatprep.subr.mxu0 0.0
        %3441 = vmatpush1.msra.mxu0 0.0
        %3442 = vmatprep.subr.mxu0 0.0
        %3443 = vmatpush1.msra.mxu0 0.0
        %3444 = vmatprep.subr.mxu0 0.0
        %3445 = vmatpush1.msra.mxu0 0.0
        %3446 = vmatprep.subr.mxu0 0.0
        %3447 = vmatpush1.msra.mxu0 0.0
        %3448 = vmatprep.subr.mxu0 0.0
        %3449 = vmatpush1.msra.mxu0 0.0
        %3450 = vmatprep.subr.mxu0 0.0
        %3451 = vmatpush1.msra.mxu0 0.0
        %3452 = vmatprep.subr.mxu0 0.0
        %3453 = vmatpush1.msra.mxu0 0.0
        %3454 = vmatprep.subr.mxu0 0.0
        %3455 = vmatpush1.msra.mxu0 0.0
        %3456 = vmatprep.subr.mxu0 0.0
        %3457 = vmatpush1.msra.mxu0 0.0
        %3458 = vmatprep.subr.mxu0 0.0
        %3459 = vmatpush1.msra.mxu0 0.0
        %3460 = vmatprep.subr.mxu0 0.0
        %3461 = vmatpush1.msra.mxu0 0.0
        %3462 = vmatprep.subr.mxu0 0.0
        %3463 = vmatpush1.msra.mxu0 0.0
        %3464 = vmatprep.subr.mxu0 0.0
        %3465 = vmatpush1.msra.mxu0 0.0
        %3466 = vmatprep.subr.mxu0 0.0
        %3467 = vmatpush1.msra.mxu0 0.0
        %3468 = vmatprep.subr.mxu0 0.0
        %3469 = vmatpush1.msra.mxu0 0.0
        %3470 = vmatprep.subr.mxu0 0.0
        %3471 = vmatpush1.msra.mxu0 0.0
        %3472 = vmatprep.subr.mxu0 0.0
        %3473 = vmatpush1.msra.mxu0 0.0
        %3474 = vmatprep.subr.mxu0 0.0
        %3475 = vmatpush1.msra.mxu0 0.0
        %3476 = vmatprep.subr.mxu0 0.0
        %3477 = vmatpush1.msra.mxu0 0.0
        %3478 = vmatprep.subr.mxu0 0.0
        %3479 = vmatpush1.msra.mxu0 0.0
        %3480 = vmatprep.subr.mxu0 0.0
        %3481 = vmatpush1.msra.mxu0 0.0
        %3482 = vmatprep.subr.mxu0 0.0
        %3483 = vmatpush1.msra.mxu0 0.0
        %3484 = vmatprep.subr.mxu0 0.0
        %3485 = vmatpush1.msra.mxu0 0.0
        %3486 = vmatprep.subr.mxu0 0.0
        %3487 = vmatpush1.msra.mxu0 0.0
        %3488 = vmatprep.mubr.f32.mxu0 0.0
        %3489 = vmatmul.mubr.f32.gmra.mrb[0].mxu0 %v3416
        %v3490 = vpop.f32.mrb[0].mxu0
        %v3491 = vadd.f32 0.0, %v3490
        %v3492 = vpop.f32.mrb[0].mxu0
        %3493 = vmatprep.mubr.f32.mxu0 0.0
        %3494 = vmatmul.mubr.f32.gmra.mrb[0].mxu0 %v3419
        %v3495 = vpop.f32.mrb[0].mxu0
        %v3496 = vadd.f32 0.0, %v3495
        %v3497 = vpop.f32.mrb[0].mxu0
        %3498 = vmatprep.mubr.f32.mxu0 0.0
        %3499 = vmatmul.mubr.f32.gmra.mrb[0].mxu0 %v3422
        %v3500 = vpop.f32.mrb[0].mxu0
        %v3501 = vadd.f32 0.0, %v3500
        %v3502 = vpop.f32.mrb[0].mxu0
        %3503 = vdwg.mxu0
        %3516 = vrot.lane.b32.xlu0 %v3197, 16
        %v3517 = vpop.permute.xlu0 %3516
        %3518 = vrot.lane.b32.xlu0 %v3202, 16
        %v3519 = vpop.permute.xlu0 %3518
        %3520 = vrot.lane.b32.xlu0 %v3207, 16
        %v3521 = vpop.permute.xlu0 %3520
        %3522 = vrot.lane.b32.xlu0 %v3295, 16
        %v3523 = vpop.permute.xlu0 %3522
        %3524 = vrot.lane.b32.xlu0 %v3300, 16
        %v3525 = vpop.permute.xlu0 %3524
        %3526 = vrot.lane.b32.xlu0 %v3305, 16
        %v3527 = vpop.permute.xlu0 %3526
        %3528 = vrot.lane.b32.xlu0 %v3393, 16
        %v3529 = vpop.permute.xlu0 %3528
        %3530 = vrot.lane.b32.xlu0 %v3398, 16
        %v3531 = vpop.permute.xlu0 %3530
        %3532 = vrot.lane.b32.xlu0 %v3403, 16
        %v3533 = vpop.permute.xlu0 %3532
        %3534 = vrot.lane.b32.xlu0 %v3491, 16
        %v3535 = vpop.permute.xlu0 %3534
        %3536 = vrot.lane.b32.xlu0 %v3496, 16
        %v3537 = vpop.permute.xlu0 %3536
        %3538 = vrot.lane.b32.xlu0 %v3501, 16
        %v3539 = vpop.permute.xlu0 %3538
        %vm3552 = vcmask 195712
        %3553 = vst.msk [vmem:[#allocation2] sm:$0xff] %vm3552, %v3517
        %3554 = vst.msk [vmem:[#allocation2 + $0x8] sm:$0xff] %vm3552, %v3519
        %3555 = vst.msk [vmem:[#allocation2 + $0x10] sm:$0xff] %vm3552, %v3521
        %3556 = vst.msk [vmem:[#allocation2 + $0x18] sm:$0xff] %vm3552, %v3523
        %3557 = vst.msk [vmem:[#allocation2 + $0x20] sm:$0xff] %vm3552, %v3525
        %3558 = vst.msk [vmem:[#allocation2 + $0x28] sm:$0xff] %vm3552, %v3527
        %3559 = vst.msk [vmem:[#allocation2 + $0x30] sm:$0xff] %vm3552, %v3529
        %3560 = vst.msk [vmem:[#allocation2 + $0x38] sm:$0xff] %vm3552, %v3531
        %3561 = vst.msk [vmem:[#allocation2 + $0x40] sm:$0xff] %vm3552, %v3533
        %3562 = vst.msk [vmem:[#allocation2 + $0x48] sm:$0xff] %vm3552, %v3535
        %3563 = vst.msk [vmem:[#allocation2 + $0x50] sm:$0xff] %vm3552, %v3537
        %3564 = vst.msk [vmem:[#allocation2 + $0x58] sm:$0xff] %vm3552, %v3539
        %s3565 = scalar_lea.vmem [#allocation8], 72
        %v3566 = vld [vmem:[%s3565] sm:$0xff]
        %v3567 = vld [vmem:[%s3565 + $0x8] sm:$0xff]
        %v3568 = vld [vmem:[%s3565 + $0x10] sm:$0xff]
        %3569 = vrot.lane.b32.xlu0 %v444, 104
        %v3570 = vpop.permute.xlu0 %3569
        %3571 = vrot.lane.b32.xlu0 %v449, 104
        %v3572 = vpop.permute.xlu0 %3571
        %3573 = vrot.lane.b32.xlu0 %v454, 104
        %v3574 = vpop.permute.xlu0 %3573
        %3575 = vrot.lane.b32.xlu0 %v444, 72
        %v3576 = vpop.permute.xlu0 %3575
        %3577 = vrot.lane.b32.xlu0 %v449, 72
        %v3578 = vpop.permute.xlu0 %3577
        %3579 = vrot.lane.b32.xlu0 %v454, 72
        %v3580 = vpop.permute.xlu0 %3579
        %v3581 = vsel %vm514, %v3570, 0
        %v3583 = vsel %vm514, %v3572, 0
        %v3585 = vsel %vm514, %v3574, 0
        %v3587 = vsel %vm514, %v3576, 0
        %v3589 = vsel %vm514, %v3578, 0
        %v3591 = vsel %vm514, %v3580, 0
        %3593 = vmatprep.subr.mxu0 0.0
        %3594 = vmatpush1.xpose.msra.mxu0 %v3587
        %3595 = vmatprep.subr.mxu0 0.0
        %3596 = vmatpush1.xpose.msra.mxu0 %v3589
        %3597 = vmatprep.subr.mxu0 0.0
        %3598 = vmatpush1.xpose.msra.mxu0 %v3591
        %3599 = vmatprep.subr.mxu0 0.0
        %3600 = vmatpush1.xpose.msra.mxu0 0.0
        %3601 = vmatprep.subr.mxu0 0.0
        %3602 = vmatpush1.xpose.msra.mxu0 0.0
        %3603 = vmatprep.subr.mxu0 0.0
        %3604 = vmatpush1.xpose.msra.mxu0 0.0
        %3605 = vmatprep.subr.mxu0 0.0
        %3606 = vmatpush1.xpose.msra.mxu0 0.0
        %3607 = vmatprep.subr.mxu0 0.0
        %3608 = vmatpush1.xpose.msra.mxu0 0.0
        %3609 = vmatprep.subr.mxu0 0.0
        %3610 = vmatpush1.xpose.msra.mxu0 0.0
        %3611 = vmatprep.subr.mxu0 0.0
        %3612 = vmatpush1.xpose.msra.mxu0 0.0
        %3613 = vmatprep.subr.mxu0 0.0
        %3614 = vmatpush1.xpose.msra.mxu0 0.0
        %3615 = vmatprep.subr.mxu0 0.0
        %3616 = vmatpush1.xpose.msra.mxu0 0.0
        %3617 = vmatprep.subr.mxu0 0.0
        %3618 = vmatpush1.xpose.msra.mxu0 0.0
        %3619 = vmatprep.subr.mxu0 0.0
        %3620 = vmatpush1.xpose.msra.mxu0 0.0
        %3621 = vmatprep.subr.mxu0 0.0
        %3622 = vmatpush1.xpose.msra.mxu0 0.0
        %3623 = vmatprep.subr.mxu0 0.0
        %3624 = vmatpush1.xpose.msra.mxu0 0.0
        %3625 = vmatprep.subr.mxu0 0.0
        %3626 = vmatpush1.xpose.msra.mxu0 0.0
        %3627 = vmatprep.subr.mxu0 0.0
        %3628 = vmatpush1.xpose.msra.mxu0 0.0
        %3629 = vmatprep.subr.mxu0 0.0
        %3630 = vmatpush1.xpose.msra.mxu0 0.0
        %3631 = vmatprep.subr.mxu0 0.0
        %3632 = vmatpush1.xpose.msra.mxu0 0.0
        %3633 = vmatprep.subr.mxu0 0.0
        %3634 = vmatpush1.xpose.msra.mxu0 0.0
        %3635 = vmatprep.subr.mxu0 0.0
        %3636 = vmatpush1.xpose.msra.mxu0 0.0
        %3637 = vmatprep.subr.mxu0 0.0
        %3638 = vmatpush1.xpose.msra.mxu0 0.0
        %3639 = vmatprep.subr.mxu0 0.0
        %3640 = vmatpush1.xpose.msra.mxu0 0.0
        %3641 = vmatprep.subr.mxu0 0.0
        %3642 = vmatpush1.xpose.msra.mxu0 0.0
        %3643 = vmatprep.subr.mxu0 0.0
        %3644 = vmatpush1.xpose.msra.mxu0 0.0
        %3645 = vmatprep.subr.mxu0 0.0
        %3646 = vmatpush1.xpose.msra.mxu0 0.0
        %3647 = vmatprep.subr.mxu0 0.0
        %3648 = vmatpush1.xpose.msra.mxu0 0.0
        %3649 = vmatprep.subr.mxu0 0.0
        %3650 = vmatpush1.xpose.msra.mxu0 0.0
        %3651 = vmatprep.subr.mxu0 0.0
        %3652 = vmatpush1.xpose.msra.mxu0 0.0
        %3653 = vmatprep.subr.mxu0 0.0
        %3654 = vmatpush1.xpose.msra.mxu0 0.0
        %3655 = vmatprep.subr.mxu0 0.0
        %3656 = vmatpush1.xpose.msra.mxu0 0.0
        %3657 = vmatprep.mubr.f32.mxu0 0.0
        %3658 = vmatmul.mubr.f32.gmra.mrb[0].mxu0 %v3581
        %v3659 = vpop.f32.mrb[0].mxu0
        %v3660 = vadd.f32 %v3566, %v3659
        %v3661 = vpop.f32.mrb[0].mxu0
        %3662 = vmatprep.mubr.f32.mxu0 0.0
        %3663 = vmatmul.mubr.f32.gmra.mrb[0].mxu0 %v3583
        %v3664 = vpop.f32.mrb[0].mxu0
        %v3665 = vadd.f32 %v3567, %v3664
        %v3666 = vpop.f32.mrb[0].mxu0
        %3667 = vmatprep.mubr.f32.mxu0 0.0
        %3668 = vmatmul.mubr.f32.gmra.mrb[0].mxu0 %v3585
        %v3669 = vpop.f32.mrb[0].mxu0
        %v3670 = vadd.f32 %v3568, %v3669
        %v3671 = vpop.f32.mrb[0].mxu0
        %3672 = vdwg.mxu0
        %3673 = vrot.lane.b32.xlu0 %v459, 104
        %v3674 = vpop.permute.xlu0 %3673
        %3675 = vrot.lane.b32.xlu0 %v464, 104
        %v3676 = vpop.permute.xlu0 %3675
        %3677 = vrot.lane.b32.xlu0 %v469, 104
        %v3678 = vpop.permute.xlu0 %3677
        %3679 = vrot.lane.b32.xlu0 %v459, 72
        %v3680 = vpop.permute.xlu0 %3679
        %3681 = vrot.lane.b32.xlu0 %v464, 72
        %v3682 = vpop.permute.xlu0 %3681
        %3683 = vrot.lane.b32.xlu0 %v469, 72
        %v3684 = vpop.permute.xlu0 %3683
        %v3685 = vsel %vm514, %v3674, 0
        %v3687 = vsel %vm514, %v3676, 0
        %v3689 = vsel %vm514, %v3678, 0
        %v3691 = vsel %vm514, %v3680, 0
        %v3693 = vsel %vm514, %v3682, 0
        %v3695 = vsel %vm514, %v3684, 0
        %3697 = vmatprep.subr.mxu0 0.0
        %3698 = vmatpush1.xpose.msra.mxu0 %v3691
        %3699 = vmatprep.subr.mxu0 0.0
        %3700 = vmatpush1.xpose.msra.mxu0 %v3693
        %3701 = vmatprep.subr.mxu0 0.0
        %3702 = vmatpush1.xpose.msra.mxu0 %v3695
        %3703 = vmatprep.subr.mxu0 0.0
        %3704 = vmatpush1.xpose.msra.mxu0 0.0
        %3705 = vmatprep.subr.mxu0 0.0
        %3706 = vmatpush1.xpose.msra.mxu0 0.0
        %3707 = vmatprep.subr.mxu0 0.0
        %3708 = vmatpush1.xpose.msra.mxu0 0.0
        %3709 = vmatprep.subr.mxu0 0.0
        %3710 = vmatpush1.xpose.msra.mxu0 0.0
        %3711 = vmatprep.subr.mxu0 0.0
        %3712 = vmatpush1.xpose.msra.mxu0 0.0
        %3713 = vmatprep.subr.mxu0 0.0
        %3714 = vmatpush1.xpose.msra.mxu0 0.0
        %3715 = vmatprep.subr.mxu0 0.0
        %3716 = vmatpush1.xpose.msra.mxu0 0.0
        %3717 = vmatprep.subr.mxu0 0.0
        %3718 = vmatpush1.xpose.msra.mxu0 0.0
        %3719 = vmatprep.subr.mxu0 0.0
        %3720 = vmatpush1.xpose.msra.mxu0 0.0
        %3721 = vmatprep.subr.mxu0 0.0
        %3722 = vmatpush1.xpose.msra.mxu0 0.0
        %3723 = vmatprep.subr.mxu0 0.0
        %3724 = vmatpush1.xpose.msra.mxu0 0.0
        %3725 = vmatprep.subr.mxu0 0.0
        %3726 = vmatpush1.xpose.msra.mxu0 0.0
        %3727 = vmatprep.subr.mxu0 0.0
        %3728 = vmatpush1.xpose.msra.mxu0 0.0
        %3729 = vmatprep.subr.mxu0 0.0
        %3730 = vmatpush1.xpose.msra.mxu0 0.0
        %3731 = vmatprep.subr.mxu0 0.0
        %3732 = vmatpush1.xpose.msra.mxu0 0.0
        %3733 = vmatprep.subr.mxu0 0.0
        %3734 = vmatpush1.xpose.msra.mxu0 0.0
        %3735 = vmatprep.subr.mxu0 0.0
        %3736 = vmatpush1.xpose.msra.mxu0 0.0
        %3737 = vmatprep.subr.mxu0 0.0
        %3738 = vmatpush1.xpose.msra.mxu0 0.0
        %3739 = vmatprep.subr.mxu0 0.0
        %3740 = vmatpush1.xpose.msra.mxu0 0.0
        %3741 = vmatprep.subr.mxu0 0.0
        %3742 = vmatpush1.xpose.msra.mxu0 0.0
        %3743 = vmatprep.subr.mxu0 0.0
        %3744 = vmatpush1.xpose.msra.mxu0 0.0
        %3745 = vmatprep.subr.mxu0 0.0
        %3746 = vmatpush1.xpose.msra.mxu0 0.0
        %3747 = vmatprep.subr.mxu0 0.0
        %3748 = vmatpush1.xpose.msra.mxu0 0.0
        %3749 = vmatprep.subr.mxu0 0.0
        %3750 = vmatpush1.xpose.msra.mxu0 0.0
        %3751 = vmatprep.subr.mxu0 0.0
        %3752 = vmatpush1.xpose.msra.mxu0 0.0
        %3753 = vmatprep.subr.mxu0 0.0
        %3754 = vmatpush1.xpose.msra.mxu0 0.0
        %3755 = vmatprep.subr.mxu0 0.0
        %3756 = vmatpush1.xpose.msra.mxu0 0.0
        %3757 = vmatprep.subr.mxu0 0.0
        %3758 = vmatpush1.xpose.msra.mxu0 0.0
        %3759 = vmatprep.subr.mxu0 0.0
        %3760 = vmatpush1.xpose.msra.mxu0 0.0
        %3761 = vmatprep.mubr.f32.mxu0 0.0
        %3762 = vmatmul.mubr.f32.gmra.mrb[0].mxu0 %v3685
        %v3763 = vpop.f32.mrb[0].mxu0
        %v3764 = vadd.f32 %v3566, %v3763
        %v3765 = vpop.f32.mrb[0].mxu0
        %3766 = vmatprep.mubr.f32.mxu0 0.0
        %3767 = vmatmul.mubr.f32.gmra.mrb[0].mxu0 %v3687
        %v3768 = vpop.f32.mrb[0].mxu0
        %v3769 = vadd.f32 %v3567, %v3768
        %v3770 = vpop.f32.mrb[0].mxu0
        %3771 = vmatprep.mubr.f32.mxu0 0.0
        %3772 = vmatmul.mubr.f32.gmra.mrb[0].mxu0 %v3689
        %v3773 = vpop.f32.mrb[0].mxu0
        %v3774 = vadd.f32 %v3568, %v3773
        %v3775 = vpop.f32.mrb[0].mxu0
        %3776 = vdwg.mxu0
        %3777 = vrot.lane.b32.xlu0 %v474, 104
        %v3778 = vpop.permute.xlu0 %3777
        %3779 = vrot.lane.b32.xlu0 %v479, 104
        %v3780 = vpop.permute.xlu0 %3779
        %3781 = vrot.lane.b32.xlu0 %v484, 104
        %v3782 = vpop.permute.xlu0 %3781
        %3783 = vrot.lane.b32.xlu0 %v474, 72
        %v3784 = vpop.permute.xlu0 %3783
        %3785 = vrot.lane.b32.xlu0 %v479, 72
        %v3786 = vpop.permute.xlu0 %3785
        %3787 = vrot.lane.b32.xlu0 %v484, 72
        %v3788 = vpop.permute.xlu0 %3787
        %v3789 = vsel %vm514, %v3778, 0
        %v3791 = vsel %vm514, %v3780, 0
        %v3793 = vsel %vm514, %v3782, 0
        %v3795 = vsel %vm514, %v3784, 0
        %v3797 = vsel %vm514, %v3786, 0
        %v3799 = vsel %vm514, %v3788, 0
        %3801 = vmatprep.subr.mxu0 0.0
        %3802 = vmatpush1.xpose.msra.mxu0 %v3795
        %3803 = vmatprep.subr.mxu0 0.0
        %3804 = vmatpush1.xpose.msra.mxu0 %v3797
        %3805 = vmatprep.subr.mxu0 0.0
        %3806 = vmatpush1.xpose.msra.mxu0 %v3799
        %3807 = vmatprep.subr.mxu0 0.0
        %3808 = vmatpush1.xpose.msra.mxu0 0.0
        %3809 = vmatprep.subr.mxu0 0.0
        %3810 = vmatpush1.xpose.msra.mxu0 0.0
        %3811 = vmatprep.subr.mxu0 0.0
        %3812 = vmatpush1.xpose.msra.mxu0 0.0
        %3813 = vmatprep.subr.mxu0 0.0
        %3814 = vmatpush1.xpose.msra.mxu0 0.0
        %3815 = vmatprep.subr.mxu0 0.0
        %3816 = vmatpush1.xpose.msra.mxu0 0.0
        %3817 = vmatprep.subr.mxu0 0.0
        %3818 = vmatpush1.xpose.msra.mxu0 0.0
        %3819 = vmatprep.subr.mxu0 0.0
        %3820 = vmatpush1.xpose.msra.mxu0 0.0
        %3821 = vmatprep.subr.mxu0 0.0
        %3822 = vmatpush1.xpose.msra.mxu0 0.0
        %3823 = vmatprep.subr.mxu0 0.0
        %3824 = vmatpush1.xpose.msra.mxu0 0.0
        %3825 = vmatprep.subr.mxu0 0.0
        %3826 = vmatpush1.xpose.msra.mxu0 0.0
        %3827 = vmatprep.subr.mxu0 0.0
        %3828 = vmatpush1.xpose.msra.mxu0 0.0
        %3829 = vmatprep.subr.mxu0 0.0
        %3830 = vmatpush1.xpose.msra.mxu0 0.0
        %3831 = vmatprep.subr.mxu0 0.0
        %3832 = vmatpush1.xpose.msra.mxu0 0.0
        %3833 = vmatprep.subr.mxu0 0.0
        %3834 = vmatpush1.xpose.msra.mxu0 0.0
        %3835 = vmatprep.subr.mxu0 0.0
        %3836 = vmatpush1.xpose.msra.mxu0 0.0
        %3837 = vmatprep.subr.mxu0 0.0
        %3838 = vmatpush1.xpose.msra.mxu0 0.0
        %3839 = vmatprep.subr.mxu0 0.0
        %3840 = vmatpush1.xpose.msra.mxu0 0.0
        %3841 = vmatprep.subr.mxu0 0.0
        %3842 = vmatpush1.xpose.msra.mxu0 0.0
        %3843 = vmatprep.subr.mxu0 0.0
        %3844 = vmatpush1.xpose.msra.mxu0 0.0
        %3845 = vmatprep.subr.mxu0 0.0
        %3846 = vmatpush1.xpose.msra.mxu0 0.0
        %3847 = vmatprep.subr.mxu0 0.0
        %3848 = vmatpush1.xpose.msra.mxu0 0.0
        %3849 = vmatprep.subr.mxu0 0.0
        %3850 = vmatpush1.xpose.msra.mxu0 0.0
        %3851 = vmatprep.subr.mxu0 0.0
        %3852 = vmatpush1.xpose.msra.mxu0 0.0
        %3853 = vmatprep.subr.mxu0 0.0
        %3854 = vmatpush1.xpose.msra.mxu0 0.0
        %3855 = vmatprep.subr.mxu0 0.0
        %3856 = vmatpush1.xpose.msra.mxu0 0.0
        %3857 = vmatprep.subr.mxu0 0.0
        %3858 = vmatpush1.xpose.msra.mxu0 0.0
        %3859 = vmatprep.subr.mxu0 0.0
        %3860 = vmatpush1.xpose.msra.mxu0 0.0
        %3861 = vmatprep.subr.mxu0 0.0
        %3862 = vmatpush1.xpose.msra.mxu0 0.0
        %3863 = vmatprep.subr.mxu0 0.0
        %3864 = vmatpush1.xpose.msra.mxu0 0.0
        %3865 = vmatprep.mubr.f32.mxu0 0.0
        %3866 = vmatmul.mubr.f32.gmra.mrb[0].mxu0 %v3789
        %v3867 = vpop.f32.mrb[0].mxu0
        %v3868 = vadd.f32 %v3566, %v3867
        %v3869 = vpop.f32.mrb[0].mxu0
        %3870 = vmatprep.mubr.f32.mxu0 0.0
        %3871 = vmatmul.mubr.f32.gmra.mrb[0].mxu0 %v3791
        %v3872 = vpop.f32.mrb[0].mxu0
        %v3873 = vadd.f32 %v3567, %v3872
        %v3874 = vpop.f32.mrb[0].mxu0
        %3875 = vmatprep.mubr.f32.mxu0 0.0
        %3876 = vmatmul.mubr.f32.gmra.mrb[0].mxu0 %v3793
        %v3877 = vpop.f32.mrb[0].mxu0
        %v3878 = vadd.f32 %v3568, %v3877
        %v3879 = vpop.f32.mrb[0].mxu0
        %3880 = vdwg.mxu0
        %3881 = vrot.lane.b32.xlu0 %v489, 104
        %v3882 = vpop.permute.xlu0 %3881
        %3883 = vrot.lane.b32.xlu0 %v494, 104
        %v3884 = vpop.permute.xlu0 %3883
        %3885 = vrot.lane.b32.xlu0 %v499, 104
        %v3886 = vpop.permute.xlu0 %3885
        %3887 = vrot.lane.b32.xlu0 %v489, 72
        %v3888 = vpop.permute.xlu0 %3887
        %3889 = vrot.lane.b32.xlu0 %v494, 72
        %v3890 = vpop.permute.xlu0 %3889
        %3891 = vrot.lane.b32.xlu0 %v499, 72
        %v3892 = vpop.permute.xlu0 %3891
        %v3893 = vsel %vm514, %v3882, 0
        %v3895 = vsel %vm514, %v3884, 0
        %v3897 = vsel %vm514, %v3886, 0
        %v3899 = vsel %vm514, %v3888, 0
        %v3901 = vsel %vm514, %v3890, 0
        %v3903 = vsel %vm514, %v3892, 0
        %3905 = vmatprep.subr.mxu0 0.0
        %3906 = vmatpush1.xpose.msra.mxu0 %v3899
        %3907 = vmatprep.subr.mxu0 0.0
        %3908 = vmatpush1.xpose.msra.mxu0 %v3901
        %3909 = vmatprep.subr.mxu0 0.0
        %3910 = vmatpush1.xpose.msra.mxu0 %v3903
        %3911 = vmatprep.subr.mxu0 0.0
        %3912 = vmatpush1.xpose.msra.mxu0 0.0
        %3913 = vmatprep.subr.mxu0 0.0
        %3914 = vmatpush1.xpose.msra.mxu0 0.0
        %3915 = vmatprep.subr.mxu0 0.0
        %3916 = vmatpush1.xpose.msra.mxu0 0.0
        %3917 = vmatprep.subr.mxu0 0.0
        %3918 = vmatpush1.xpose.msra.mxu0 0.0
        %3919 = vmatprep.subr.mxu0 0.0
        %3920 = vmatpush1.xpose.msra.mxu0 0.0
        %3921 = vmatprep.subr.mxu0 0.0
        %3922 = vmatpush1.xpose.msra.mxu0 0.0
        %3923 = vmatprep.subr.mxu0 0.0
        %3924 = vmatpush1.xpose.msra.mxu0 0.0
        %3925 = vmatprep.subr.mxu0 0.0
        %3926 = vmatpush1.xpose.msra.mxu0 0.0
        %3927 = vmatprep.subr.mxu0 0.0
        %3928 = vmatpush1.xpose.msra.mxu0 0.0
        %3929 = vmatprep.subr.mxu0 0.0
        %3930 = vmatpush1.xpose.msra.mxu0 0.0
        %3931 = vmatprep.subr.mxu0 0.0
        %3932 = vmatpush1.xpose.msra.mxu0 0.0
        %3933 = vmatprep.subr.mxu0 0.0
        %3934 = vmatpush1.xpose.msra.mxu0 0.0
        %3935 = vmatprep.subr.mxu0 0.0
        %3936 = vmatpush1.xpose.msra.mxu0 0.0
        %3937 = vmatprep.subr.mxu0 0.0
        %3938 = vmatpush1.xpose.msra.mxu0 0.0
        %3939 = vmatprep.subr.mxu0 0.0
        %3940 = vmatpush1.xpose.msra.mxu0 0.0
        %3941 = vmatprep.subr.mxu0 0.0
        %3942 = vmatpush1.xpose.msra.mxu0 0.0
        %3943 = vmatprep.subr.mxu0 0.0
        %3944 = vmatpush1.xpose.msra.mxu0 0.0
        %3945 = vmatprep.subr.mxu0 0.0
        %3946 = vmatpush1.xpose.msra.mxu0 0.0
        %3947 = vmatprep.subr.mxu0 0.0
        %3948 = vmatpush1.xpose.msra.mxu0 0.0
        %3949 = vmatprep.subr.mxu0 0.0
        %3950 = vmatpush1.xpose.msra.mxu0 0.0
        %3951 = vmatprep.subr.mxu0 0.0
        %3952 = vmatpush1.xpose.msra.mxu0 0.0
        %3953 = vmatprep.subr.mxu0 0.0
        %3954 = vmatpush1.xpose.msra.mxu0 0.0
        %3955 = vmatprep.subr.mxu0 0.0
        %3956 = vmatpush1.xpose.msra.mxu0 0.0
        %3957 = vmatprep.subr.mxu0 0.0
        %3958 = vmatpush1.xpose.msra.mxu0 0.0
        %3959 = vmatprep.subr.mxu0 0.0
        %3960 = vmatpush1.xpose.msra.mxu0 0.0
        %3961 = vmatprep.subr.mxu0 0.0
        %3962 = vmatpush1.xpose.msra.mxu0 0.0
        %3963 = vmatprep.subr.mxu0 0.0
        %3964 = vmatpush1.xpose.msra.mxu0 0.0
        %3965 = vmatprep.subr.mxu0 0.0
        %3966 = vmatpush1.xpose.msra.mxu0 0.0
        %3967 = vmatprep.subr.mxu0 0.0
        %3968 = vmatpush1.xpose.msra.mxu0 0.0
        %3969 = vmatprep.mubr.f32.mxu0 0.0
        %3970 = vmatmul.mubr.f32.gmra.mrb[0].mxu0 %v3893
        %v3971 = vpop.f32.mrb[0].mxu0
        %v3972 = vadd.f32 %v3566, %v3971
        %v3973 = vpop.f32.mrb[0].mxu0
        %3974 = vmatprep.mubr.f32.mxu0 0.0
        %3975 = vmatmul.mubr.f32.gmra.mrb[0].mxu0 %v3895
        %v3976 = vpop.f32.mrb[0].mxu0
        %v3977 = vadd.f32 %v3567, %v3976
        %v3978 = vpop.f32.mrb[0].mxu0
        %3979 = vmatprep.mubr.f32.mxu0 0.0
        %3980 = vmatmul.mubr.f32.gmra.mrb[0].mxu0 %v3897
        %v3981 = vpop.f32.mrb[0].mxu0
        %v3982 = vadd.f32 %v3568, %v3981
        %v3983 = vpop.f32.mrb[0].mxu0
        %3984 = vdwg.mxu0
        %v3985 = vsel %vm910, %v3660, -inf
        %3986 = vmax.xlane.f32.xlu0 %v3985
        %v3987 = vpop.xlane.xlu0 %3986
        %v3988 = vsel %vm910, %v3665, -inf
        %3989 = vmax.xlane.f32.xlu0 %v3988
        %v3990 = vpop.xlane.xlu0 %3989
        %v3991 = vsel %vm910, %v3670, -inf
        %3992 = vmax.xlane.f32.xlu0 %v3991
        %v3993 = vpop.xlane.xlu0 %3992
        %v3994 = vsel %vm910, %v3764, -inf
        %3995 = vmax.xlane.f32.xlu0 %v3994
        %v3996 = vpop.xlane.xlu0 %3995
        %v3997 = vsel %vm910, %v3769, -inf
        %3998 = vmax.xlane.f32.xlu0 %v3997
        %v3999 = vpop.xlane.xlu0 %3998
        %v4000 = vsel %vm910, %v3774, -inf
        %4001 = vmax.xlane.f32.xlu0 %v4000
        %v4002 = vpop.xlane.xlu0 %4001
        %v4003 = vsel %vm910, %v3868, -inf
        %4004 = vmax.xlane.f32.xlu0 %v4003
        %v4005 = vpop.xlane.xlu0 %4004
        %v4006 = vsel %vm910, %v3873, -inf
        %4007 = vmax.xlane.f32.xlu0 %v4006
        %v4008 = vpop.xlane.xlu0 %4007
        %v4009 = vsel %vm910, %v3878, -inf
        %4010 = vmax.xlane.f32.xlu0 %v4009
        %v4011 = vpop.xlane.xlu0 %4010
        %v4012 = vsel %vm910, %v3972, -inf
        %4013 = vmax.xlane.f32.xlu0 %v4012
        %v4014 = vpop.xlane.xlu0 %4013
        %v4015 = vsel %vm910, %v3977, -inf
        %4016 = vmax.xlane.f32.xlu0 %v4015
        %v4017 = vpop.xlane.xlu0 %4016
        %v4018 = vsel %vm910, %v3982, -inf
        %4019 = vmax.xlane.f32.xlu0 %v4018
        %v4020 = vpop.xlane.xlu0 %4019
        %v4021 = vsub.f32 %v3660, %v3987
        %v4022 = vsub.f32 %v3665, %v3990
        %v4023 = vsub.f32 %v3670, %v3993
        %v4024 = vsub.f32 %v3764, %v3996
        %v4025 = vsub.f32 %v3769, %v3999
        %v4026 = vsub.f32 %v3774, %v4002
        %v4027 = vsub.f32 %v3868, %v4005
        %v4028 = vsub.f32 %v3873, %v4008
        %v4029 = vsub.f32 %v3878, %v4011
        %v4030 = vsub.f32 %v3972, %v4014
        %v4031 = vsub.f32 %v3977, %v4017
        %v4032 = vsub.f32 %v3982, %v4020
        %v4033 = vmul.f32 %v4021, 1.442695
        %v4034 = vpow.pop %v4033
        %v4035 = vmul.f32 %v4022, 1.442695
        %v4036 = vpow.pop %v4035
        %v4037 = vmul.f32 %v4023, 1.442695
        %v4038 = vpow.pop %v4037
        %v4039 = vmul.f32 %v4024, 1.442695
        %v4040 = vpow.pop %v4039
        %v4041 = vmul.f32 %v4025, 1.442695
        %v4042 = vpow.pop %v4041
        %v4043 = vmul.f32 %v4026, 1.442695
        %v4044 = vpow.pop %v4043
        %v4045 = vmul.f32 %v4027, 1.442695
        %v4046 = vpow.pop %v4045
        %v4047 = vmul.f32 %v4028, 1.442695
        %v4048 = vpow.pop %v4047
        %v4049 = vmul.f32 %v4029, 1.442695
        %v4050 = vpow.pop %v4049
        %v4051 = vmul.f32 %v4030, 1.442695
        %v4052 = vpow.pop %v4051
        %v4053 = vmul.f32 %v4031, 1.442695
        %v4054 = vpow.pop %v4053
        %v4055 = vmul.f32 %v4032, 1.442695
        %v4056 = vpow.pop %v4055
        %v4057 = vsel %vm910, %v4034, 0.0
        %4058 = vadd.xlane.f32.xlu0 %v4057
        %v4059 = vpop.xlane.xlu0 %4058
        %v4060 = vsel %vm910, %v4036, 0.0
        %4061 = vadd.xlane.f32.xlu0 %v4060
        %v4062 = vpop.xlane.xlu0 %4061
        %v4063 = vsel %vm910, %v4038, 0.0
        %4064 = vadd.xlane.f32.xlu0 %v4063
        %v4065 = vpop.xlane.xlu0 %4064
        %v4066 = vsel %vm910, %v4040, 0.0
        %4067 = vadd.xlane.f32.xlu0 %v4066
        %v4068 = vpop.xlane.xlu0 %4067
        %v4069 = vsel %vm910, %v4042, 0.0
        %4070 = vadd.xlane.f32.xlu0 %v4069
        %v4071 = vpop.xlane.xlu0 %4070
        %v4072 = vsel %vm910, %v4044, 0.0
        %4073 = vadd.xlane.f32.xlu0 %v4072
        %v4074 = vpop.xlane.xlu0 %4073
        %v4075 = vsel %vm910, %v4046, 0.0
        %4076 = vadd.xlane.f32.xlu0 %v4075
        %v4077 = vpop.xlane.xlu0 %4076
        %v4078 = vsel %vm910, %v4048, 0.0
        %4079 = vadd.xlane.f32.xlu0 %v4078
        %v4080 = vpop.xlane.xlu0 %4079
        %v4081 = vsel %vm910, %v4050, 0.0
        %4082 = vadd.xlane.f32.xlu0 %v4081
        %v4083 = vpop.xlane.xlu0 %4082
        %v4084 = vsel %vm910, %v4052, 0.0
        %4085 = vadd.xlane.f32.xlu0 %v4084
        %v4086 = vpop.xlane.xlu0 %4085
        %v4087 = vsel %vm910, %v4054, 0.0
        %4088 = vadd.xlane.f32.xlu0 %v4087
        %v4089 = vpop.xlane.xlu0 %4088
        %v4090 = vsel %vm910, %v4056, 0.0
        %4091 = vadd.xlane.f32.xlu0 %v4090
        %v4092 = vpop.xlane.xlu0 %4091
        %v4093 = vrcp.pop %v4059
        %v4094 = vrcp.pop %v4062
        %v4095 = vrcp.pop %v4065
        %v4096 = vrcp.pop %v4068
        %v4097 = vrcp.pop %v4071
        %v4098 = vrcp.pop %v4074
        %v4099 = vrcp.pop %v4077
        %v4100 = vrcp.pop %v4080
        %v4101 = vrcp.pop %v4083
        %v4102 = vrcp.pop %v4086
        %v4103 = vrcp.pop %v4089
        %v4104 = vrcp.pop %v4092
        %v4105 = vmul.f32 %v4059, %v4093
        %v4106 = vmul.f32 %v4062, %v4094
        %v4107 = vmul.f32 %v4065, %v4095
        %v4108 = vmul.f32 %v4068, %v4096
        %v4109 = vmul.f32 %v4071, %v4097
        %v4110 = vmul.f32 %v4074, %v4098
        %v4111 = vmul.f32 %v4077, %v4099
        %v4112 = vmul.f32 %v4080, %v4100
        %v4113 = vmul.f32 %v4083, %v4101
        %v4114 = vmul.f32 %v4086, %v4102
        %v4115 = vmul.f32 %v4089, %v4103
        %v4116 = vmul.f32 %v4092, %v4104
        %v4117 = vsub.f32 2.0, %v4105
        %v4118 = vsub.f32 2.0, %v4106
        %v4119 = vsub.f32 2.0, %v4107
        %v4120 = vsub.f32 2.0, %v4108
        %v4121 = vsub.f32 2.0, %v4109
        %v4122 = vsub.f32 2.0, %v4110
        %v4123 = vsub.f32 2.0, %v4111
        %v4124 = vsub.f32 2.0, %v4112
        %v4125 = vsub.f32 2.0, %v4113
        %v4126 = vsub.f32 2.0, %v4114
        %v4127 = vsub.f32 2.0, %v4115
        %v4128 = vsub.f32 2.0, %v4116
        %v4129 = vmul.f32 %v4093, %v4117
        %v4130 = vmul.f32 %v4094, %v4118
        %v4131 = vmul.f32 %v4095, %v4119
        %v4132 = vmul.f32 %v4096, %v4120
        %v4133 = vmul.f32 %v4097, %v4121
        %v4134 = vmul.f32 %v4098, %v4122
        %v4135 = vmul.f32 %v4099, %v4123
        %v4136 = vmul.f32 %v4100, %v4124
        %v4137 = vmul.f32 %v4101, %v4125
        %v4138 = vmul.f32 %v4102, %v4126
        %v4139 = vmul.f32 %v4103, %v4127
        %v4140 = vmul.f32 %v4104, %v4128
        %v4141 = vmul.f32 %v4034, %v4129
        %v4142 = vmul.f32 %v4036, %v4130
        %v4143 = vmul.f32 %v4038, %v4131
        %v4144 = vmul.f32 %v4040, %v4132
        %v4145 = vmul.f32 %v4042, %v4133
        %v4146 = vmul.f32 %v4044, %v4134
        %v4147 = vmul.f32 %v4046, %v4135
        %v4148 = vmul.f32 %v4048, %v4136
        %v4149 = vmul.f32 %v4050, %v4137
        %v4150 = vmul.f32 %v4052, %v4138
        %v4151 = vmul.f32 %v4054, %v4139
        %v4152 = vmul.f32 %v4056, %v4140
        %4153 = vrot.lane.b32.xlu0 %v444, 40
        %v4154 = vpop.permute.xlu0 %4153
        %4155 = vrot.lane.b32.xlu0 %v449, 40
        %v4156 = vpop.permute.xlu0 %4155
        %4157 = vrot.lane.b32.xlu0 %v454, 40
        %v4158 = vpop.permute.xlu0 %4157
        %v4163 = vsel %vm910, %v4141, 0
        %v4166 = vsel %vm910, %v4142, 0
        %v4169 = vsel %vm910, %v4143, 0
        %4171 = vmatprep.subr.mxu0 0.0
        %4172 = vmatpush1.msra.mxu0 %v4154
        %4173 = vmatprep.subr.mxu0 0.0
        %4174 = vmatpush1.msra.mxu0 %v4156
        %4175 = vmatprep.subr.mxu0 0.0
        %4176 = vmatpush1.msra.mxu0 %v4158
        %4177 = vmatprep.subr.mxu0 0.0
        %4178 = vmatpush1.msra.mxu0 0.0
        %4179 = vmatprep.subr.mxu0 0.0
        %4180 = vmatpush1.msra.mxu0 0.0
        %4181 = vmatprep.subr.mxu0 0.0
        %4182 = vmatpush1.msra.mxu0 0.0
        %4183 = vmatprep.subr.mxu0 0.0
        %4184 = vmatpush1.msra.mxu0 0.0
        %4185 = vmatprep.subr.mxu0 0.0
        %4186 = vmatpush1.msra.mxu0 0.0
        %4187 = vmatprep.subr.mxu0 0.0
        %4188 = vmatpush1.msra.mxu0 0.0
        %4189 = vmatprep.subr.mxu0 0.0
        %4190 = vmatpush1.msra.mxu0 0.0
        %4191 = vmatprep.subr.mxu0 0.0
        %4192 = vmatpush1.msra.mxu0 0.0
        %4193 = vmatprep.subr.mxu0 0.0
        %4194 = vmatpush1.msra.mxu0 0.0
        %4195 = vmatprep.subr.mxu0 0.0
        %4196 = vmatpush1.msra.mxu0 0.0
        %4197 = vmatprep.subr.mxu0 0.0
        %4198 = vmatpush1.msra.mxu0 0.0
        %4199 = vmatprep.subr.mxu0 0.0
        %4200 = vmatpush1.msra.mxu0 0.0
        %4201 = vmatprep.subr.mxu0 0.0
        %4202 = vmatpush1.msra.mxu0 0.0
        %4203 = vmatprep.subr.mxu0 0.0
        %4204 = vmatpush1.msra.mxu0 0.0
        %4205 = vmatprep.subr.mxu0 0.0
        %4206 = vmatpush1.msra.mxu0 0.0
        %4207 = vmatprep.subr.mxu0 0.0
        %4208 = vmatpush1.msra.mxu0 0.0
        %4209 = vmatprep.subr.mxu0 0.0
        %4210 = vmatpush1.msra.mxu0 0.0
        %4211 = vmatprep.subr.mxu0 0.0
        %4212 = vmatpush1.msra.mxu0 0.0
        %4213 = vmatprep.subr.mxu0 0.0
        %4214 = vmatpush1.msra.mxu0 0.0
        %4215 = vmatprep.subr.mxu0 0.0
        %4216 = vmatpush1.msra.mxu0 0.0
        %4217 = vmatprep.subr.mxu0 0.0
        %4218 = vmatpush1.msra.mxu0 0.0
        %4219 = vmatprep.subr.mxu0 0.0
        %4220 = vmatpush1.msra.mxu0 0.0
        %4221 = vmatprep.subr.mxu0 0.0
        %4222 = vmatpush1.msra.mxu0 0.0
        %4223 = vmatprep.subr.mxu0 0.0
        %4224 = vmatpush1.msra.mxu0 0.0
        %4225 = vmatprep.subr.mxu0 0.0
        %4226 = vmatpush1.msra.mxu0 0.0
        %4227 = vmatprep.subr.mxu0 0.0
        %4228 = vmatpush1.msra.mxu0 0.0
        %4229 = vmatprep.subr.mxu0 0.0
        %4230 = vmatpush1.msra.mxu0 0.0
        %4231 = vmatprep.subr.mxu0 0.0
        %4232 = vmatpush1.msra.mxu0 0.0
        %4233 = vmatprep.subr.mxu0 0.0
        %4234 = vmatpush1.msra.mxu0 0.0
        %4235 = vmatprep.mubr.f32.mxu0 0.0
        %4236 = vmatmul.mubr.f32.gmra.mrb[0].mxu0 %v4163
        %v4237 = vpop.f32.mrb[0].mxu0
        %v4238 = vadd.f32 0.0, %v4237
        %v4239 = vpop.f32.mrb[0].mxu0
        %4240 = vmatprep.mubr.f32.mxu0 0.0
        %4241 = vmatmul.mubr.f32.gmra.mrb[0].mxu0 %v4166
        %v4242 = vpop.f32.mrb[0].mxu0
        %v4243 = vadd.f32 0.0, %v4242
        %v4244 = vpop.f32.mrb[0].mxu0
        %4245 = vmatprep.mubr.f32.mxu0 0.0
        %4246 = vmatmul.mubr.f32.gmra.mrb[0].mxu0 %v4169
        %v4247 = vpop.f32.mrb[0].mxu0
        %v4248 = vadd.f32 0.0, %v4247
        %v4249 = vpop.f32.mrb[0].mxu0
        %4250 = vdwg.mxu0
        %4251 = vrot.lane.b32.xlu0 %v459, 40
        %v4252 = vpop.permute.xlu0 %4251
        %4253 = vrot.lane.b32.xlu0 %v464, 40
        %v4254 = vpop.permute.xlu0 %4253
        %4255 = vrot.lane.b32.xlu0 %v469, 40
        %v4256 = vpop.permute.xlu0 %4255
        %v4261 = vsel %vm910, %v4144, 0
        %v4264 = vsel %vm910, %v4145, 0
        %v4267 = vsel %vm910, %v4146, 0
        %4269 = vmatprep.subr.mxu0 0.0
        %4270 = vmatpush1.msra.mxu0 %v4252
        %4271 = vmatprep.subr.mxu0 0.0
        %4272 = vmatpush1.msra.mxu0 %v4254
        %4273 = vmatprep.subr.mxu0 0.0
        %4274 = vmatpush1.msra.mxu0 %v4256
        %4275 = vmatprep.subr.mxu0 0.0
        %4276 = vmatpush1.msra.mxu0 0.0
        %4277 = vmatprep.subr.mxu0 0.0
        %4278 = vmatpush1.msra.mxu0 0.0
        %4279 = vmatprep.subr.mxu0 0.0
        %4280 = vmatpush1.msra.mxu0 0.0
        %4281 = vmatprep.subr.mxu0 0.0
        %4282 = vmatpush1.msra.mxu0 0.0
        %4283 = vmatprep.subr.mxu0 0.0
        %4284 = vmatpush1.msra.mxu0 0.0
        %4285 = vmatprep.subr.mxu0 0.0
        %4286 = vmatpush1.msra.mxu0 0.0
        %4287 = vmatprep.subr.mxu0 0.0
        %4288 = vmatpush1.msra.mxu0 0.0
        %4289 = vmatprep.subr.mxu0 0.0
        %4290 = vmatpush1.msra.mxu0 0.0
        %4291 = vmatprep.subr.mxu0 0.0
        %4292 = vmatpush1.msra.mxu0 0.0
        %4293 = vmatprep.subr.mxu0 0.0
        %4294 = vmatpush1.msra.mxu0 0.0
        %4295 = vmatprep.subr.mxu0 0.0
        %4296 = vmatpush1.msra.mxu0 0.0
        %4297 = vmatprep.subr.mxu0 0.0
        %4298 = vmatpush1.msra.mxu0 0.0
        %4299 = vmatprep.subr.mxu0 0.0
        %4300 = vmatpush1.msra.mxu0 0.0
        %4301 = vmatprep.subr.mxu0 0.0
        %4302 = vmatpush1.msra.mxu0 0.0
        %4303 = vmatprep.subr.mxu0 0.0
        %4304 = vmatpush1.msra.mxu0 0.0
        %4305 = vmatprep.subr.mxu0 0.0
        %4306 = vmatpush1.msra.mxu0 0.0
        %4307 = vmatprep.subr.mxu0 0.0
        %4308 = vmatpush1.msra.mxu0 0.0
        %4309 = vmatprep.subr.mxu0 0.0
        %4310 = vmatpush1.msra.mxu0 0.0
        %4311 = vmatprep.subr.mxu0 0.0
        %4312 = vmatpush1.msra.mxu0 0.0
        %4313 = vmatprep.subr.mxu0 0.0
        %4314 = vmatpush1.msra.mxu0 0.0
        %4315 = vmatprep.subr.mxu0 0.0
        %4316 = vmatpush1.msra.mxu0 0.0
        %4317 = vmatprep.subr.mxu0 0.0
        %4318 = vmatpush1.msra.mxu0 0.0
        %4319 = vmatprep.subr.mxu0 0.0
        %4320 = vmatpush1.msra.mxu0 0.0
        %4321 = vmatprep.subr.mxu0 0.0
        %4322 = vmatpush1.msra.mxu0 0.0
        %4323 = vmatprep.subr.mxu0 0.0
        %4324 = vmatpush1.msra.mxu0 0.0
        %4325 = vmatprep.subr.mxu0 0.0
        %4326 = vmatpush1.msra.mxu0 0.0
        %4327 = vmatprep.subr.mxu0 0.0
        %4328 = vmatpush1.msra.mxu0 0.0
        %4329 = vmatprep.subr.mxu0 0.0
        %4330 = vmatpush1.msra.mxu0 0.0
        %4331 = vmatprep.subr.mxu0 0.0
        %4332 = vmatpush1.msra.mxu0 0.0
        %4333 = vmatprep.mubr.f32.mxu0 0.0
        %4334 = vmatmul.mubr.f32.gmra.mrb[0].mxu0 %v4261
        %v4335 = vpop.f32.mrb[0].mxu0
        %v4336 = vadd.f32 0.0, %v4335
        %v4337 = vpop.f32.mrb[0].mxu0
        %4338 = vmatprep.mubr.f32.mxu0 0.0
        %4339 = vmatmul.mubr.f32.gmra.mrb[0].mxu0 %v4264
        %v4340 = vpop.f32.mrb[0].mxu0
        %v4341 = vadd.f32 0.0, %v4340
        %v4342 = vpop.f32.mrb[0].mxu0
        %4343 = vmatprep.mubr.f32.mxu0 0.0
        %4344 = vmatmul.mubr.f32.gmra.mrb[0].mxu0 %v4267
        %v4345 = vpop.f32.mrb[0].mxu0
        %v4346 = vadd.f32 0.0, %v4345
        %v4347 = vpop.f32.mrb[0].mxu0
        %4348 = vdwg.mxu0
        %4349 = vrot.lane.b32.xlu0 %v474, 40
        %v4350 = vpop.permute.xlu0 %4349
        %4351 = vrot.lane.b32.xlu0 %v479, 40
        %v4352 = vpop.permute.xlu0 %4351
        %4353 = vrot.lane.b32.xlu0 %v484, 40
        %v4354 = vpop.permute.xlu0 %4353
        %v4359 = vsel %vm910, %v4147, 0
        %v4362 = vsel %vm910, %v4148, 0
        %v4365 = vsel %vm910, %v4149, 0
        %4367 = vmatprep.subr.mxu0 0.0
        %4368 = vmatpush1.msra.mxu0 %v4350
        %4369 = vmatprep.subr.mxu0 0.0
        %4370 = vmatpush1.msra.mxu0 %v4352
        %4371 = vmatprep.subr.mxu0 0.0
        %4372 = vmatpush1.msra.mxu0 %v4354
        %4373 = vmatprep.subr.mxu0 0.0
        %4374 = vmatpush1.msra.mxu0 0.0
        %4375 = vmatprep.subr.mxu0 0.0
        %4376 = vmatpush1.msra.mxu0 0.0
        %4377 = vmatprep.subr.mxu0 0.0
        %4378 = vmatpush1.msra.mxu0 0.0
        %4379 = vmatprep.subr.mxu0 0.0
        %4380 = vmatpush1.msra.mxu0 0.0
        %4381 = vmatprep.subr.mxu0 0.0
        %4382 = vmatpush1.msra.mxu0 0.0
        %4383 = vmatprep.subr.mxu0 0.0
        %4384 = vmatpush1.msra.mxu0 0.0
        %4385 = vmatprep.subr.mxu0 0.0
        %4386 = vmatpush1.msra.mxu0 0.0
        %4387 = vmatprep.subr.mxu0 0.0
        %4388 = vmatpush1.msra.mxu0 0.0
        %4389 = vmatprep.subr.mxu0 0.0
        %4390 = vmatpush1.msra.mxu0 0.0
        %4391 = vmatprep.subr.mxu0 0.0
        %4392 = vmatpush1.msra.mxu0 0.0
        %4393 = vmatprep.subr.mxu0 0.0
        %4394 = vmatpush1.msra.mxu0 0.0
        %4395 = vmatprep.subr.mxu0 0.0
        %4396 = vmatpush1.msra.mxu0 0.0
        %4397 = vmatprep.subr.mxu0 0.0
        %4398 = vmatpush1.msra.mxu0 0.0
        %4399 = vmatprep.subr.mxu0 0.0
        %4400 = vmatpush1.msra.mxu0 0.0
        %4401 = vmatprep.subr.mxu0 0.0
        %4402 = vmatpush1.msra.mxu0 0.0
        %4403 = vmatprep.subr.mxu0 0.0
        %4404 = vmatpush1.msra.mxu0 0.0
        %4405 = vmatprep.subr.mxu0 0.0
        %4406 = vmatpush1.msra.mxu0 0.0
        %4407 = vmatprep.subr.mxu0 0.0
        %4408 = vmatpush1.msra.mxu0 0.0
        %4409 = vmatprep.subr.mxu0 0.0
        %4410 = vmatpush1.msra.mxu0 0.0
        %4411 = vmatprep.subr.mxu0 0.0
        %4412 = vmatpush1.msra.mxu0 0.0
        %4413 = vmatprep.subr.mxu0 0.0
        %4414 = vmatpush1.msra.mxu0 0.0
        %4415 = vmatprep.subr.mxu0 0.0
        %4416 = vmatpush1.msra.mxu0 0.0
        %4417 = vmatprep.subr.mxu0 0.0
        %4418 = vmatpush1.msra.mxu0 0.0
        %4419 = vmatprep.subr.mxu0 0.0
        %4420 = vmatpush1.msra.mxu0 0.0
        %4421 = vmatprep.subr.mxu0 0.0
        %4422 = vmatpush1.msra.mxu0 0.0
        %4423 = vmatprep.subr.mxu0 0.0
        %4424 = vmatpush1.msra.mxu0 0.0
        %4425 = vmatprep.subr.mxu0 0.0
        %4426 = vmatpush1.msra.mxu0 0.0
        %4427 = vmatprep.subr.mxu0 0.0
        %4428 = vmatpush1.msra.mxu0 0.0
        %4429 = vmatprep.subr.mxu0 0.0
        %4430 = vmatpush1.msra.mxu0 0.0
        %4431 = vmatprep.mubr.f32.mxu0 0.0
        %4432 = vmatmul.mubr.f32.gmra.mrb[0].mxu0 %v4359
        %v4433 = vpop.f32.mrb[0].mxu0
        %v4434 = vadd.f32 0.0, %v4433
        %v4435 = vpop.f32.mrb[0].mxu0
        %4436 = vmatprep.mubr.f32.mxu0 0.0
        %4437 = vmatmul.mubr.f32.gmra.mrb[0].mxu0 %v4362
        %v4438 = vpop.f32.mrb[0].mxu0
        %v4439 = vadd.f32 0.0, %v4438
        %v4440 = vpop.f32.mrb[0].mxu0
        %4441 = vmatprep.mubr.f32.mxu0 0.0
        %4442 = vmatmul.mubr.f32.gmra.mrb[0].mxu0 %v4365
        %v4443 = vpop.f32.mrb[0].mxu0
        %v4444 = vadd.f32 0.0, %v4443
        %v4445 = vpop.f32.mrb[0].mxu0
        %4446 = vdwg.mxu0
        %4447 = vrot.lane.b32.xlu0 %v489, 40
        %v4448 = vpop.permute.xlu0 %4447
        %4449 = vrot.lane.b32.xlu0 %v494, 40
        %v4450 = vpop.permute.xlu0 %4449
        %4451 = vrot.lane.b32.xlu0 %v499, 40
        %v4452 = vpop.permute.xlu0 %4451
        %v4457 = vsel %vm910, %v4150, 0
        %v4460 = vsel %vm910, %v4151, 0
        %v4463 = vsel %vm910, %v4152, 0
        %4465 = vmatprep.subr.mxu0 0.0
        %4466 = vmatpush1.msra.mxu0 %v4448
        %4467 = vmatprep.subr.mxu0 0.0
        %4468 = vmatpush1.msra.mxu0 %v4450
        %4469 = vmatprep.subr.mxu0 0.0
        %4470 = vmatpush1.msra.mxu0 %v4452
        %4471 = vmatprep.subr.mxu0 0.0
        %4472 = vmatpush1.msra.mxu0 0.0
        %4473 = vmatprep.subr.mxu0 0.0
        %4474 = vmatpush1.msra.mxu0 0.0
        %4475 = vmatprep.subr.mxu0 0.0
        %4476 = vmatpush1.msra.mxu0 0.0
        %4477 = vmatprep.subr.mxu0 0.0
        %4478 = vmatpush1.msra.mxu0 0.0
        %4479 = vmatprep.subr.mxu0 0.0
        %4480 = vmatpush1.msra.mxu0 0.0
        %4481 = vmatprep.subr.mxu0 0.0
        %4482 = vmatpush1.msra.mxu0 0.0
        %4483 = vmatprep.subr.mxu0 0.0
        %4484 = vmatpush1.msra.mxu0 0.0
        %4485 = vmatprep.subr.mxu0 0.0
        %4486 = vmatpush1.msra.mxu0 0.0
        %4487 = vmatprep.subr.mxu0 0.0
        %4488 = vmatpush1.msra.mxu0 0.0
        %4489 = vmatprep.subr.mxu0 0.0
        %4490 = vmatpush1.msra.mxu0 0.0
        %4491 = vmatprep.subr.mxu0 0.0
        %4492 = vmatpush1.msra.mxu0 0.0
        %4493 = vmatprep.subr.mxu0 0.0
        %4494 = vmatpush1.msra.mxu0 0.0
        %4495 = vmatprep.subr.mxu0 0.0
        %4496 = vmatpush1.msra.mxu0 0.0
        %4497 = vmatprep.subr.mxu0 0.0
        %4498 = vmatpush1.msra.mxu0 0.0
        %4499 = vmatprep.subr.mxu0 0.0
        %4500 = vmatpush1.msra.mxu0 0.0
        %4501 = vmatprep.subr.mxu0 0.0
        %4502 = vmatpush1.msra.mxu0 0.0
        %4503 = vmatprep.subr.mxu0 0.0
        %4504 = vmatpush1.msra.mxu0 0.0
        %4505 = vmatprep.subr.mxu0 0.0
        %4506 = vmatpush1.msra.mxu0 0.0
        %4507 = vmatprep.subr.mxu0 0.0
        %4508 = vmatpush1.msra.mxu0 0.0
        %4509 = vmatprep.subr.mxu0 0.0
        %4510 = vmatpush1.msra.mxu0 0.0
        %4511 = vmatprep.subr.mxu0 0.0
        %4512 = vmatpush1.msra.mxu0 0.0
        %4513 = vmatprep.subr.mxu0 0.0
        %4514 = vmatpush1.msra.mxu0 0.0
        %4515 = vmatprep.subr.mxu0 0.0
        %4516 = vmatpush1.msra.mxu0 0.0
        %4517 = vmatprep.subr.mxu0 0.0
        %4518 = vmatpush1.msra.mxu0 0.0
        %4519 = vmatprep.subr.mxu0 0.0
        %4520 = vmatpush1.msra.mxu0 0.0
        %4521 = vmatprep.subr.mxu0 0.0
        %4522 = vmatpush1.msra.mxu0 0.0
        %4523 = vmatprep.subr.mxu0 0.0
        %4524 = vmatpush1.msra.mxu0 0.0
        %4525 = vmatprep.subr.mxu0 0.0
        %4526 = vmatpush1.msra.mxu0 0.0
        %4527 = vmatprep.subr.mxu0 0.0
        %4528 = vmatpush1.msra.mxu0 0.0
        %4529 = vmatprep.mubr.f32.mxu0 0.0
        %4530 = vmatmul.mubr.f32.gmra.mrb[0].mxu0 %v4457
        %v4531 = vpop.f32.mrb[0].mxu0
        %v4532 = vadd.f32 0.0, %v4531
        %v4533 = vpop.f32.mrb[0].mxu0
        %4534 = vmatprep.mubr.f32.mxu0 0.0
        %4535 = vmatmul.mubr.f32.gmra.mrb[0].mxu0 %v4460
        %v4536 = vpop.f32.mrb[0].mxu0
        %v4537 = vadd.f32 0.0, %v4536
        %v4538 = vpop.f32.mrb[0].mxu0
        %4539 = vmatprep.mubr.f32.mxu0 0.0
        %4540 = vmatmul.mubr.f32.gmra.mrb[0].mxu0 %v4463
        %v4541 = vpop.f32.mrb[0].mxu0
        %v4542 = vadd.f32 0.0, %v4541
        %v4543 = vpop.f32.mrb[0].mxu0
        %4544 = vdwg.mxu0
        %4557 = vrot.lane.b32.xlu0 %v4238, 24
        %v4558 = vpop.permute.xlu0 %4557
        %4559 = vrot.lane.b32.xlu0 %v4243, 24
        %v4560 = vpop.permute.xlu0 %4559
        %4561 = vrot.lane.b32.xlu0 %v4248, 24
        %v4562 = vpop.permute.xlu0 %4561
        %4563 = vrot.lane.b32.xlu0 %v4336, 24
        %v4564 = vpop.permute.xlu0 %4563
        %4565 = vrot.lane.b32.xlu0 %v4341, 24
        %v4566 = vpop.permute.xlu0 %4565
        %4567 = vrot.lane.b32.xlu0 %v4346, 24
        %v4568 = vpop.permute.xlu0 %4567
        %4569 = vrot.lane.b32.xlu0 %v4434, 24
        %v4570 = vpop.permute.xlu0 %4569
        %4571 = vrot.lane.b32.xlu0 %v4439, 24
        %v4572 = vpop.permute.xlu0 %4571
        %4573 = vrot.lane.b32.xlu0 %v4444, 24
        %v4574 = vpop.permute.xlu0 %4573
        %4575 = vrot.lane.b32.xlu0 %v4532, 24
        %v4576 = vpop.permute.xlu0 %4575
        %4577 = vrot.lane.b32.xlu0 %v4537, 24
        %v4578 = vpop.permute.xlu0 %4577
        %4579 = vrot.lane.b32.xlu0 %v4542, 24
        %v4580 = vpop.permute.xlu0 %4579
        %vm4593 = vcmask 261312
        %4594 = vst.msk [vmem:[#allocation2] sm:$0xff] %vm4593, %v4558
        %4595 = vst.msk [vmem:[#allocation2 + $0x8] sm:$0xff] %vm4593, %v4560
        %4596 = vst.msk [vmem:[#allocation2 + $0x10] sm:$0xff] %vm4593, %v4562
        %4597 = vst.msk [vmem:[#allocation2 + $0x18] sm:$0xff] %vm4593, %v4564
        %4598 = vst.msk [vmem:[#allocation2 + $0x20] sm:$0xff] %vm4593, %v4566
        %4599 = vst.msk [vmem:[#allocation2 + $0x28] sm:$0xff] %vm4593, %v4568
        %4600 = vst.msk [vmem:[#allocation2 + $0x30] sm:$0xff] %vm4593, %v4570
        %4601 = vst.msk [vmem:[#allocation2 + $0x38] sm:$0xff] %vm4593, %v4572
        %4602 = vst.msk [vmem:[#allocation2 + $0x40] sm:$0xff] %vm4593, %v4574
        %4603 = vst.msk [vmem:[#allocation2 + $0x48] sm:$0xff] %vm4593, %v4576
        %4604 = vst.msk [vmem:[#allocation2 + $0x50] sm:$0xff] %vm4593, %v4578
        %4605 = vst.msk [vmem:[#allocation2 + $0x58] sm:$0xff] %vm4593, %v4580
        %v4606 = vld [vmem:[#allocation2] sm:$0xff]
        %v4607 = vld [vmem:[#allocation2 + $0x8] sm:$0xff]
        %v4608 = vld [vmem:[#allocation2 + $0x10] sm:$0xff]
        %v4609 = vld [vmem:[#allocation2 + $0x18] sm:$0xff]
        %v4610 = vld [vmem:[#allocation2 + $0x20] sm:$0xff]
        %v4611 = vld [vmem:[#allocation2 + $0x28] sm:$0xff]
        %v4612 = vld [vmem:[#allocation2 + $0x30] sm:$0xff]
        %v4613 = vld [vmem:[#allocation2 + $0x38] sm:$0xff]
        %v4614 = vld [vmem:[#allocation2 + $0x40] sm:$0xff]
        %v4615 = vld [vmem:[#allocation2 + $0x48] sm:$0xff]
        %v4616 = vld [vmem:[#allocation2 + $0x50] sm:$0xff]
        %v4617 = vld [vmem:[#allocation2 + $0x58] sm:$0xff]
        %v4618 = vld [vmem:[#allocation9] sm:$0xff]
        %v4619 = vld [vmem:[#allocation9 + $0x8] sm:$0xff]
        %v4620 = vld [vmem:[#allocation9 + $0x10] sm:$0xff]
        %v4621 = vld [vmem:[#allocation9 + $0x18] sm:$0xff]
        %v4622 = vld [vmem:[%s5] sm:$0x1]
        %v4624 = vlaneseq
        %v4625 = vshrl.u32 %v4624, 7
        %v4626 = vsub.s32 0, %v4625
        %v4627 = vrot.slane %v4622, %v4626
        %v4630 = vsel %vm340, %v4606, 0
        %v4633 = vsel %vm340, %v4607, 0
        %v4636 = vsel %vm340, %v4608, 0
        %v4639 = vsel %vm340, %v4609, 0
        %v4642 = vsel %vm340, %v4610, 0
        %v4645 = vsel %vm340, %v4611, 0
        %v4648 = vsel %vm340, %v4612, 0
        %v4651 = vsel %vm340, %v4613, 0
        %v4654 = vsel %vm340, %v4614, 0
        %v4657 = vsel %vm340, %v4615, 0
        %v4660 = vsel %vm340, %v4616, 0
        %v4663 = vsel %vm340, %v4617, 0
        %4665 = vmatprep.subr.mxu0 0.0
        %4666 = vmatpush1.msra.mxu0 %v4618
        %4667 = vmatprep.subr.mxu0 0.0
        %4668 = vmatpush1.msra.mxu0 %v4619
        %4669 = vmatprep.subr.mxu0 0.0
        %4670 = vmatpush1.msra.mxu0 %v4620
        %4671 = vmatprep.subr.mxu0 0.0
        %4672 = vmatpush1.msra.mxu0 %v4621
        %4673 = vmatprep.subr.mxu0 0.0
        %4674 = vmatpush1.msra.mxu0 0.0
        %4675 = vmatprep.subr.mxu0 0.0
        %4676 = vmatpush1.msra.mxu0 0.0
        %4677 = vmatprep.subr.mxu0 0.0
        %4678 = vmatpush1.msra.mxu0 0.0
        %4679 = vmatprep.subr.mxu0 0.0
        %4680 = vmatpush1.msra.mxu0 0.0
        %4681 = vmatprep.subr.mxu0 0.0
        %4682 = vmatpush1.msra.mxu0 0.0
        %4683 = vmatprep.subr.mxu0 0.0
        %4684 = vmatpush1.msra.mxu0 0.0
        %4685 = vmatprep.subr.mxu0 0.0
        %4686 = vmatpush1.msra.mxu0 0.0
        %4687 = vmatprep.subr.mxu0 0.0
        %4688 = vmatpush1.msra.mxu0 0.0
        %4689 = vmatprep.subr.mxu0 0.0
        %4690 = vmatpush1.msra.mxu0 0.0
        %4691 = vmatprep.subr.mxu0 0.0
        %4692 = vmatpush1.msra.mxu0 0.0
        %4693 = vmatprep.subr.mxu0 0.0
        %4694 = vmatpush1.msra.mxu0 0.0
        %4695 = vmatprep.subr.mxu0 0.0
        %4696 = vmatpush1.msra.mxu0 0.0
        %4697 = vmatprep.subr.mxu0 0.0
        %4698 = vmatpush1.msra.mxu0 0.0
        %4699 = vmatprep.subr.mxu0 0.0
        %4700 = vmatpush1.msra.mxu0 0.0
        %4701 = vmatprep.subr.mxu0 0.0
        %4702 = vmatpush1.msra.mxu0 0.0
        %4703 = vmatprep.subr.mxu0 0.0
        %4704 = vmatpush1.msra.mxu0 0.0
        %4705 = vmatprep.subr.mxu0 0.0
        %4706 = vmatpush1.msra.mxu0 0.0
        %4707 = vmatprep.subr.mxu0 0.0
        %4708 = vmatpush1.msra.mxu0 0.0
        %4709 = vmatprep.subr.mxu0 0.0
        %4710 = vmatpush1.msra.mxu0 0.0
        %4711 = vmatprep.subr.mxu0 0.0
        %4712 = vmatpush1.msra.mxu0 0.0
        %4713 = vmatprep.subr.mxu0 0.0
        %4714 = vmatpush1.msra.mxu0 0.0
        %4715 = vmatprep.subr.mxu0 0.0
        %4716 = vmatpush1.msra.mxu0 0.0
        %4717 = vmatprep.subr.mxu0 0.0
        %4718 = vmatpush1.msra.mxu0 0.0
        %4719 = vmatprep.subr.mxu0 0.0
        %4720 = vmatpush1.msra.mxu0 0.0
        %4721 = vmatprep.subr.mxu0 0.0
        %4722 = vmatpush1.msra.mxu0 0.0
        %4723 = vmatprep.subr.mxu0 0.0
        %4724 = vmatpush1.msra.mxu0 0.0
        %4725 = vmatprep.subr.mxu0 0.0
        %4726 = vmatpush1.msra.mxu0 0.0
        %4727 = vmatprep.subr.mxu0 0.0
        %4728 = vmatpush1.msra.mxu0 0.0
        %4729 = vmatprep.mubr.f32.mxu0 0.0
        %4730 = vmatmul.mubr.f32.gmra.mrb[0].mxu0 %v4630
        %v4731 = vpop.f32.mrb[0].mxu0
        %v4732 = vadd.f32 %v4627, %v4731
        %v4733 = vpop.f32.mrb[0].mxu0
        %4734 = vmatprep.mubr.f32.mxu0 0.0
        %4735 = vmatmul.mubr.f32.gmra.mrb[0].mxu0 %v4633
        %v4736 = vpop.f32.mrb[0].mxu0
        %v4737 = vadd.f32 %v4627, %v4736
        %v4738 = vpop.f32.mrb[0].mxu0
        %4739 = vmatprep.mubr.f32.mxu0 0.0
        %4740 = vmatmul.mubr.f32.gmra.mrb[0].mxu0 %v4636
        %v4741 = vpop.f32.mrb[0].mxu0
        %v4742 = vadd.f32 %v4627, %v4741
        %v4743 = vpop.f32.mrb[0].mxu0
        %4744 = vmatprep.mubr.f32.mxu0 0.0
        %4745 = vmatmul.mubr.f32.gmra.mrb[0].mxu0 %v4639
        %v4746 = vpop.f32.mrb[0].mxu0
        %v4747 = vadd.f32 %v4627, %v4746
        %v4748 = vpop.f32.mrb[0].mxu0
        %4749 = vmatprep.mubr.f32.mxu0 0.0
        %4750 = vmatmul.mubr.f32.gmra.mrb[0].mxu0 %v4642
        %v4751 = vpop.f32.mrb[0].mxu0
        %v4752 = vadd.f32 %v4627, %v4751
        %v4753 = vpop.f32.mrb[0].mxu0
        %4754 = vmatprep.mubr.f32.mxu0 0.0
        %4755 = vmatmul.mubr.f32.gmra.mrb[0].mxu0 %v4645
        %v4756 = vpop.f32.mrb[0].mxu0
        %v4757 = vadd.f32 %v4627, %v4756
        %v4758 = vpop.f32.mrb[0].mxu0
        %4759 = vmatprep.mubr.f32.mxu0 0.0
        %4760 = vmatmul.mubr.f32.gmra.mrb[0].mxu0 %v4648
        %v4761 = vpop.f32.mrb[0].mxu0
        %v4762 = vadd.f32 %v4627, %v4761
        %v4763 = vpop.f32.mrb[0].mxu0
        %4764 = vmatprep.mubr.f32.mxu0 0.0
        %4765 = vmatmul.mubr.f32.gmra.mrb[0].mxu0 %v4651
        %v4766 = vpop.f32.mrb[0].mxu0
        %v4767 = vadd.f32 %v4627, %v4766
        %v4768 = vpop.f32.mrb[0].mxu0
        %4769 = vmatprep.mubr.f32.mxu0 0.0
        %4770 = vmatmul.mubr.f32.gmra.mrb[0].mxu0 %v4654
        %v4771 = vpop.f32.mrb[0].mxu0
        %v4772 = vadd.f32 %v4627, %v4771
        %v4773 = vpop.f32.mrb[0].mxu0
        %4774 = vmatprep.mubr.f32.mxu0 0.0
        %4775 = vmatmul.mubr.f32.gmra.mrb[0].mxu0 %v4657
        %v4776 = vpop.f32.mrb[0].mxu0
        %v4777 = vadd.f32 %v4627, %v4776
        %v4778 = vpop.f32.mrb[0].mxu0
        %4779 = vmatprep.mubr.f32.mxu0 0.0
        %4780 = vmatmul.mubr.f32.gmra.mrb[0].mxu0 %v4660
        %v4781 = vpop.f32.mrb[0].mxu0
        %v4782 = vadd.f32 %v4627, %v4781
        %v4783 = vpop.f32.mrb[0].mxu0
        %4784 = vmatprep.mubr.f32.mxu0 0.0
        %4785 = vmatmul.mubr.f32.gmra.mrb[0].mxu0 %v4663
        %v4786 = vpop.f32.mrb[0].mxu0
        %v4787 = vadd.f32 %v4627, %v4786
        %v4788 = vpop.f32.mrb[0].mxu0
        %4789 = vdwg.mxu0
        %4790 = vst.msk [vmem:[%s314] sm:$0xff] %vm340, %v4732
        %4791 = vst.msk [vmem:[%s314 + $0x8] sm:$0xff] %vm340, %v4737
        %4792 = vst.msk [vmem:[%s314 + $0x10] sm:$0xff] %vm340, %v4742
        %4793 = vst.msk [vmem:[%s314 + $0x18] sm:$0xff] %vm340, %v4747
        %4794 = vst.msk [vmem:[%s314 + $0x20] sm:$0xff] %vm340, %v4752
        %4795 = vst.msk [vmem:[%s314 + $0x28] sm:$0xff] %vm340, %v4757
        %4796 = vst.msk [vmem:[%s314 + $0x30] sm:$0xff] %vm340, %v4762
        %4797 = vst.msk [vmem:[%s314 + $0x38] sm:$0xff] %vm340, %v4767
        %4798 = vst.msk [vmem:[%s314 + $0x40] sm:$0xff] %vm340, %v4772
        %4799 = vst.msk [vmem:[%s314 + $0x48] sm:$0xff] %vm340, %v4777
        %4800 = vst.msk [vmem:[%s314 + $0x50] sm:$0xff] %vm340, %v4782
        %4801 = vst.msk [vmem:[%s314 + $0x58] sm:$0xff] %vm340, %v4787
        %s4802 = sand.u32 %s164, 1
        %s4803 = scalar_lea.sflag [#allocation5], %s4802
        %s4804 = sand.u32 %s164, 1
        %s4805 = smul.addr %s4804, 96
        %s4806 = scalar_lea.vmem [#allocation11], %s4805
        // Predicated region
        $region61: #{tpu_custom_call.1} parent=43 // pred_check
          %p4807 = pneg %p174
        $region62: #{tpu_custom_call.1} parent=43 // pred_check_branch
          %4809 = sbr.rel (%p4807) target = $region64
        $region63: #{tpu_custom_call.1} parent=43 // pred_region
          %s4810 = smul.u32 4, %s25
          %s4812 = ssub.s32 1536, 1536
          %4813 = vsyncadd %s4803, %s4812
          %s4814 = smul.addr %s4810, 3
          %s4815 = smul.addr %s4814, 128
          %s4816 = scalar_lea.hbm %s6, %s4815
          %s4817 = sshll.u32 %s4806, 4
          %s4818 = int_to_ptr.vmem [resolvable:$true] %s4817
          %4823 = dma.vmem_to_hbm [thread:$0]  %s4818, 1536, %s4816, %s4803, 128, 128, 8
        $region64: #{tpu_custom_call.1} parent=43 // pred_fallthru
          _
      $region44: #{tpu_custom_call.1} parent=5 // pred_fallthru
        _
      %p4824 = scmp.le.s32.totalorder 2, %s20
      // Predicated region
      $region65: #{tpu_custom_call.1} parent=5 // pred_check
        %p4825 = pneg %p4824
      $region66: #{tpu_custom_call.1} parent=5 // pred_check_branch
        %4827 = sbr.rel (%p4825) target = $region68
      $region67: #{tpu_custom_call.1} parent=5 // pred_region
        %s4828 = ssub.s32 %s20, 2
        // Predicated region
        $region69: #{tpu_custom_call.1} parent=67 // pred_check
          %p4829 = pneg %p180
        $region70: #{tpu_custom_call.1} parent=67 // pred_check_branch
          %4831 = sbr.rel (%p4829) target = $region72
        $region71: #{tpu_custom_call.1} parent=67 // pred_region
          %s4832 = sand.u32 %s165, 1
          %s4833 = scalar_lea.sflag [#allocation5], %s4832
          %s4834 = sand.u32 %s165, 1
          %s4835 = smul.addr %s4834, 96
          %s4836 = scalar_lea.vmem [#allocation11], %s4835
          %4837 = dma.done %s4833, 1536
        $region72: #{tpu_custom_call.1} parent=67 // pred_fallthru
          _
      $region68: #{tpu_custom_call.1} parent=5 // pred_fallthru
        _
    $region6: #{tpu_custom_call.1} parent=1 // loop_footer
      %s24 = sadd.s32 1, %s20
    $region7: #{tpu_custom_call.1} parent=1 // loop_footer_branch
      %19 = sbr.rel target = $region3
    $region8: #{tpu_custom_call.1} parent=1 // loop_exit
      _
    %4838 = vsyncpa [#allocation4], 1
    %s4839 = scalar_lea.sflag [#allocation4], 1
    %4840 = vsyncpa %s4839, 1
    %4841 = vsyncpa [#allocation7], 1
    %4842 = vsyncpa [#allocation10], 1
    %4843 = vsyncpa [#allocation5], 1
    %s4844 = scalar_lea.sflag [#allocation5], 1
    %4845 = vsyncpa %s4844, 1

</llo_original>
